<compile_context>
chip_gen: v6e
topology: v6e:2x2x1
jax: 0.10.0
libtpu: 0.0.40
codegen_flags: <defaults>
</compile_context>

<pallas_src>
import math

import jax
import jax.numpy as jnp
from jax.experimental import pallas as pl
from jax.experimental.pallas import tpu as pltpu

# ----------------------------- model config ---------------------------------
BATCH = 2
SEQ = 16
HIDDEN = 128
NUM_HEADS = 4
HEAD_DIM = HIDDEN // NUM_HEADS
INTERMEDIATE = 256
NUM_LAYERS = 2
VOCAB = 128
MAX_POS = 32
TYPE_VOCAB = 2
NUM_CLASSES = 5
CLS_PAD = 128            # lane-dense classifier width; sliced to NUM_CLASSES in JAX
LN_EPS = 1e-12
ATTN_SCALE = 1.0 / math.sqrt(HEAD_DIM)

# rows of the packed per-layer vector array (L, 6, HIDDEN)
_BO, _G1, _B1, _BO2, _G2, _B2 = range(6)


# ------------------------------ in-kernel helpers ----------------------------
def _gelu_tanh(x):
    # TODO(synk): BERT default GELU is erf-based; tanh approximation used here
    #             (lowers cleanly to the EUP, ~1e-3 deviation).
    c = math.sqrt(2.0 / math.pi)
    return 0.5 * x * (1.0 + jnp.tanh(c * (x + 0.044715 * x * x * x)))


def _layer_norm(x, g, b):
    mean = jnp.mean(x, axis=-1, keepdims=True)
    xc = x - mean
    var = jnp.mean(xc * xc, axis=-1, keepdims=True)
    return xc * jax.lax.rsqrt(var + LN_EPS) * g + b


def _mm(x, w_bf16, bias_f32):
    # MXU matmul: bf16 operands, f32 accumulate; bias added in f32.
    return jnp.dot(x.astype(jnp.bfloat16), w_bf16,
                   preferred_element_type=jnp.float32) + bias_f32


def _proj_nt(x_bf16, wt_bf16, bias_f32):
    # x (S, H) bf16 @ wt (D, H) bf16 (pre-transposed) -> (S, D) f32, NT contraction.
    return jax.lax.dot_general(
        x_bf16, wt_bf16, (((1,), (1,)), ((), ())),
        preferred_element_type=jnp.float32) + bias_f32


def _qkv_slot(l, kind, hd):
    return (l * 3 + kind) * NUM_HEADS + hd


# ------------------------------ fused Pallas kernel --------------------------
def bert_fused_kernel(
    emb_ref, mask_ref, ln_emb_ref,
    wqkv_ref, bqkv_ref, wo_ref, wi_ref, bi_ref, wo2_ref,
    lvecs_ref, cls_w_ref, cls_b_ref,
    out_ref,
):
    mask = mask_ref[0]                                           # (S, S) additive f32

    # BertEmbeddings: (gather+sum done in JAX) -> LayerNorm.
    h = _layer_norm(emb_ref[0], ln_emb_ref[0:1, :], ln_emb_ref[1:2, :])   # (S, H) f32

    for l in range(NUM_LAYERS):
        h_bf = h.astype(jnp.bfloat16)

        # ---- multi-head attention: per-head weights, everything in registers ----
        head_outs = []
        for hd in range(NUM_HEADS):
            q = _proj_nt(h_bf, wqkv_ref[_qkv_slot(l, 0, hd)],
                         bqkv_ref[_qkv_slot(l, 0, hd)])          # (S, D), scale folded in
            k = _proj_nt(h_bf, wqkv_ref[_qkv_slot(l, 1, hd)],
                         bqkv_ref[_qkv_slot(l, 1, hd)])
            v = _proj_nt(h_bf, wqkv_ref[_qkv_slot(l, 2, hd)],
                         bqkv_ref[_qkv_slot(l, 2, hd)])

            # q . k^T with bf16 operands (single-pass MXU), f32 accumulation.
            s = jax.lax.dot_general(
                q.astype(jnp.bfloat16), k.astype(jnp.bfloat16),
                (((1,), (1,)), ((), ())),
                preferred_element_type=jnp.float32)              # (S, S)
            s = s + mask
            s = s - jnp.max(s, axis=-1, keepdims=True)
            p = jnp.exp(s)
            p = p * pl.reciprocal(jnp.sum(p, axis=-1, keepdims=True), approx=True)
            o = jnp.dot(p.astype(jnp.bfloat16), v.astype(jnp.bfloat16),
                        preferred_element_type=jnp.float32)      # (S, D)
            head_outs.append(o)

        ctx = jnp.concatenate(head_outs, axis=-1)                # (S, H) f32

        # ---- attention output projection + fused residual + LayerNorm ----
        attn_out = _mm(ctx, wo_ref[l], lvecs_ref[l, _BO:_BO + 1, :])
        h1 = _layer_norm(attn_out + h,
                         lvecs_ref[l, _G1:_G1 + 1, :], lvecs_ref[l, _B1:_B1 + 1, :])

        # ---- FFN (GELU) + fused residual + LayerNorm ----
        inter = _gelu_tanh(_mm(h1, wi_ref[l], bi_ref[l]))
        ffn = _mm(inter, wo2_ref[l], lvecs_ref[l, _BO2:_BO2 + 1, :])
        h = _layer_norm(ffn + h1,
                        lvecs_ref[l, _G2:_G2 + 1, :], lvecs_ref[l, _B2:_B2 + 1, :])

    # ---- token-classification head (lane-dense, padded to CLS_PAD columns) ----
    out_ref[0, :, :] = _mm(h, cls_w_ref[...], cls_b_ref[...]).astype(out_ref.dtype)


# ------------------------------ parameter init -------------------------------
def init_params(key):
    std = 0.02
    ki = iter(jax.random.split(key, 4 + NUM_LAYERS * 6))

    params = {
        "word_emb": jax.random.normal(next(ki), (VOCAB, HIDDEN), jnp.float32) * std,
        "pos_emb": jax.random.normal(next(ki), (MAX_POS, HIDDEN), jnp.float32) * std,
        "type_emb": jax.random.normal(next(ki), (TYPE_VOCAB, HIDDEN), jnp.float32) * std,
        # row 0 = gamma, row 1 = beta
        "ln_emb": jnp.stack([jnp.ones((HIDDEN,), jnp.float32),
                             jnp.zeros((HIDDEN,), jnp.float32)]),
    }

    def per_head_t(w):  # (H, H) -> (NH, D, H): per-head slice, transposed, lane-dense
        return jnp.transpose(w.reshape(HIDDEN, NUM_HEADS, HEAD_DIM), (1, 2, 0))

    wqkv_t, wo, wi, wo2 = [], [], [], []
    for _ in range(NUM_LAYERS):
        wq = jax.random.normal(next(ki), (HIDDEN, HIDDEN), jnp.float32) * std
        wk = jax.random.normal(next(ki), (HIDDEN, HIDDEN), jnp.float32) * std
        wv = jax.random.normal(next(ki), (HIDDEN, HIDDEN), jnp.float32) * std
        wq = wq * ATTN_SCALE                                     # fold 1/sqrt(D) into Q
        wqkv_t.append(jnp.stack([per_head_t(wq), per_head_t(wk), per_head_t(wv)]))
        wo.append(jax.random.normal(next(ki), (HIDDEN, HIDDEN), jnp.float32) * std)
        wi.append(jax.random.normal(next(ki), (HIDDEN, INTERMEDIATE), jnp.float32) * std)
        wo2.append(jax.random.normal(next(ki), (INTERMEDIATE, HIDDEN), jnp.float32) * std)

    # (L, 3, NH, D, H) -> flat (L*3*NH, D, H) for simple rank-3 VMEM refs.
    params["wqkv_t"] = (jnp.stack(wqkv_t)
                        .reshape(NUM_LAYERS * 3 * NUM_HEADS, HEAD_DIM, HIDDEN)
                        .astype(jnp.bfloat16))
    # Q bias would also carry the ATTN_SCALE factor; zeros here (as initialized).
    params["bqkv"] = jnp.zeros((NUM_LAYERS * 3 * NUM_HEADS, 1, HEAD_DIM), jnp.float32)
    params["wo"] = jnp.stack(wo).astype(jnp.bfloat16)            # (L, H, H)
    params["wi"] = jnp.stack(wi).astype(jnp.bfloat16)            # (L, H, I)
    params["bi"] = jnp.zeros((NUM_LAYERS, 1, INTERMEDIATE), jnp.float32)
    params["wo2"] = jnp.stack(wo2).astype(jnp.bfloat16)          # (L, I, H)

    # packed per-layer vectors: [bo, ln1_g, ln1_b, bo2, ln2_g, ln2_b]
    lvecs = jnp.zeros((NUM_LAYERS, 6, HIDDEN), jnp.float32)
    lvecs = lvecs.at[:, _G1, :].set(1.0).at[:, _G2, :].set(1.0)
    params["lvecs"] = lvecs

    cls_w = jax.random.normal(next(ki), (HIDDEN, NUM_CLASSES), jnp.float32) * std
    params["cls_w"] = (jnp.zeros((HIDDEN, CLS_PAD), jnp.bfloat16)
                       .at[:, :NUM_CLASSES].set(cls_w.astype(jnp.bfloat16)))
    params["cls_b"] = jnp.zeros((1, CLS_PAD), jnp.float32)
    return params


# ------------------------------- forward pass --------------------------------
def bert_for_token_classification(params, input_ids, token_type_ids=None,
                                  position_ids=None, attention_mask=None):
    B, S = input_ids.shape
    if token_type_ids is None:
        token_type_ids = jnp.zeros((B, S), jnp.int32)
    if position_ids is None:
        position_ids = jnp.broadcast_to(jnp.arange(S, dtype=jnp.int32), (B, S))
    if attention_mask is None:
        attention_mask = jnp.ones((B, S), jnp.float32)

    # Embedding gathers kept in JAX (glue); sum matches BertEmbeddings.
    emb = (jnp.take(params["word_emb"], input_ids, axis=0)
           + jnp.take(params["pos_emb"], position_ids, axis=0)
           + jnp.take(params["type_emb"], token_type_ids, axis=0)).astype(jnp.float32)

    # Additive attention mask pre-broadcast to (B, S, S): one plain add in-kernel.
    add_mask = jnp.broadcast_to(
        ((1.0 - attention_mask.astype(jnp.float32)) * -1e4)[:, None, :], (B, S, S))

    inputs = (
        emb, add_mask, params["ln_emb"],
        params["wqkv_t"], params["bqkv"],
        params["wo"], params["wi"], params["bi"], params["wo2"],
        params["lvecs"], params["cls_w"], params["cls_b"],
    )

    def resident(x):
        nd = x.ndim
        return pl.BlockSpec(x.shape, lambda b, nd=nd: (0,) * nd)

    in_specs = ([pl.BlockSpec((1, S, HIDDEN), lambda b: (b, 0, 0)),
                 pl.BlockSpec((1, S, S), lambda b: (b, 0, 0))]
                + [resident(x) for x in inputs[2:]])

    logits_padded = pl.pallas_call(
        bert_fused_kernel,
        out_shape=jax.ShapeDtypeStruct((B, S, CLS_PAD), jnp.float32),
        grid=(B,),
        in_specs=in_specs,
        out_specs=pl.BlockSpec((1, S, CLS_PAD), lambda b: (b, 0, 0)),
        compiler_params=pltpu.CompilerParams(
            dimension_semantics=("parallel",)),
    )(*inputs)

    # dropout: eval mode -> identity; slice off classifier lane padding.
    return logits_padded[..., :NUM_CLASSES]


# ----------------------------------- main ------------------------------------
if __name__ == "__main__":
    key = jax.random.PRNGKey(0)
    pkey, ikey = jax.random.split(key)

    params = init_params(pkey)

    input_ids = jax.random.randint(ikey, (BATCH, SEQ), 0, VOCAB, dtype=jnp.int32)
    token_type_ids = jnp.zeros((BATCH, SEQ), jnp.int32)
    # mask out the last 3 tokens of the second example to exercise masking
    attention_mask = jnp.ones((BATCH, SEQ), jnp.float32).at[1, -3:].set(0.0)

    fwd = jax.jit(bert_for_token_classification)
    logits = fwd(params, input_ids,
                 token_type_ids=token_type_ids,
                 attention_mask=attention_mask)
    logits = jax.block_until_ready(logits)
    assert logits.shape == (BATCH, SEQ, NUM_CLASSES)
    assert bool(jnp.all(jnp.isfinite(logits)))
    print("KERNEL_OK")
</pallas_src>

<mosaic_0001>
module attributes {stable_mosaic.version = 11 : i64} {
  func.func @bert_fused_kernel(%arg0: i32, %arg1: memref<1x16x128xf32, #tpu.memory_space<vmem>>, %arg2: memref<1x16x16xf32, #tpu.memory_space<vmem>>, %arg3: memref<2x128xf32, #tpu.memory_space<vmem>>, %arg4: memref<24x32x128xbf16, #tpu.memory_space<vmem>>, %arg5: memref<24x1x32xf32, #tpu.memory_space<vmem>>, %arg6: memref<2x128x128xbf16, #tpu.memory_space<vmem>>, %arg7: memref<2x128x256xbf16, #tpu.memory_space<vmem>>, %arg8: memref<2x1x256xf32, #tpu.memory_space<vmem>>, %arg9: memref<2x256x128xbf16, #tpu.memory_space<vmem>>, %arg10: memref<2x6x128xf32, #tpu.memory_space<vmem>>, %arg11: memref<128x128xbf16, #tpu.memory_space<vmem>>, %arg12: memref<1x128xf32, #tpu.memory_space<vmem>>, %arg13: memref<1x16x128xf32, #tpu.memory_space<vmem>>) attributes {dimension_semantics = [#tpu.dimension_semantics<parallel>], iteration_bounds = array<i64: 2>, scalar_prefetch = 0 : i64, scratch_operands = 0 : i64, tpu.core_type = #tpu.core_type<tc>, window_params = [{transform_indices = @transform_0, window_bounds = array<i64: 1, 16, 128>}, {transform_indices = @transform_1, window_bounds = array<i64: 1, 16, 16>}, {pipeline_mode = #tpu.pipeline_mode<synchronous>, transform_indices = @transform_2, window_bounds = array<i64: 2, 128>}, {pipeline_mode = #tpu.pipeline_mode<synchronous>, transform_indices = @transform_3, window_bounds = array<i64: 24, 32, 128>}, {pipeline_mode = #tpu.pipeline_mode<synchronous>, transform_indices = @transform_4, window_bounds = array<i64: 24, 1, 32>}, {pipeline_mode = #tpu.pipeline_mode<synchronous>, transform_indices = @transform_5, window_bounds = array<i64: 2, 128, 128>}, {pipeline_mode = #tpu.pipeline_mode<synchronous>, transform_indices = @transform_6, window_bounds = array<i64: 2, 128, 256>}, {pipeline_mode = #tpu.pipeline_mode<synchronous>, transform_indices = @transform_7, window_bounds = array<i64: 2, 1, 256>}, {pipeline_mode = #tpu.pipeline_mode<synchronous>, transform_indices = @transform_8, window_bounds = array<i64: 2, 256, 128>}, {pipeline_mode = #tpu.pipeline_mode<synchronous>, transform_indices = @transform_9, window_bounds = array<i64: 2, 6, 128>}, {pipeline_mode = #tpu.pipeline_mode<synchronous>, transform_indices = @transform_10, window_bounds = array<i64: 128, 128>}, {pipeline_mode = #tpu.pipeline_mode<synchronous>, transform_indices = @transform_11, window_bounds = array<i64: 1, 128>}, {transform_indices = @transform_12, window_bounds = array<i64: 1, 16, 128>}]} {
    %c0 = arith.constant 0 : index
    %c0_0 = arith.constant 0 : index
    %c0_1 = arith.constant 0 : index
    %0 = vector.load %arg2[%c0, %c0_0, %c0_1] : memref<1x16x16xf32, #tpu.memory_space<vmem>>, vector<1x16x16xf32>
    %1 = vector.shape_cast %0 : vector<1x16x16xf32> to vector<16x16xf32>
    %c0_2 = arith.constant 0 : index
    %c0_3 = arith.constant 0 : index
    %c0_4 = arith.constant 0 : index
    %2 = vector.load %arg1[%c0_2, %c0_3, %c0_4] : memref<1x16x128xf32, #tpu.memory_space<vmem>>, vector<1x16x128xf32>
    %3 = vector.shape_cast %2 : vector<1x16x128xf32> to vector<16x128xf32>
    %c0_5 = arith.constant 0 : index
    %c0_6 = arith.constant 0 : index
    %4 = vector.load %arg3[%c0_5, %c0_6] : memref<2x128xf32, #tpu.memory_space<vmem>>, vector<1x128xf32>
    %c1 = arith.constant 1 : index
    %c0_7 = arith.constant 0 : index
    %5 = vector.load %arg3[%c1, %c0_7] : memref<2x128xf32, #tpu.memory_space<vmem>>, vector<1x128xf32>
    %cst = arith.constant dense<0.000000e+00> : vector<16xf32>
    %6 = vector.multi_reduction <add>, %3, %cst [1] : vector<16x128xf32> to vector<16xf32>
    %7 = vector.shape_cast %6 : vector<16xf32> to vector<16x1xf32>
    %cst_8 = arith.constant 1.280000e+02 : f32
    %8 = vector.broadcast %cst_8 : f32 to vector<16x1xf32>
    %9 = arith.divf %7, %8 : vector<16x1xf32>
    %10 = vector.broadcast %9 : vector<16x1xf32> to vector<16x128xf32>
    %11 = arith.subf %3, %10 : vector<16x128xf32>
    %12 = arith.mulf %11, %11 : vector<16x128xf32>
    %cst_9 = arith.constant dense<0.000000e+00> : vector<16xf32>
    %13 = vector.multi_reduction <add>, %12, %cst_9 [1] : vector<16x128xf32> to vector<16xf32>
    %14 = vector.shape_cast %13 : vector<16xf32> to vector<16x1xf32>
    %cst_10 = arith.constant 1.280000e+02 : f32
    %15 = vector.broadcast %cst_10 : f32 to vector<16x1xf32>
    %16 = arith.divf %14, %15 : vector<16x1xf32>
    %cst_11 = arith.constant 9.99999996E-13 : f32
    %17 = vector.broadcast %cst_11 : f32 to vector<16x1xf32>
    %18 = arith.addf %16, %17 : vector<16x1xf32>
    %19 = math.rsqrt %18 : vector<16x1xf32>
    %20 = vector.broadcast %19 : vector<16x1xf32> to vector<16x128xf32>
    %21 = arith.mulf %11, %20 : vector<16x128xf32>
    %22 = vector.broadcast %4 : vector<1x128xf32> to vector<16x128xf32>
    %23 = arith.mulf %21, %22 : vector<16x128xf32>
    %24 = vector.broadcast %5 : vector<1x128xf32> to vector<16x128xf32>
    %25 = arith.addf %23, %24 : vector<16x128xf32>
    %26 = arith.truncf %25 : vector<16x128xf32> to vector<16x128xbf16>
    %c0_12 = arith.constant 0 : index
    %c0_13 = arith.constant 0 : index
    %c0_14 = arith.constant 0 : index
    %27 = vector.load %arg4[%c0_12, %c0_13, %c0_14] : memref<24x32x128xbf16, #tpu.memory_space<vmem>>, vector<1x32x128xbf16>
    %28 = vector.shape_cast %27 : vector<1x32x128xbf16> to vector<32x128xbf16>
    %c0_15 = arith.constant 0 : index
    %c0_16 = arith.constant 0 : index
    %c0_17 = arith.constant 0 : index
    %29 = vector.load %arg5[%c0_15, %c0_16, %c0_17] : memref<24x1x32xf32, #tpu.memory_space<vmem>>, vector<1x1x32xf32>
    %30 = vector.shape_cast %29 : vector<1x1x32xf32> to vector<1x32xf32>
    %cst_18 = arith.constant dense<0.000000e+00> : vector<16x32xf32>
    %31 = tpu.matmul %26, %28, %cst_18 {dimension_numbers = #tpu.dot_dimension_numbers<[1], [1], [0], [0], [0, 0, 1, 0], [], []>} : vector<16x128xbf16>, vector<32x128xbf16>, vector<16x32xf32> -> vector<16x32xf32>
    %32 = vector.broadcast %30 : vector<1x32xf32> to vector<16x32xf32>
    %33 = arith.addf %31, %32 : vector<16x32xf32>
    %c4 = arith.constant 4 : index
    %c0_19 = arith.constant 0 : index
    %c0_20 = arith.constant 0 : index
    %34 = vector.load %arg4[%c4, %c0_19, %c0_20] : memref<24x32x128xbf16, #tpu.memory_space<vmem>>, vector<1x32x128xbf16>
    %35 = vector.shape_cast %34 : vector<1x32x128xbf16> to vector<32x128xbf16>
    %c4_21 = arith.constant 4 : index
    %c0_22 = arith.constant 0 : index
    %c0_23 = arith.constant 0 : index
    %36 = vector.load %arg5[%c4_21, %c0_22, %c0_23] : memref<24x1x32xf32, #tpu.memory_space<vmem>>, vector<1x1x32xf32>
    %37 = vector.shape_cast %36 : vector<1x1x32xf32> to vector<1x32xf32>
    %cst_24 = arith.constant dense<0.000000e+00> : vector<16x32xf32>
    %38 = tpu.matmul %26, %35, %cst_24 {dimension_numbers = #tpu.dot_dimension_numbers<[1], [1], [0], [0], [0, 0, 1, 0], [], []>} : vector<16x128xbf16>, vector<32x128xbf16>, vector<16x32xf32> -> vector<16x32xf32>
    %39 = vector.broadcast %37 : vector<1x32xf32> to vector<16x32xf32>
    %40 = arith.addf %38, %39 : vector<16x32xf32>
    %c8 = arith.constant 8 : index
    %c0_25 = arith.constant 0 : index
    %c0_26 = arith.constant 0 : index
    %41 = vector.load %arg4[%c8, %c0_25, %c0_26] : memref<24x32x128xbf16, #tpu.memory_space<vmem>>, vector<1x32x128xbf16>
    %42 = vector.shape_cast %41 : vector<1x32x128xbf16> to vector<32x128xbf16>
    %c8_27 = arith.constant 8 : index
    %c0_28 = arith.constant 0 : index
    %c0_29 = arith.constant 0 : index
    %43 = vector.load %arg5[%c8_27, %c0_28, %c0_29] : memref<24x1x32xf32, #tpu.memory_space<vmem>>, vector<1x1x32xf32>
    %44 = vector.shape_cast %43 : vector<1x1x32xf32> to vector<1x32xf32>
    %cst_30 = arith.constant dense<0.000000e+00> : vector<16x32xf32>
    %45 = tpu.matmul %26, %42, %cst_30 {dimension_numbers = #tpu.dot_dimension_numbers<[1], [1], [0], [0], [0, 0, 1, 0], [], []>} : vector<16x128xbf16>, vector<32x128xbf16>, vector<16x32xf32> -> vector<16x32xf32>
    %46 = vector.broadcast %44 : vector<1x32xf32> to vector<16x32xf32>
    %47 = arith.addf %45, %46 : vector<16x32xf32>
    %48 = arith.truncf %33 : vector<16x32xf32> to vector<16x32xbf16>
    %49 = arith.truncf %40 : vector<16x32xf32> to vector<16x32xbf16>
    %cst_31 = arith.constant dense<0.000000e+00> : vector<16x16xf32>
    %50 = tpu.matmul %48, %49, %cst_31 {dimension_numbers = #tpu.dot_dimension_numbers<[1], [1], [0], [0], [0, 0, 1, 0], [], []>} : vector<16x32xbf16>, vector<16x32xbf16>, vector<16x16xf32> -> vector<16x16xf32>
    %51 = arith.addf %50, %1 : vector<16x16xf32>
    %cst_32 = arith.constant dense<0xFF800000> : vector<16xf32>
    %52 = vector.multi_reduction <maximumf>, %51, %cst_32 [1] : vector<16x16xf32> to vector<16xf32>
    %53 = vector.shape_cast %52 : vector<16xf32> to vector<16x1xf32>
    %54 = vector.broadcast %53 : vector<16x1xf32> to vector<16x16xf32>
    %55 = arith.subf %51, %54 : vector<16x16xf32>
    %56 = math.exp %55 : vector<16x16xf32>
    %cst_33 = arith.constant dense<0.000000e+00> : vector<16xf32>
    %57 = vector.multi_reduction <add>, %56, %cst_33 [1] : vector<16x16xf32> to vector<16xf32>
    %58 = vector.shape_cast %57 : vector<16xf32> to vector<16x1xf32>
    %59 = tpu.reciprocal %58 {approx = true} : vector<16x1xf32> -> vector<16x1xf32>
    %60 = vector.broadcast %59 : vector<16x1xf32> to vector<16x16xf32>
    %61 = arith.mulf %56, %60 : vector<16x16xf32>
    %62 = arith.truncf %61 : vector<16x16xf32> to vector<16x16xbf16>
    %63 = arith.truncf %47 : vector<16x32xf32> to vector<16x32xbf16>
    %cst_34 = arith.constant dense<0.000000e+00> : vector<16x32xf32>
    %64 = tpu.matmul %62, %63, %cst_34 {dimension_numbers = #tpu.dot_dimension_numbers<[1], [0], [0], [1], [0, 0, 1, 1], [], []>} : vector<16x16xbf16>, vector<16x32xbf16>, vector<16x32xf32> -> vector<16x32xf32>
    %c1_35 = arith.constant 1 : index
    %c0_36 = arith.constant 0 : index
    %c0_37 = arith.constant 0 : index
    %65 = vector.load %arg4[%c1_35, %c0_36, %c0_37] : memref<24x32x128xbf16, #tpu.memory_space<vmem>>, vector<1x32x128xbf16>
    %66 = vector.shape_cast %65 : vector<1x32x128xbf16> to vector<32x128xbf16>
    %c1_38 = arith.constant 1 : index
    %c0_39 = arith.constant 0 : index
    %c0_40 = arith.constant 0 : index
    %67 = vector.load %arg5[%c1_38, %c0_39, %c0_40] : memref<24x1x32xf32, #tpu.memory_space<vmem>>, vector<1x1x32xf32>
    %68 = vector.shape_cast %67 : vector<1x1x32xf32> to vector<1x32xf32>
    %cst_41 = arith.constant dense<0.000000e+00> : vector<16x32xf32>
    %69 = tpu.matmul %26, %66, %cst_41 {dimension_numbers = #tpu.dot_dimension_numbers<[1], [1], [0], [0], [0, 0, 1, 0], [], []>} : vector<16x128xbf16>, vector<32x128xbf16>, vector<16x32xf32> -> vector<16x32xf32>
    %70 = vector.broadcast %68 : vector<1x32xf32> to vector<16x32xf32>
    %71 = arith.addf %69, %70 : vector<16x32xf32>
    %c5 = arith.constant 5 : index
    %c0_42 = arith.constant 0 : index
    %c0_43 = arith.constant 0 : index
    %72 = vector.load %arg4[%c5, %c0_42, %c0_43] : memref<24x32x128xbf16, #tpu.memory_space<vmem>>, vector<1x32x128xbf16>
    %73 = vector.shape_cast %72 : vector<1x32x128xbf16> to vector<32x128xbf16>
    %c5_44 = arith.constant 5 : index
    %c0_45 = arith.constant 0 : index
    %c0_46 = arith.constant 0 : index
    %74 = vector.load %arg5[%c5_44, %c0_45, %c0_46] : memref<24x1x32xf32, #tpu.memory_space<vmem>>, vector<1x1x32xf32>
    %75 = vector.shape_cast %74 : vector<1x1x32xf32> to vector<1x32xf32>
    %cst_47 = arith.constant dense<0.000000e+00> : vector<16x32xf32>
    %76 = tpu.matmul %26, %73, %cst_47 {dimension_numbers = #tpu.dot_dimension_numbers<[1], [1], [0], [0], [0, 0, 1, 0], [], []>} : vector<16x128xbf16>, vector<32x128xbf16>, vector<16x32xf32> -> vector<16x32xf32>
    %77 = vector.broadcast %75 : vector<1x32xf32> to vector<16x32xf32>
    %78 = arith.addf %76, %77 : vector<16x32xf32>
    %c9 = arith.constant 9 : index
    %c0_48 = arith.constant 0 : index
    %c0_49 = arith.constant 0 : index
    %79 = vector.load %arg4[%c9, %c0_48, %c0_49] : memref<24x32x128xbf16, #tpu.memory_space<vmem>>, vector<1x32x128xbf16>
    %80 = vector.shape_cast %79 : vector<1x32x128xbf16> to vector<32x128xbf16>
    %c9_50 = arith.constant 9 : index
    %c0_51 = arith.constant 0 : index
    %c0_52 = arith.constant 0 : index
    %81 = vector.load %arg5[%c9_50, %c0_51, %c0_52] : memref<24x1x32xf32, #tpu.memory_space<vmem>>, vector<1x1x32xf32>
    %82 = vector.shape_cast %81 : vector<1x1x32xf32> to vector<1x32xf32>
    %cst_53 = arith.constant dense<0.000000e+00> : vector<16x32xf32>
    %83 = tpu.matmul %26, %80, %cst_53 {dimension_numbers = #tpu.dot_dimension_numbers<[1], [1], [0], [0], [0, 0, 1, 0], [], []>} : vector<16x128xbf16>, vector<32x128xbf16>, vector<16x32xf32> -> vector<16x32xf32>
    %84 = vector.broadcast %82 : vector<1x32xf32> to vector<16x32xf32>
    %85 = arith.addf %83, %84 : vector<16x32xf32>
    %86 = arith.truncf %71 : vector<16x32xf32> to vector<16x32xbf16>
    %87 = arith.truncf %78 : vector<16x32xf32> to vector<16x32xbf16>
    %cst_54 = arith.constant dense<0.000000e+00> : vector<16x16xf32>
    %88 = tpu.matmul %86, %87, %cst_54 {dimension_numbers = #tpu.dot_dimension_numbers<[1], [1], [0], [0], [0, 0, 1, 0], [], []>} : vector<16x32xbf16>, vector<16x32xbf16>, vector<16x16xf32> -> vector<16x16xf32>
    %89 = arith.addf %88, %1 : vector<16x16xf32>
    %cst_55 = arith.constant dense<0xFF800000> : vector<16xf32>
    %90 = vector.multi_reduction <maximumf>, %89, %cst_55 [1] : vector<16x16xf32> to vector<16xf32>
    %91 = vector.shape_cast %90 : vector<16xf32> to vector<16x1xf32>
    %92 = vector.broadcast %91 : vector<16x1xf32> to vector<16x16xf32>
    %93 = arith.subf %89, %92 : vector<16x16xf32>
    %94 = math.exp %93 : vector<16x16xf32>
    %cst_56 = arith.constant dense<0.000000e+00> : vector<16xf32>
    %95 = vector.multi_reduction <add>, %94, %cst_56 [1] : vector<16x16xf32> to vector<16xf32>
    %96 = vector.shape_cast %95 : vector<16xf32> to vector<16x1xf32>
    %97 = tpu.reciprocal %96 {approx = true} : vector<16x1xf32> -> vector<16x1xf32>
    %98 = vector.broadcast %97 : vector<16x1xf32> to vector<16x16xf32>
    %99 = arith.mulf %94, %98 : vector<16x16xf32>
    %100 = arith.truncf %99 : vector<16x16xf32> to vector<16x16xbf16>
    %101 = arith.truncf %85 : vector<16x32xf32> to vector<16x32xbf16>
    %cst_57 = arith.constant dense<0.000000e+00> : vector<16x32xf32>
    %102 = tpu.matmul %100, %101, %cst_57 {dimension_numbers = #tpu.dot_dimension_numbers<[1], [0], [0], [1], [0, 0, 1, 1], [], []>} : vector<16x16xbf16>, vector<16x32xbf16>, vector<16x32xf32> -> vector<16x32xf32>
    %c2 = arith.constant 2 : index
    %c0_58 = arith.constant 0 : index
    %c0_59 = arith.constant 0 : index
    %103 = vector.load %arg4[%c2, %c0_58, %c0_59] : memref<24x32x128xbf16, #tpu.memory_space<vmem>>, vector<1x32x128xbf16>
    %104 = vector.shape_cast %103 : vector<1x32x128xbf16> to vector<32x128xbf16>
    %c2_60 = arith.constant 2 : index
    %c0_61 = arith.constant 0 : index
    %c0_62 = arith.constant 0 : index
    %105 = vector.load %arg5[%c2_60, %c0_61, %c0_62] : memref<24x1x32xf32, #tpu.memory_space<vmem>>, vector<1x1x32xf32>
    %106 = vector.shape_cast %105 : vector<1x1x32xf32> to vector<1x32xf32>
    %cst_63 = arith.constant dense<0.000000e+00> : vector<16x32xf32>
    %107 = tpu.matmul %26, %104, %cst_63 {dimension_numbers = #tpu.dot_dimension_numbers<[1], [1], [0], [0], [0, 0, 1, 0], [], []>} : vector<16x128xbf16>, vector<32x128xbf16>, vector<16x32xf32> -> vector<16x32xf32>
    %108 = vector.broadcast %106 : vector<1x32xf32> to vector<16x32xf32>
    %109 = arith.addf %107, %108 : vector<16x32xf32>
    %c6 = arith.constant 6 : index
    %c0_64 = arith.constant 0 : index
    %c0_65 = arith.constant 0 : index
    %110 = vector.load %arg4[%c6, %c0_64, %c0_65] : memref<24x32x128xbf16, #tpu.memory_space<vmem>>, vector<1x32x128xbf16>
    %111 = vector.shape_cast %110 : vector<1x32x128xbf16> to vector<32x128xbf16>
    %c6_66 = arith.constant 6 : index
    %c0_67 = arith.constant 0 : index
    %c0_68 = arith.constant 0 : index
    %112 = vector.load %arg5[%c6_66, %c0_67, %c0_68] : memref<24x1x32xf32, #tpu.memory_space<vmem>>, vector<1x1x32xf32>
    %113 = vector.shape_cast %112 : vector<1x1x32xf32> to vector<1x32xf32>
    %cst_69 = arith.constant dense<0.000000e+00> : vector<16x32xf32>
    %114 = tpu.matmul %26, %111, %cst_69 {dimension_numbers = #tpu.dot_dimension_numbers<[1], [1], [0], [0], [0, 0, 1, 0], [], []>} : vector<16x128xbf16>, vector<32x128xbf16>, vector<16x32xf32> -> vector<16x32xf32>
    %115 = vector.broadcast %113 : vector<1x32xf32> to vector<16x32xf32>
    %116 = arith.addf %114, %115 : vector<16x32xf32>
    %c10 = arith.constant 10 : index
    %c0_70 = arith.constant 0 : index
    %c0_71 = arith.constant 0 : index
    %117 = vector.load %arg4[%c10, %c0_70, %c0_71] : memref<24x32x128xbf16, #tpu.memory_space<vmem>>, vector<1x32x128xbf16>
    %118 = vector.shape_cast %117 : vector<1x32x128xbf16> to vector<32x128xbf16>
    %c10_72 = arith.constant 10 : index
    %c0_73 = arith.constant 0 : index
    %c0_74 = arith.constant 0 : index
    %119 = vector.load %arg5[%c10_72, %c0_73, %c0_74] : memref<24x1x32xf32, #tpu.memory_space<vmem>>, vector<1x1x32xf32>
    %120 = vector.shape_cast %119 : vector<1x1x32xf32> to vector<1x32xf32>
    %cst_75 = arith.constant dense<0.000000e+00> : vector<16x32xf32>
    %121 = tpu.matmul %26, %118, %cst_75 {dimension_numbers = #tpu.dot_dimension_numbers<[1], [1], [0], [0], [0, 0, 1, 0], [], []>} : vector<16x128xbf16>, vector<32x128xbf16>, vector<16x32xf32> -> vector<16x32xf32>
    %122 = vector.broadcast %120 : vector<1x32xf32> to vector<16x32xf32>
    %123 = arith.addf %121, %122 : vector<16x32xf32>
    %124 = arith.truncf %109 : vector<16x32xf32> to vector<16x32xbf16>
    %125 = arith.truncf %116 : vector<16x32xf32> to vector<16x32xbf16>
    %cst_76 = arith.constant dense<0.000000e+00> : vector<16x16xf32>
    %126 = tpu.matmul %124, %125, %cst_76 {dimension_numbers = #tpu.dot_dimension_numbers<[1], [1], [0], [0], [0, 0, 1, 0], [], []>} : vector<16x32xbf16>, vector<16x32xbf16>, vector<16x16xf32> -> vector<16x16xf32>
    %127 = arith.addf %126, %1 : vector<16x16xf32>
    %cst_77 = arith.constant dense<0xFF800000> : vector<16xf32>
    %128 = vector.multi_reduction <maximumf>, %127, %cst_77 [1] : vector<16x16xf32> to vector<16xf32>
    %129 = vector.shape_cast %128 : vector<16xf32> to vector<16x1xf32>
    %130 = vector.broadcast %129 : vector<16x1xf32> to vector<16x16xf32>
    %131 = arith.subf %127, %130 : vector<16x16xf32>
    %132 = math.exp %131 : vector<16x16xf32>
    %cst_78 = arith.constant dense<0.000000e+00> : vector<16xf32>
    %133 = vector.multi_reduction <add>, %132, %cst_78 [1] : vector<16x16xf32> to vector<16xf32>
    %134 = vector.shape_cast %133 : vector<16xf32> to vector<16x1xf32>
    %135 = tpu.reciprocal %134 {approx = true} : vector<16x1xf32> -> vector<16x1xf32>
    %136 = vector.broadcast %135 : vector<16x1xf32> to vector<16x16xf32>
    %137 = arith.mulf %132, %136 : vector<16x16xf32>
    %138 = arith.truncf %137 : vector<16x16xf32> to vector<16x16xbf16>
    %139 = arith.truncf %123 : vector<16x32xf32> to vector<16x32xbf16>
    %cst_79 = arith.constant dense<0.000000e+00> : vector<16x32xf32>
    %140 = tpu.matmul %138, %139, %cst_79 {dimension_numbers = #tpu.dot_dimension_numbers<[1], [0], [0], [1], [0, 0, 1, 1], [], []>} : vector<16x16xbf16>, vector<16x32xbf16>, vector<16x32xf32> -> vector<16x32xf32>
    %c3 = arith.constant 3 : index
    %c0_80 = arith.constant 0 : index
    %c0_81 = arith.constant 0 : index
    %141 = vector.load %arg4[%c3, %c0_80, %c0_81] : memref<24x32x128xbf16, #tpu.memory_space<vmem>>, vector<1x32x128xbf16>
    %142 = vector.shape_cast %141 : vector<1x32x128xbf16> to vector<32x128xbf16>
    %c3_82 = arith.constant 3 : index
    %c0_83 = arith.constant 0 : index
    %c0_84 = arith.constant 0 : index
    %143 = vector.load %arg5[%c3_82, %c0_83, %c0_84] : memref<24x1x32xf32, #tpu.memory_space<vmem>>, vector<1x1x32xf32>
    %144 = vector.shape_cast %143 : vector<1x1x32xf32> to vector<1x32xf32>
    %cst_85 = arith.constant dense<0.000000e+00> : vector<16x32xf32>
    %145 = tpu.matmul %26, %142, %cst_85 {dimension_numbers = #tpu.dot_dimension_numbers<[1], [1], [0], [0], [0, 0, 1, 0], [], []>} : vector<16x128xbf16>, vector<32x128xbf16>, vector<16x32xf32> -> vector<16x32xf32>
    %146 = vector.broadcast %144 : vector<1x32xf32> to vector<16x32xf32>
    %147 = arith.addf %145, %146 : vector<16x32xf32>
    %c7 = arith.constant 7 : index
    %c0_86 = arith.constant 0 : index
    %c0_87 = arith.constant 0 : index
    %148 = vector.load %arg4[%c7, %c0_86, %c0_87] : memref<24x32x128xbf16, #tpu.memory_space<vmem>>, vector<1x32x128xbf16>
    %149 = vector.shape_cast %148 : vector<1x32x128xbf16> to vector<32x128xbf16>
    %c7_88 = arith.constant 7 : index
    %c0_89 = arith.constant 0 : index
    %c0_90 = arith.constant 0 : index
    %150 = vector.load %arg5[%c7_88, %c0_89, %c0_90] : memref<24x1x32xf32, #tpu.memory_space<vmem>>, vector<1x1x32xf32>
    %151 = vector.shape_cast %150 : vector<1x1x32xf32> to vector<1x32xf32>
    %cst_91 = arith.constant dense<0.000000e+00> : vector<16x32xf32>
    %152 = tpu.matmul %26, %149, %cst_91 {dimension_numbers = #tpu.dot_dimension_numbers<[1], [1], [0], [0], [0, 0, 1, 0], [], []>} : vector<16x128xbf16>, vector<32x128xbf16>, vector<16x32xf32> -> vector<16x32xf32>
    %153 = vector.broadcast %151 : vector<1x32xf32> to vector<16x32xf32>
    %154 = arith.addf %152, %153 : vector<16x32xf32>
    %c11 = arith.constant 11 : index
    %c0_92 = arith.constant 0 : index
    %c0_93 = arith.constant 0 : index
    %155 = vector.load %arg4[%c11, %c0_92, %c0_93] : memref<24x32x128xbf16, #tpu.memory_space<vmem>>, vector<1x32x128xbf16>
    %156 = vector.shape_cast %155 : vector<1x32x128xbf16> to vector<32x128xbf16>
    %c11_94 = arith.constant 11 : index
    %c0_95 = arith.constant 0 : index
    %c0_96 = arith.constant 0 : index
    %157 = vector.load %arg5[%c11_94, %c0_95, %c0_96] : memref<24x1x32xf32, #tpu.memory_space<vmem>>, vector<1x1x32xf32>
    %158 = vector.shape_cast %157 : vector<1x1x32xf32> to vector<1x32xf32>
    %cst_97 = arith.constant dense<0.000000e+00> : vector<16x32xf32>
    %159 = tpu.matmul %26, %156, %cst_97 {dimension_numbers = #tpu.dot_dimension_numbers<[1], [1], [0], [0], [0, 0, 1, 0], [], []>} : vector<16x128xbf16>, vector<32x128xbf16>, vector<16x32xf32> -> vector<16x32xf32>
    %160 = vector.broadcast %158 : vector<1x32xf32> to vector<16x32xf32>
    %161 = arith.addf %159, %160 : vector<16x32xf32>
    %162 = arith.truncf %147 : vector<16x32xf32> to vector<16x32xbf16>
    %163 = arith.truncf %154 : vector<16x32xf32> to vector<16x32xbf16>
    %cst_98 = arith.constant dense<0.000000e+00> : vector<16x16xf32>
    %164 = tpu.matmul %162, %163, %cst_98 {dimension_numbers = #tpu.dot_dimension_numbers<[1], [1], [0], [0], [0, 0, 1, 0], [], []>} : vector<16x32xbf16>, vector<16x32xbf16>, vector<16x16xf32> -> vector<16x16xf32>
    %165 = arith.addf %164, %1 : vector<16x16xf32>
    %cst_99 = arith.constant dense<0xFF800000> : vector<16xf32>
    %166 = vector.multi_reduction <maximumf>, %165, %cst_99 [1] : vector<16x16xf32> to vector<16xf32>
    %167 = vector.shape_cast %166 : vector<16xf32> to vector<16x1xf32>
    %168 = vector.broadcast %167 : vector<16x1xf32> to vector<16x16xf32>
    %169 = arith.subf %165, %168 : vector<16x16xf32>
    %170 = math.exp %169 : vector<16x16xf32>
    %cst_100 = arith.constant dense<0.000000e+00> : vector<16xf32>
    %171 = vector.multi_reduction <add>, %170, %cst_100 [1] : vector<16x16xf32> to vector<16xf32>
    %172 = vector.shape_cast %171 : vector<16xf32> to vector<16x1xf32>
    %173 = tpu.reciprocal %172 {approx = true} : vector<16x1xf32> -> vector<16x1xf32>
    %174 = vector.broadcast %173 : vector<16x1xf32> to vector<16x16xf32>
    %175 = arith.mulf %170, %174 : vector<16x16xf32>
    %176 = arith.truncf %175 : vector<16x16xf32> to vector<16x16xbf16>
    %177 = arith.truncf %161 : vector<16x32xf32> to vector<16x32xbf16>
    %cst_101 = arith.constant dense<0.000000e+00> : vector<16x32xf32>
    %178 = tpu.matmul %176, %177, %cst_101 {dimension_numbers = #tpu.dot_dimension_numbers<[1], [0], [0], [1], [0, 0, 1, 1], [], []>} : vector<16x16xbf16>, vector<16x32xbf16>, vector<16x32xf32> -> vector<16x32xf32>
    %179 = tpu.concatenate %64, %102, %140, %178 in 1 : vector<16x32xf32>, vector<16x32xf32>, vector<16x32xf32>, vector<16x32xf32> -> vector<16x128xf32>
    %c0_102 = arith.constant 0 : index
    %c0_103 = arith.constant 0 : index
    %c0_104 = arith.constant 0 : index
    %180 = vector.load %arg6[%c0_102, %c0_103, %c0_104] : memref<2x128x128xbf16, #tpu.memory_space<vmem>>, vector<1x128x128xbf16>
    %181 = vector.shape_cast %180 : vector<1x128x128xbf16> to vector<128x128xbf16>
    %c0_105 = arith.constant 0 : index
    %c0_106 = arith.constant 0 : index
    %c0_107 = arith.constant 0 : index
    %182 = vector.load %arg10[%c0_105, %c0_106, %c0_107] : memref<2x6x128xf32, #tpu.memory_space<vmem>>, vector<1x1x128xf32>
    %183 = vector.shape_cast %182 : vector<1x1x128xf32> to vector<1x128xf32>
    %184 = arith.truncf %179 : vector<16x128xf32> to vector<16x128xbf16>
    %cst_108 = arith.constant dense<0.000000e+00> : vector<16x128xf32>
    %185 = tpu.matmul %184, %181, %cst_108 {dimension_numbers = #tpu.dot_dimension_numbers<[1], [0], [0], [1], [0, 0, 1, 1], [], []>} : vector<16x128xbf16>, vector<128x128xbf16>, vector<16x128xf32> -> vector<16x128xf32>
    %186 = vector.broadcast %183 : vector<1x128xf32> to vector<16x128xf32>
    %187 = arith.addf %185, %186 : vector<16x128xf32>
    %188 = arith.addf %187, %25 : vector<16x128xf32>
    %c0_109 = arith.constant 0 : index
    %c1_110 = arith.constant 1 : index
    %c0_111 = arith.constant 0 : index
    %189 = vector.load %arg10[%c0_109, %c1_110, %c0_111] : memref<2x6x128xf32, #tpu.memory_space<vmem>>, vector<1x1x128xf32>
    %190 = vector.shape_cast %189 : vector<1x1x128xf32> to vector<1x128xf32>
    %c0_112 = arith.constant 0 : index
    %c2_113 = arith.constant 2 : index
    %c0_114 = arith.constant 0 : index
    %191 = vector.load %arg10[%c0_112, %c2_113, %c0_114] : memref<2x6x128xf32, #tpu.memory_space<vmem>>, vector<1x1x128xf32>
    %192 = vector.shape_cast %191 : vector<1x1x128xf32> to vector<1x128xf32>
    %cst_115 = arith.constant dense<0.000000e+00> : vector<16xf32>
    %193 = vector.multi_reduction <add>, %188, %cst_115 [1] : vector<16x128xf32> to vector<16xf32>
    %194 = vector.shape_cast %193 : vector<16xf32> to vector<16x1xf32>
    %cst_116 = arith.constant 1.280000e+02 : f32
    %195 = vector.broadcast %cst_116 : f32 to vector<16x1xf32>
    %196 = arith.divf %194, %195 : vector<16x1xf32>
    %197 = vector.broadcast %196 : vector<16x1xf32> to vector<16x128xf32>
    %198 = arith.subf %188, %197 : vector<16x128xf32>
    %199 = arith.mulf %198, %198 : vector<16x128xf32>
    %cst_117 = arith.constant dense<0.000000e+00> : vector<16xf32>
    %200 = vector.multi_reduction <add>, %199, %cst_117 [1] : vector<16x128xf32> to vector<16xf32>
    %201 = vector.shape_cast %200 : vector<16xf32> to vector<16x1xf32>
    %cst_118 = arith.constant 1.280000e+02 : f32
    %202 = vector.broadcast %cst_118 : f32 to vector<16x1xf32>
    %203 = arith.divf %201, %202 : vector<16x1xf32>
    %cst_119 = arith.constant 9.99999996E-13 : f32
    %204 = vector.broadcast %cst_119 : f32 to vector<16x1xf32>
    %205 = arith.addf %203, %204 : vector<16x1xf32>
    %206 = math.rsqrt %205 : vector<16x1xf32>
    %207 = vector.broadcast %206 : vector<16x1xf32> to vector<16x128xf32>
    %208 = arith.mulf %198, %207 : vector<16x128xf32>
    %209 = vector.broadcast %190 : vector<1x128xf32> to vector<16x128xf32>
    %210 = arith.mulf %208, %209 : vector<16x128xf32>
    %211 = vector.broadcast %192 : vector<1x128xf32> to vector<16x128xf32>
    %212 = arith.addf %210, %211 : vector<16x128xf32>
    %c0_120 = arith.constant 0 : index
    %c0_121 = arith.constant 0 : index
    %c0_122 = arith.constant 0 : index
    %213 = vector.load %arg7[%c0_120, %c0_121, %c0_122] : memref<2x128x256xbf16, #tpu.memory_space<vmem>>, vector<1x128x256xbf16>
    %214 = vector.shape_cast %213 : vector<1x128x256xbf16> to vector<128x256xbf16>
    %c0_123 = arith.constant 0 : index
    %c0_124 = arith.constant 0 : index
    %c0_125 = arith.constant 0 : index
    %215 = vector.load %arg8[%c0_123, %c0_124, %c0_125] : memref<2x1x256xf32, #tpu.memory_space<vmem>>, vector<1x1x256xf32>
    %216 = vector.shape_cast %215 : vector<1x1x256xf32> to vector<1x256xf32>
    %217 = arith.truncf %212 : vector<16x128xf32> to vector<16x128xbf16>
    %cst_126 = arith.constant dense<0.000000e+00> : vector<16x256xf32>
    %218 = tpu.matmul %217, %214, %cst_126 {dimension_numbers = #tpu.dot_dimension_numbers<[1], [0], [0], [1], [0, 0, 1, 1], [], []>} : vector<16x128xbf16>, vector<128x256xbf16>, vector<16x256xf32> -> vector<16x256xf32>
    %219 = vector.broadcast %216 : vector<1x256xf32> to vector<16x256xf32>
    %220 = arith.addf %218, %219 : vector<16x256xf32>
    %cst_127 = arith.constant 5.000000e-01 : f32
    %221 = vector.broadcast %cst_127 : f32 to vector<16x256xf32>
    %222 = arith.mulf %221, %220 : vector<16x256xf32>
    %cst_128 = arith.constant 4.471500e-02 : f32
    %223 = vector.broadcast %cst_128 : f32 to vector<16x256xf32>
    %224 = arith.mulf %223, %220 : vector<16x256xf32>
    %225 = arith.mulf %224, %220 : vector<16x256xf32>
    %226 = arith.mulf %225, %220 : vector<16x256xf32>
    %227 = arith.addf %220, %226 : vector<16x256xf32>
    %cst_129 = arith.constant 0.797884583 : f32
    %228 = vector.broadcast %cst_129 : f32 to vector<16x256xf32>
    %229 = arith.mulf %228, %227 : vector<16x256xf32>
    %230 = math.tanh %229 : vector<16x256xf32>
    %cst_130 = arith.constant 1.000000e+00 : f32
    %231 = vector.broadcast %cst_130 : f32 to vector<16x256xf32>
    %232 = arith.addf %231, %230 : vector<16x256xf32>
    %233 = arith.mulf %222, %232 : vector<16x256xf32>
    %c0_131 = arith.constant 0 : index
    %c0_132 = arith.constant 0 : index
    %c0_133 = arith.constant 0 : index
    %234 = vector.load %arg9[%c0_131, %c0_132, %c0_133] : memref<2x256x128xbf16, #tpu.memory_space<vmem>>, vector<1x256x128xbf16>
    %235 = vector.shape_cast %234 : vector<1x256x128xbf16> to vector<256x128xbf16>
    %c0_134 = arith.constant 0 : index
    %c3_135 = arith.constant 3 : index
    %c0_136 = arith.constant 0 : index
    %236 = vector.load %arg10[%c0_134, %c3_135, %c0_136] : memref<2x6x128xf32, #tpu.memory_space<vmem>>, vector<1x1x128xf32>
    %237 = vector.shape_cast %236 : vector<1x1x128xf32> to vector<1x128xf32>
    %238 = arith.truncf %233 : vector<16x256xf32> to vector<16x256xbf16>
    %cst_137 = arith.constant dense<0.000000e+00> : vector<16x128xf32>
    %239 = tpu.matmul %238, %235, %cst_137 {dimension_numbers = #tpu.dot_dimension_numbers<[1], [0], [0], [1], [0, 0, 1, 1], [], []>} : vector<16x256xbf16>, vector<256x128xbf16>, vector<16x128xf32> -> vector<16x128xf32>
    %240 = vector.broadcast %237 : vector<1x128xf32> to vector<16x128xf32>
    %241 = arith.addf %239, %240 : vector<16x128xf32>
    %242 = arith.addf %241, %212 : vector<16x128xf32>
    %c0_138 = arith.constant 0 : index
    %c4_139 = arith.constant 4 : index
    %c0_140 = arith.constant 0 : index
    %243 = vector.load %arg10[%c0_138, %c4_139, %c0_140] : memref<2x6x128xf32, #tpu.memory_space<vmem>>, vector<1x1x128xf32>
    %244 = vector.shape_cast %243 : vector<1x1x128xf32> to vector<1x128xf32>
    %c0_141 = arith.constant 0 : index
    %c5_142 = arith.constant 5 : index
    %c0_143 = arith.constant 0 : index
    %245 = vector.load %arg10[%c0_141, %c5_142, %c0_143] : memref<2x6x128xf32, #tpu.memory_space<vmem>>, vector<1x1x128xf32>
    %246 = vector.shape_cast %245 : vector<1x1x128xf32> to vector<1x128xf32>
    %cst_144 = arith.constant dense<0.000000e+00> : vector<16xf32>
    %247 = vector.multi_reduction <add>, %242, %cst_144 [1] : vector<16x128xf32> to vector<16xf32>
    %248 = vector.shape_cast %247 : vector<16xf32> to vector<16x1xf32>
    %cst_145 = arith.constant 1.280000e+02 : f32
    %249 = vector.broadcast %cst_145 : f32 to vector<16x1xf32>
    %250 = arith.divf %248, %249 : vector<16x1xf32>
    %251 = vector.broadcast %250 : vector<16x1xf32> to vector<16x128xf32>
    %252 = arith.subf %242, %251 : vector<16x128xf32>
    %253 = arith.mulf %252, %252 : vector<16x128xf32>
    %cst_146 = arith.constant dense<0.000000e+00> : vector<16xf32>
    %254 = vector.multi_reduction <add>, %253, %cst_146 [1] : vector<16x128xf32> to vector<16xf32>
    %255 = vector.shape_cast %254 : vector<16xf32> to vector<16x1xf32>
    %cst_147 = arith.constant 1.280000e+02 : f32
    %256 = vector.broadcast %cst_147 : f32 to vector<16x1xf32>
    %257 = arith.divf %255, %256 : vector<16x1xf32>
    %cst_148 = arith.constant 9.99999996E-13 : f32
    %258 = vector.broadcast %cst_148 : f32 to vector<16x1xf32>
    %259 = arith.addf %257, %258 : vector<16x1xf32>
    %260 = math.rsqrt %259 : vector<16x1xf32>
    %261 = vector.broadcast %260 : vector<16x1xf32> to vector<16x128xf32>
    %262 = arith.mulf %252, %261 : vector<16x128xf32>
    %263 = vector.broadcast %244 : vector<1x128xf32> to vector<16x128xf32>
    %264 = arith.mulf %262, %263 : vector<16x128xf32>
    %265 = vector.broadcast %246 : vector<1x128xf32> to vector<16x128xf32>
    %266 = arith.addf %264, %265 : vector<16x128xf32>
    %267 = arith.truncf %266 : vector<16x128xf32> to vector<16x128xbf16>
    %c12 = arith.constant 12 : index
    %c0_149 = arith.constant 0 : index
    %c0_150 = arith.constant 0 : index
    %268 = vector.load %arg4[%c12, %c0_149, %c0_150] : memref<24x32x128xbf16, #tpu.memory_space<vmem>>, vector<1x32x128xbf16>
    %269 = vector.shape_cast %268 : vector<1x32x128xbf16> to vector<32x128xbf16>
    %c12_151 = arith.constant 12 : index
    %c0_152 = arith.constant 0 : index
    %c0_153 = arith.constant 0 : index
    %270 = vector.load %arg5[%c12_151, %c0_152, %c0_153] : memref<24x1x32xf32, #tpu.memory_space<vmem>>, vector<1x1x32xf32>
    %271 = vector.shape_cast %270 : vector<1x1x32xf32> to vector<1x32xf32>
    %cst_154 = arith.constant dense<0.000000e+00> : vector<16x32xf32>
    %272 = tpu.matmul %267, %269, %cst_154 {dimension_numbers = #tpu.dot_dimension_numbers<[1], [1], [0], [0], [0, 0, 1, 0], [], []>} : vector<16x128xbf16>, vector<32x128xbf16>, vector<16x32xf32> -> vector<16x32xf32>
    %273 = vector.broadcast %271 : vector<1x32xf32> to vector<16x32xf32>
    %274 = arith.addf %272, %273 : vector<16x32xf32>
    %c16 = arith.constant 16 : index
    %c0_155 = arith.constant 0 : index
    %c0_156 = arith.constant 0 : index
    %275 = vector.load %arg4[%c16, %c0_155, %c0_156] : memref<24x32x128xbf16, #tpu.memory_space<vmem>>, vector<1x32x128xbf16>
    %276 = vector.shape_cast %275 : vector<1x32x128xbf16> to vector<32x128xbf16>
    %c16_157 = arith.constant 16 : index
    %c0_158 = arith.constant 0 : index
    %c0_159 = arith.constant 0 : index
    %277 = vector.load %arg5[%c16_157, %c0_158, %c0_159] : memref<24x1x32xf32, #tpu.memory_space<vmem>>, vector<1x1x32xf32>
    %278 = vector.shape_cast %277 : vector<1x1x32xf32> to vector<1x32xf32>
    %cst_160 = arith.constant dense<0.000000e+00> : vector<16x32xf32>
    %279 = tpu.matmul %267, %276, %cst_160 {dimension_numbers = #tpu.dot_dimension_numbers<[1], [1], [0], [0], [0, 0, 1, 0], [], []>} : vector<16x128xbf16>, vector<32x128xbf16>, vector<16x32xf32> -> vector<16x32xf32>
    %280 = vector.broadcast %278 : vector<1x32xf32> to vector<16x32xf32>
    %281 = arith.addf %279, %280 : vector<16x32xf32>
    %c20 = arith.constant 20 : index
    %c0_161 = arith.constant 0 : index
    %c0_162 = arith.constant 0 : index
    %282 = vector.load %arg4[%c20, %c0_161, %c0_162] : memref<24x32x128xbf16, #tpu.memory_space<vmem>>, vector<1x32x128xbf16>
    %283 = vector.shape_cast %282 : vector<1x32x128xbf16> to vector<32x128xbf16>
    %c20_163 = arith.constant 20 : index
    %c0_164 = arith.constant 0 : index
    %c0_165 = arith.constant 0 : index
    %284 = vector.load %arg5[%c20_163, %c0_164, %c0_165] : memref<24x1x32xf32, #tpu.memory_space<vmem>>, vector<1x1x32xf32>
    %285 = vector.shape_cast %284 : vector<1x1x32xf32> to vector<1x32xf32>
    %cst_166 = arith.constant dense<0.000000e+00> : vector<16x32xf32>
    %286 = tpu.matmul %267, %283, %cst_166 {dimension_numbers = #tpu.dot_dimension_numbers<[1], [1], [0], [0], [0, 0, 1, 0], [], []>} : vector<16x128xbf16>, vector<32x128xbf16>, vector<16x32xf32> -> vector<16x32xf32>
    %287 = vector.broadcast %285 : vector<1x32xf32> to vector<16x32xf32>
    %288 = arith.addf %286, %287 : vector<16x32xf32>
    %289 = arith.truncf %274 : vector<16x32xf32> to vector<16x32xbf16>
    %290 = arith.truncf %281 : vector<16x32xf32> to vector<16x32xbf16>
    %cst_167 = arith.constant dense<0.000000e+00> : vector<16x16xf32>
    %291 = tpu.matmul %289, %290, %cst_167 {dimension_numbers = #tpu.dot_dimension_numbers<[1], [1], [0], [0], [0, 0, 1, 0], [], []>} : vector<16x32xbf16>, vector<16x32xbf16>, vector<16x16xf32> -> vector<16x16xf32>
    %292 = arith.addf %291, %1 : vector<16x16xf32>
    %cst_168 = arith.constant dense<0xFF800000> : vector<16xf32>
    %293 = vector.multi_reduction <maximumf>, %292, %cst_168 [1] : vector<16x16xf32> to vector<16xf32>
    %294 = vector.shape_cast %293 : vector<16xf32> to vector<16x1xf32>
    %295 = vector.broadcast %294 : vector<16x1xf32> to vector<16x16xf32>
    %296 = arith.subf %292, %295 : vector<16x16xf32>
    %297 = math.exp %296 : vector<16x16xf32>
    %cst_169 = arith.constant dense<0.000000e+00> : vector<16xf32>
    %298 = vector.multi_reduction <add>, %297, %cst_169 [1] : vector<16x16xf32> to vector<16xf32>
    %299 = vector.shape_cast %298 : vector<16xf32> to vector<16x1xf32>
    %300 = tpu.reciprocal %299 {approx = true} : vector<16x1xf32> -> vector<16x1xf32>
    %301 = vector.broadcast %300 : vector<16x1xf32> to vector<16x16xf32>
    %302 = arith.mulf %297, %301 : vector<16x16xf32>
    %303 = arith.truncf %302 : vector<16x16xf32> to vector<16x16xbf16>
    %304 = arith.truncf %288 : vector<16x32xf32> to vector<16x32xbf16>
    %cst_170 = arith.constant dense<0.000000e+00> : vector<16x32xf32>
    %305 = tpu.matmul %303, %304, %cst_170 {dimension_numbers = #tpu.dot_dimension_numbers<[1], [0], [0], [1], [0, 0, 1, 1], [], []>} : vector<16x16xbf16>, vector<16x32xbf16>, vector<16x32xf32> -> vector<16x32xf32>
    %c13 = arith.constant 13 : index
    %c0_171 = arith.constant 0 : index
    %c0_172 = arith.constant 0 : index
    %306 = vector.load %arg4[%c13, %c0_171, %c0_172] : memref<24x32x128xbf16, #tpu.memory_space<vmem>>, vector<1x32x128xbf16>
    %307 = vector.shape_cast %306 : vector<1x32x128xbf16> to vector<32x128xbf16>
    %c13_173 = arith.constant 13 : index
    %c0_174 = arith.constant 0 : index
    %c0_175 = arith.constant 0 : index
    %308 = vector.load %arg5[%c13_173, %c0_174, %c0_175] : memref<24x1x32xf32, #tpu.memory_space<vmem>>, vector<1x1x32xf32>
    %309 = vector.shape_cast %308 : vector<1x1x32xf32> to vector<1x32xf32>
    %cst_176 = arith.constant dense<0.000000e+00> : vector<16x32xf32>
    %310 = tpu.matmul %267, %307, %cst_176 {dimension_numbers = #tpu.dot_dimension_numbers<[1], [1], [0], [0], [0, 0, 1, 0], [], []>} : vector<16x128xbf16>, vector<32x128xbf16>, vector<16x32xf32> -> vector<16x32xf32>
    %311 = vector.broadcast %309 : vector<1x32xf32> to vector<16x32xf32>
    %312 = arith.addf %310, %311 : vector<16x32xf32>
    %c17 = arith.constant 17 : index
    %c0_177 = arith.constant 0 : index
    %c0_178 = arith.constant 0 : index
    %313 = vector.load %arg4[%c17, %c0_177, %c0_178] : memref<24x32x128xbf16, #tpu.memory_space<vmem>>, vector<1x32x128xbf16>
    %314 = vector.shape_cast %313 : vector<1x32x128xbf16> to vector<32x128xbf16>
    %c17_179 = arith.constant 17 : index
    %c0_180 = arith.constant 0 : index
    %c0_181 = arith.constant 0 : index
    %315 = vector.load %arg5[%c17_179, %c0_180, %c0_181] : memref<24x1x32xf32, #tpu.memory_space<vmem>>, vector<1x1x32xf32>
    %316 = vector.shape_cast %315 : vector<1x1x32xf32> to vector<1x32xf32>
    %cst_182 = arith.constant dense<0.000000e+00> : vector<16x32xf32>
    %317 = tpu.matmul %267, %314, %cst_182 {dimension_numbers = #tpu.dot_dimension_numbers<[1], [1], [0], [0], [0, 0, 1, 0], [], []>} : vector<16x128xbf16>, vector<32x128xbf16>, vector<16x32xf32> -> vector<16x32xf32>
    %318 = vector.broadcast %316 : vector<1x32xf32> to vector<16x32xf32>
    %319 = arith.addf %317, %318 : vector<16x32xf32>
    %c21 = arith.constant 21 : index
    %c0_183 = arith.constant 0 : index
    %c0_184 = arith.constant 0 : index
    %320 = vector.load %arg4[%c21, %c0_183, %c0_184] : memref<24x32x128xbf16, #tpu.memory_space<vmem>>, vector<1x32x128xbf16>
    %321 = vector.shape_cast %320 : vector<1x32x128xbf16> to vector<32x128xbf16>
    %c21_185 = arith.constant 21 : index
    %c0_186 = arith.constant 0 : index
    %c0_187 = arith.constant 0 : index
    %322 = vector.load %arg5[%c21_185, %c0_186, %c0_187] : memref<24x1x32xf32, #tpu.memory_space<vmem>>, vector<1x1x32xf32>
    %323 = vector.shape_cast %322 : vector<1x1x32xf32> to vector<1x32xf32>
    %cst_188 = arith.constant dense<0.000000e+00> : vector<16x32xf32>
    %324 = tpu.matmul %267, %321, %cst_188 {dimension_numbers = #tpu.dot_dimension_numbers<[1], [1], [0], [0], [0, 0, 1, 0], [], []>} : vector<16x128xbf16>, vector<32x128xbf16>, vector<16x32xf32> -> vector<16x32xf32>
    %325 = vector.broadcast %323 : vector<1x32xf32> to vector<16x32xf32>
    %326 = arith.addf %324, %325 : vector<16x32xf32>
    %327 = arith.truncf %312 : vector<16x32xf32> to vector<16x32xbf16>
    %328 = arith.truncf %319 : vector<16x32xf32> to vector<16x32xbf16>
    %cst_189 = arith.constant dense<0.000000e+00> : vector<16x16xf32>
    %329 = tpu.matmul %327, %328, %cst_189 {dimension_numbers = #tpu.dot_dimension_numbers<[1], [1], [0], [0], [0, 0, 1, 0], [], []>} : vector<16x32xbf16>, vector<16x32xbf16>, vector<16x16xf32> -> vector<16x16xf32>
    %330 = arith.addf %329, %1 : vector<16x16xf32>
    %cst_190 = arith.constant dense<0xFF800000> : vector<16xf32>
    %331 = vector.multi_reduction <maximumf>, %330, %cst_190 [1] : vector<16x16xf32> to vector<16xf32>
    %332 = vector.shape_cast %331 : vector<16xf32> to vector<16x1xf32>
    %333 = vector.broadcast %332 : vector<16x1xf32> to vector<16x16xf32>
    %334 = arith.subf %330, %333 : vector<16x16xf32>
    %335 = math.exp %334 : vector<16x16xf32>
    %cst_191 = arith.constant dense<0.000000e+00> : vector<16xf32>
    %336 = vector.multi_reduction <add>, %335, %cst_191 [1] : vector<16x16xf32> to vector<16xf32>
    %337 = vector.shape_cast %336 : vector<16xf32> to vector<16x1xf32>
    %338 = tpu.reciprocal %337 {approx = true} : vector<16x1xf32> -> vector<16x1xf32>
    %339 = vector.broadcast %338 : vector<16x1xf32> to vector<16x16xf32>
    %340 = arith.mulf %335, %339 : vector<16x16xf32>
    %341 = arith.truncf %340 : vector<16x16xf32> to vector<16x16xbf16>
    %342 = arith.truncf %326 : vector<16x32xf32> to vector<16x32xbf16>
    %cst_192 = arith.constant dense<0.000000e+00> : vector<16x32xf32>
    %343 = tpu.matmul %341, %342, %cst_192 {dimension_numbers = #tpu.dot_dimension_numbers<[1], [0], [0], [1], [0, 0, 1, 1], [], []>} : vector<16x16xbf16>, vector<16x32xbf16>, vector<16x32xf32> -> vector<16x32xf32>
    %c14 = arith.constant 14 : index
    %c0_193 = arith.constant 0 : index
    %c0_194 = arith.constant 0 : index
    %344 = vector.load %arg4[%c14, %c0_193, %c0_194] : memref<24x32x128xbf16, #tpu.memory_space<vmem>>, vector<1x32x128xbf16>
    %345 = vector.shape_cast %344 : vector<1x32x128xbf16> to vector<32x128xbf16>
    %c14_195 = arith.constant 14 : index
    %c0_196 = arith.constant 0 : index
    %c0_197 = arith.constant 0 : index
    %346 = vector.load %arg5[%c14_195, %c0_196, %c0_197] : memref<24x1x32xf32, #tpu.memory_space<vmem>>, vector<1x1x32xf32>
    %347 = vector.shape_cast %346 : vector<1x1x32xf32> to vector<1x32xf32>
    %cst_198 = arith.constant dense<0.000000e+00> : vector<16x32xf32>
    %348 = tpu.matmul %267, %345, %cst_198 {dimension_numbers = #tpu.dot_dimension_numbers<[1], [1], [0], [0], [0, 0, 1, 0], [], []>} : vector<16x128xbf16>, vector<32x128xbf16>, vector<16x32xf32> -> vector<16x32xf32>
    %349 = vector.broadcast %347 : vector<1x32xf32> to vector<16x32xf32>
    %350 = arith.addf %348, %349 : vector<16x32xf32>
    %c18 = arith.constant 18 : index
    %c0_199 = arith.constant 0 : index
    %c0_200 = arith.constant 0 : index
    %351 = vector.load %arg4[%c18, %c0_199, %c0_200] : memref<24x32x128xbf16, #tpu.memory_space<vmem>>, vector<1x32x128xbf16>
    %352 = vector.shape_cast %351 : vector<1x32x128xbf16> to vector<32x128xbf16>
    %c18_201 = arith.constant 18 : index
    %c0_202 = arith.constant 0 : index
    %c0_203 = arith.constant 0 : index
    %353 = vector.load %arg5[%c18_201, %c0_202, %c0_203] : memref<24x1x32xf32, #tpu.memory_space<vmem>>, vector<1x1x32xf32>
    %354 = vector.shape_cast %353 : vector<1x1x32xf32> to vector<1x32xf32>
    %cst_204 = arith.constant dense<0.000000e+00> : vector<16x32xf32>
    %355 = tpu.matmul %267, %352, %cst_204 {dimension_numbers = #tpu.dot_dimension_numbers<[1], [1], [0], [0], [0, 0, 1, 0], [], []>} : vector<16x128xbf16>, vector<32x128xbf16>, vector<16x32xf32> -> vector<16x32xf32>
    %356 = vector.broadcast %354 : vector<1x32xf32> to vector<16x32xf32>
    %357 = arith.addf %355, %356 : vector<16x32xf32>
    %c22 = arith.constant 22 : index
    %c0_205 = arith.constant 0 : index
    %c0_206 = arith.constant 0 : index
    %358 = vector.load %arg4[%c22, %c0_205, %c0_206] : memref<24x32x128xbf16, #tpu.memory_space<vmem>>, vector<1x32x128xbf16>
    %359 = vector.shape_cast %358 : vector<1x32x128xbf16> to vector<32x128xbf16>
    %c22_207 = arith.constant 22 : index
    %c0_208 = arith.constant 0 : index
    %c0_209 = arith.constant 0 : index
    %360 = vector.load %arg5[%c22_207, %c0_208, %c0_209] : memref<24x1x32xf32, #tpu.memory_space<vmem>>, vector<1x1x32xf32>
    %361 = vector.shape_cast %360 : vector<1x1x32xf32> to vector<1x32xf32>
    %cst_210 = arith.constant dense<0.000000e+00> : vector<16x32xf32>
    %362 = tpu.matmul %267, %359, %cst_210 {dimension_numbers = #tpu.dot_dimension_numbers<[1], [1], [0], [0], [0, 0, 1, 0], [], []>} : vector<16x128xbf16>, vector<32x128xbf16>, vector<16x32xf32> -> vector<16x32xf32>
    %363 = vector.broadcast %361 : vector<1x32xf32> to vector<16x32xf32>
    %364 = arith.addf %362, %363 : vector<16x32xf32>
    %365 = arith.truncf %350 : vector<16x32xf32> to vector<16x32xbf16>
    %366 = arith.truncf %357 : vector<16x32xf32> to vector<16x32xbf16>
    %cst_211 = arith.constant dense<0.000000e+00> : vector<16x16xf32>
    %367 = tpu.matmul %365, %366, %cst_211 {dimension_numbers = #tpu.dot_dimension_numbers<[1], [1], [0], [0], [0, 0, 1, 0], [], []>} : vector<16x32xbf16>, vector<16x32xbf16>, vector<16x16xf32> -> vector<16x16xf32>
    %368 = arith.addf %367, %1 : vector<16x16xf32>
    %cst_212 = arith.constant dense<0xFF800000> : vector<16xf32>
    %369 = vector.multi_reduction <maximumf>, %368, %cst_212 [1] : vector<16x16xf32> to vector<16xf32>
    %370 = vector.shape_cast %369 : vector<16xf32> to vector<16x1xf32>
    %371 = vector.broadcast %370 : vector<16x1xf32> to vector<16x16xf32>
    %372 = arith.subf %368, %371 : vector<16x16xf32>
    %373 = math.exp %372 : vector<16x16xf32>
    %cst_213 = arith.constant dense<0.000000e+00> : vector<16xf32>
    %374 = vector.multi_reduction <add>, %373, %cst_213 [1] : vector<16x16xf32> to vector<16xf32>
    %375 = vector.shape_cast %374 : vector<16xf32> to vector<16x1xf32>
    %376 = tpu.reciprocal %375 {approx = true} : vector<16x1xf32> -> vector<16x1xf32>
    %377 = vector.broadcast %376 : vector<16x1xf32> to vector<16x16xf32>
    %378 = arith.mulf %373, %377 : vector<16x16xf32>
    %379 = arith.truncf %378 : vector<16x16xf32> to vector<16x16xbf16>
    %380 = arith.truncf %364 : vector<16x32xf32> to vector<16x32xbf16>
    %cst_214 = arith.constant dense<0.000000e+00> : vector<16x32xf32>
    %381 = tpu.matmul %379, %380, %cst_214 {dimension_numbers = #tpu.dot_dimension_numbers<[1], [0], [0], [1], [0, 0, 1, 1], [], []>} : vector<16x16xbf16>, vector<16x32xbf16>, vector<16x32xf32> -> vector<16x32xf32>
    %c15 = arith.constant 15 : index
    %c0_215 = arith.constant 0 : index
    %c0_216 = arith.constant 0 : index
    %382 = vector.load %arg4[%c15, %c0_215, %c0_216] : memref<24x32x128xbf16, #tpu.memory_space<vmem>>, vector<1x32x128xbf16>
    %383 = vector.shape_cast %382 : vector<1x32x128xbf16> to vector<32x128xbf16>
    %c15_217 = arith.constant 15 : index
    %c0_218 = arith.constant 0 : index
    %c0_219 = arith.constant 0 : index
    %384 = vector.load %arg5[%c15_217, %c0_218, %c0_219] : memref<24x1x32xf32, #tpu.memory_space<vmem>>, vector<1x1x32xf32>
    %385 = vector.shape_cast %384 : vector<1x1x32xf32> to vector<1x32xf32>
    %cst_220 = arith.constant dense<0.000000e+00> : vector<16x32xf32>
    %386 = tpu.matmul %267, %383, %cst_220 {dimension_numbers = #tpu.dot_dimension_numbers<[1], [1], [0], [0], [0, 0, 1, 0], [], []>} : vector<16x128xbf16>, vector<32x128xbf16>, vector<16x32xf32> -> vector<16x32xf32>
    %387 = vector.broadcast %385 : vector<1x32xf32> to vector<16x32xf32>
    %388 = arith.addf %386, %387 : vector<16x32xf32>
    %c19 = arith.constant 19 : index
    %c0_221 = arith.constant 0 : index
    %c0_222 = arith.constant 0 : index
    %389 = vector.load %arg4[%c19, %c0_221, %c0_222] : memref<24x32x128xbf16, #tpu.memory_space<vmem>>, vector<1x32x128xbf16>
    %390 = vector.shape_cast %389 : vector<1x32x128xbf16> to vector<32x128xbf16>
    %c19_223 = arith.constant 19 : index
    %c0_224 = arith.constant 0 : index
    %c0_225 = arith.constant 0 : index
    %391 = vector.load %arg5[%c19_223, %c0_224, %c0_225] : memref<24x1x32xf32, #tpu.memory_space<vmem>>, vector<1x1x32xf32>
    %392 = vector.shape_cast %391 : vector<1x1x32xf32> to vector<1x32xf32>
    %cst_226 = arith.constant dense<0.000000e+00> : vector<16x32xf32>
    %393 = tpu.matmul %267, %390, %cst_226 {dimension_numbers = #tpu.dot_dimension_numbers<[1], [1], [0], [0], [0, 0, 1, 0], [], []>} : vector<16x128xbf16>, vector<32x128xbf16>, vector<16x32xf32> -> vector<16x32xf32>
    %394 = vector.broadcast %392 : vector<1x32xf32> to vector<16x32xf32>
    %395 = arith.addf %393, %394 : vector<16x32xf32>
    %c23 = arith.constant 23 : index
    %c0_227 = arith.constant 0 : index
    %c0_228 = arith.constant 0 : index
    %396 = vector.load %arg4[%c23, %c0_227, %c0_228] : memref<24x32x128xbf16, #tpu.memory_space<vmem>>, vector<1x32x128xbf16>
    %397 = vector.shape_cast %396 : vector<1x32x128xbf16> to vector<32x128xbf16>
    %c23_229 = arith.constant 23 : index
    %c0_230 = arith.constant 0 : index
    %c0_231 = arith.constant 0 : index
    %398 = vector.load %arg5[%c23_229, %c0_230, %c0_231] : memref<24x1x32xf32, #tpu.memory_space<vmem>>, vector<1x1x32xf32>
    %399 = vector.shape_cast %398 : vector<1x1x32xf32> to vector<1x32xf32>
    %cst_232 = arith.constant dense<0.000000e+00> : vector<16x32xf32>
    %400 = tpu.matmul %267, %397, %cst_232 {dimension_numbers = #tpu.dot_dimension_numbers<[1], [1], [0], [0], [0, 0, 1, 0], [], []>} : vector<16x128xbf16>, vector<32x128xbf16>, vector<16x32xf32> -> vector<16x32xf32>
    %401 = vector.broadcast %399 : vector<1x32xf32> to vector<16x32xf32>
    %402 = arith.addf %400, %401 : vector<16x32xf32>
    %403 = arith.truncf %388 : vector<16x32xf32> to vector<16x32xbf16>
    %404 = arith.truncf %395 : vector<16x32xf32> to vector<16x32xbf16>
    %cst_233 = arith.constant dense<0.000000e+00> : vector<16x16xf32>
    %405 = tpu.matmul %403, %404, %cst_233 {dimension_numbers = #tpu.dot_dimension_numbers<[1], [1], [0], [0], [0, 0, 1, 0], [], []>} : vector<16x32xbf16>, vector<16x32xbf16>, vector<16x16xf32> -> vector<16x16xf32>
    %406 = arith.addf %405, %1 : vector<16x16xf32>
    %cst_234 = arith.constant dense<0xFF800000> : vector<16xf32>
    %407 = vector.multi_reduction <maximumf>, %406, %cst_234 [1] : vector<16x16xf32> to vector<16xf32>
    %408 = vector.shape_cast %407 : vector<16xf32> to vector<16x1xf32>
    %409 = vector.broadcast %408 : vector<16x1xf32> to vector<16x16xf32>
    %410 = arith.subf %406, %409 : vector<16x16xf32>
    %411 = math.exp %410 : vector<16x16xf32>
    %cst_235 = arith.constant dense<0.000000e+00> : vector<16xf32>
    %412 = vector.multi_reduction <add>, %411, %cst_235 [1] : vector<16x16xf32> to vector<16xf32>
    %413 = vector.shape_cast %412 : vector<16xf32> to vector<16x1xf32>
    %414 = tpu.reciprocal %413 {approx = true} : vector<16x1xf32> -> vector<16x1xf32>
    %415 = vector.broadcast %414 : vector<16x1xf32> to vector<16x16xf32>
    %416 = arith.mulf %411, %415 : vector<16x16xf32>
    %417 = arith.truncf %416 : vector<16x16xf32> to vector<16x16xbf16>
    %418 = arith.truncf %402 : vector<16x32xf32> to vector<16x32xbf16>
    %cst_236 = arith.constant dense<0.000000e+00> : vector<16x32xf32>
    %419 = tpu.matmul %417, %418, %cst_236 {dimension_numbers = #tpu.dot_dimension_numbers<[1], [0], [0], [1], [0, 0, 1, 1], [], []>} : vector<16x16xbf16>, vector<16x32xbf16>, vector<16x32xf32> -> vector<16x32xf32>
    %420 = tpu.concatenate %305, %343, %381, %419 in 1 : vector<16x32xf32>, vector<16x32xf32>, vector<16x32xf32>, vector<16x32xf32> -> vector<16x128xf32>
    %c1_237 = arith.constant 1 : index
    %c0_238 = arith.constant 0 : index
    %c0_239 = arith.constant 0 : index
    %421 = vector.load %arg6[%c1_237, %c0_238, %c0_239] : memref<2x128x128xbf16, #tpu.memory_space<vmem>>, vector<1x128x128xbf16>
    %422 = vector.shape_cast %421 : vector<1x128x128xbf16> to vector<128x128xbf16>
    %c1_240 = arith.constant 1 : index
    %c0_241 = arith.constant 0 : index
    %c0_242 = arith.constant 0 : index
    %423 = vector.load %arg10[%c1_240, %c0_241, %c0_242] : memref<2x6x128xf32, #tpu.memory_space<vmem>>, vector<1x1x128xf32>
    %424 = vector.shape_cast %423 : vector<1x1x128xf32> to vector<1x128xf32>
    %425 = arith.truncf %420 : vector<16x128xf32> to vector<16x128xbf16>
    %cst_243 = arith.constant dense<0.000000e+00> : vector<16x128xf32>
    %426 = tpu.matmul %425, %422, %cst_243 {dimension_numbers = #tpu.dot_dimension_numbers<[1], [0], [0], [1], [0, 0, 1, 1], [], []>} : vector<16x128xbf16>, vector<128x128xbf16>, vector<16x128xf32> -> vector<16x128xf32>
    %427 = vector.broadcast %424 : vector<1x128xf32> to vector<16x128xf32>
    %428 = arith.addf %426, %427 : vector<16x128xf32>
    %429 = arith.addf %428, %266 : vector<16x128xf32>
    %c1_244 = arith.constant 1 : index
    %c1_245 = arith.constant 1 : index
    %c0_246 = arith.constant 0 : index
    %430 = vector.load %arg10[%c1_244, %c1_245, %c0_246] : memref<2x6x128xf32, #tpu.memory_space<vmem>>, vector<1x1x128xf32>
    %431 = vector.shape_cast %430 : vector<1x1x128xf32> to vector<1x128xf32>
    %c1_247 = arith.constant 1 : index
    %c2_248 = arith.constant 2 : index
    %c0_249 = arith.constant 0 : index
    %432 = vector.load %arg10[%c1_247, %c2_248, %c0_249] : memref<2x6x128xf32, #tpu.memory_space<vmem>>, vector<1x1x128xf32>
    %433 = vector.shape_cast %432 : vector<1x1x128xf32> to vector<1x128xf32>
    %cst_250 = arith.constant dense<0.000000e+00> : vector<16xf32>
    %434 = vector.multi_reduction <add>, %429, %cst_250 [1] : vector<16x128xf32> to vector<16xf32>
    %435 = vector.shape_cast %434 : vector<16xf32> to vector<16x1xf32>
    %cst_251 = arith.constant 1.280000e+02 : f32
    %436 = vector.broadcast %cst_251 : f32 to vector<16x1xf32>
    %437 = arith.divf %435, %436 : vector<16x1xf32>
    %438 = vector.broadcast %437 : vector<16x1xf32> to vector<16x128xf32>
    %439 = arith.subf %429, %438 : vector<16x128xf32>
    %440 = arith.mulf %439, %439 : vector<16x128xf32>
    %cst_252 = arith.constant dense<0.000000e+00> : vector<16xf32>
    %441 = vector.multi_reduction <add>, %440, %cst_252 [1] : vector<16x128xf32> to vector<16xf32>
    %442 = vector.shape_cast %441 : vector<16xf32> to vector<16x1xf32>
    %cst_253 = arith.constant 1.280000e+02 : f32
    %443 = vector.broadcast %cst_253 : f32 to vector<16x1xf32>
    %444 = arith.divf %442, %443 : vector<16x1xf32>
    %cst_254 = arith.constant 9.99999996E-13 : f32
    %445 = vector.broadcast %cst_254 : f32 to vector<16x1xf32>
    %446 = arith.addf %444, %445 : vector<16x1xf32>
    %447 = math.rsqrt %446 : vector<16x1xf32>
    %448 = vector.broadcast %447 : vector<16x1xf32> to vector<16x128xf32>
    %449 = arith.mulf %439, %448 : vector<16x128xf32>
    %450 = vector.broadcast %431 : vector<1x128xf32> to vector<16x128xf32>
    %451 = arith.mulf %449, %450 : vector<16x128xf32>
    %452 = vector.broadcast %433 : vector<1x128xf32> to vector<16x128xf32>
    %453 = arith.addf %451, %452 : vector<16x128xf32>
    %c1_255 = arith.constant 1 : index
    %c0_256 = arith.constant 0 : index
    %c0_257 = arith.constant 0 : index
    %454 = vector.load %arg7[%c1_255, %c0_256, %c0_257] : memref<2x128x256xbf16, #tpu.memory_space<vmem>>, vector<1x128x256xbf16>
    %455 = vector.shape_cast %454 : vector<1x128x256xbf16> to vector<128x256xbf16>
    %c1_258 = arith.constant 1 : index
    %c0_259 = arith.constant 0 : index
    %c0_260 = arith.constant 0 : index
    %456 = vector.load %arg8[%c1_258, %c0_259, %c0_260] : memref<2x1x256xf32, #tpu.memory_space<vmem>>, vector<1x1x256xf32>
    %457 = vector.shape_cast %456 : vector<1x1x256xf32> to vector<1x256xf32>
    %458 = arith.truncf %453 : vector<16x128xf32> to vector<16x128xbf16>
    %cst_261 = arith.constant dense<0.000000e+00> : vector<16x256xf32>
    %459 = tpu.matmul %458, %455, %cst_261 {dimension_numbers = #tpu.dot_dimension_numbers<[1], [0], [0], [1], [0, 0, 1, 1], [], []>} : vector<16x128xbf16>, vector<128x256xbf16>, vector<16x256xf32> -> vector<16x256xf32>
    %460 = vector.broadcast %457 : vector<1x256xf32> to vector<16x256xf32>
    %461 = arith.addf %459, %460 : vector<16x256xf32>
    %cst_262 = arith.constant 5.000000e-01 : f32
    %462 = vector.broadcast %cst_262 : f32 to vector<16x256xf32>
    %463 = arith.mulf %462, %461 : vector<16x256xf32>
    %cst_263 = arith.constant 4.471500e-02 : f32
    %464 = vector.broadcast %cst_263 : f32 to vector<16x256xf32>
    %465 = arith.mulf %464, %461 : vector<16x256xf32>
    %466 = arith.mulf %465, %461 : vector<16x256xf32>
    %467 = arith.mulf %466, %461 : vector<16x256xf32>
    %468 = arith.addf %461, %467 : vector<16x256xf32>
    %cst_264 = arith.constant 0.797884583 : f32
    %469 = vector.broadcast %cst_264 : f32 to vector<16x256xf32>
    %470 = arith.mulf %469, %468 : vector<16x256xf32>
    %471 = math.tanh %470 : vector<16x256xf32>
    %cst_265 = arith.constant 1.000000e+00 : f32
    %472 = vector.broadcast %cst_265 : f32 to vector<16x256xf32>
    %473 = arith.addf %472, %471 : vector<16x256xf32>
    %474 = arith.mulf %463, %473 : vector<16x256xf32>
    %c1_266 = arith.constant 1 : index
    %c0_267 = arith.constant 0 : index
    %c0_268 = arith.constant 0 : index
    %475 = vector.load %arg9[%c1_266, %c0_267, %c0_268] : memref<2x256x128xbf16, #tpu.memory_space<vmem>>, vector<1x256x128xbf16>
    %476 = vector.shape_cast %475 : vector<1x256x128xbf16> to vector<256x128xbf16>
    %c1_269 = arith.constant 1 : index
    %c3_270 = arith.constant 3 : index
    %c0_271 = arith.constant 0 : index
    %477 = vector.load %arg10[%c1_269, %c3_270, %c0_271] : memref<2x6x128xf32, #tpu.memory_space<vmem>>, vector<1x1x128xf32>
    %478 = vector.shape_cast %477 : vector<1x1x128xf32> to vector<1x128xf32>
    %479 = arith.truncf %474 : vector<16x256xf32> to vector<16x256xbf16>
    %cst_272 = arith.constant dense<0.000000e+00> : vector<16x128xf32>
    %480 = tpu.matmul %479, %476, %cst_272 {dimension_numbers = #tpu.dot_dimension_numbers<[1], [0], [0], [1], [0, 0, 1, 1], [], []>} : vector<16x256xbf16>, vector<256x128xbf16>, vector<16x128xf32> -> vector<16x128xf32>
    %481 = vector.broadcast %478 : vector<1x128xf32> to vector<16x128xf32>
    %482 = arith.addf %480, %481 : vector<16x128xf32>
    %483 = arith.addf %482, %453 : vector<16x128xf32>
    %c1_273 = arith.constant 1 : index
    %c4_274 = arith.constant 4 : index
    %c0_275 = arith.constant 0 : index
    %484 = vector.load %arg10[%c1_273, %c4_274, %c0_275] : memref<2x6x128xf32, #tpu.memory_space<vmem>>, vector<1x1x128xf32>
    %485 = vector.shape_cast %484 : vector<1x1x128xf32> to vector<1x128xf32>
    %c1_276 = arith.constant 1 : index
    %c5_277 = arith.constant 5 : index
    %c0_278 = arith.constant 0 : index
    %486 = vector.load %arg10[%c1_276, %c5_277, %c0_278] : memref<2x6x128xf32, #tpu.memory_space<vmem>>, vector<1x1x128xf32>
    %487 = vector.shape_cast %486 : vector<1x1x128xf32> to vector<1x128xf32>
    %cst_279 = arith.constant dense<0.000000e+00> : vector<16xf32>
    %488 = vector.multi_reduction <add>, %483, %cst_279 [1] : vector<16x128xf32> to vector<16xf32>
    %489 = vector.shape_cast %488 : vector<16xf32> to vector<16x1xf32>
    %cst_280 = arith.constant 1.280000e+02 : f32
    %490 = vector.broadcast %cst_280 : f32 to vector<16x1xf32>
    %491 = arith.divf %489, %490 : vector<16x1xf32>
    %492 = vector.broadcast %491 : vector<16x1xf32> to vector<16x128xf32>
    %493 = arith.subf %483, %492 : vector<16x128xf32>
    %494 = arith.mulf %493, %493 : vector<16x128xf32>
    %cst_281 = arith.constant dense<0.000000e+00> : vector<16xf32>
    %495 = vector.multi_reduction <add>, %494, %cst_281 [1] : vector<16x128xf32> to vector<16xf32>
    %496 = vector.shape_cast %495 : vector<16xf32> to vector<16x1xf32>
    %cst_282 = arith.constant 1.280000e+02 : f32
    %497 = vector.broadcast %cst_282 : f32 to vector<16x1xf32>
    %498 = arith.divf %496, %497 : vector<16x1xf32>
    %cst_283 = arith.constant 9.99999996E-13 : f32
    %499 = vector.broadcast %cst_283 : f32 to vector<16x1xf32>
    %500 = arith.addf %498, %499 : vector<16x1xf32>
    %501 = math.rsqrt %500 : vector<16x1xf32>
    %502 = vector.broadcast %501 : vector<16x1xf32> to vector<16x128xf32>
    %503 = arith.mulf %493, %502 : vector<16x128xf32>
    %504 = vector.broadcast %485 : vector<1x128xf32> to vector<16x128xf32>
    %505 = arith.mulf %503, %504 : vector<16x128xf32>
    %506 = vector.broadcast %487 : vector<1x128xf32> to vector<16x128xf32>
    %507 = arith.addf %505, %506 : vector<16x128xf32>
    %c0_284 = arith.constant 0 : index
    %c0_285 = arith.constant 0 : index
    %508 = vector.load %arg11[%c0_284, %c0_285] : memref<128x128xbf16, #tpu.memory_space<vmem>>, vector<128x128xbf16>
    %c0_286 = arith.constant 0 : index
    %c0_287 = arith.constant 0 : index
    %509 = vector.load %arg12[%c0_286, %c0_287] : memref<1x128xf32, #tpu.memory_space<vmem>>, vector<1x128xf32>
    %510 = arith.truncf %507 : vector<16x128xf32> to vector<16x128xbf16>
    %cst_288 = arith.constant dense<0.000000e+00> : vector<16x128xf32>
    %511 = tpu.matmul %510, %508, %cst_288 {dimension_numbers = #tpu.dot_dimension_numbers<[1], [0], [0], [1], [0, 0, 1, 1], [], []>} : vector<16x128xbf16>, vector<128x128xbf16>, vector<16x128xf32> -> vector<16x128xf32>
    %512 = vector.broadcast %509 : vector<1x128xf32> to vector<16x128xf32>
    %513 = arith.addf %511, %512 : vector<16x128xf32>
    %c0_289 = arith.constant 0 : index
    %c0_290 = arith.constant 0 : index
    %c0_291 = arith.constant 0 : index
    %514 = vector.load %arg13[%c0_289, %c0_290, %c0_291] : memref<1x16x128xf32, #tpu.memory_space<vmem>>, vector<1x16x128xf32>
    %515 = vector.shape_cast %514 : vector<1x16x128xf32> to vector<16x128xf32>
    %516 = vector.shape_cast %513 : vector<16x128xf32> to vector<1x16x128xf32>
    tpu.vector_store %arg13[%c0_289, %c0_290, %c0_291], %516 {strides = array<i32>} : memref<1x16x128xf32, #tpu.memory_space<vmem>>, vector<1x16x128xf32>,
    return
  }
  func.func @transform_0(%arg0: i32) -> (i32, i32, i32) {
    %c0_i32 = arith.constant 0 : i32
    %c0_i32_0 = arith.constant 0 : i32
    %c0_i32_1 = arith.constant 0 : i32
    return %arg0, %c0_i32, %c0_i32_0 : i32, i32, i32
  }
  func.func @transform_1(%arg0: i32) -> (i32, i32, i32) {
    %c0_i32 = arith.constant 0 : i32
    %c0_i32_0 = arith.constant 0 : i32
    %c0_i32_1 = arith.constant 0 : i32
    return %arg0, %c0_i32, %c0_i32_0 : i32, i32, i32
  }
  func.func @transform_2(%arg0: i32) -> (i32, i32) {
    %c0_i32 = arith.constant 0 : i32
    %c0_i32_0 = arith.constant 0 : i32
    %c0_i32_1 = arith.constant 0 : i32
    return %c0_i32, %c0_i32_0 : i32, i32
  }
  func.func @transform_3(%arg0: i32) -> (i32, i32, i32) {
    %c0_i32 = arith.constant 0 : i32
    %c0_i32_0 = arith.constant 0 : i32
    %c0_i32_1 = arith.constant 0 : i32
    %c0_i32_2 = arith.constant 0 : i32
    return %c0_i32, %c0_i32_0, %c0_i32_1 : i32, i32, i32
  }
  func.func @transform_4(%arg0: i32) -> (i32, i32, i32) {
    %c0_i32 = arith.constant 0 : i32
    %c0_i32_0 = arith.constant 0 : i32
    %c0_i32_1 = arith.constant 0 : i32
    %c0_i32_2 = arith.constant 0 : i32
    return %c0_i32, %c0_i32_0, %c0_i32_1 : i32, i32, i32
  }
  func.func @transform_5(%arg0: i32) -> (i32, i32, i32) {
    %c0_i32 = arith.constant 0 : i32
    %c0_i32_0 = arith.constant 0 : i32
    %c0_i32_1 = arith.constant 0 : i32
    %c0_i32_2 = arith.constant 0 : i32
    return %c0_i32, %c0_i32_0, %c0_i32_1 : i32, i32, i32
  }
  func.func @transform_6(%arg0: i32) -> (i32, i32, i32) {
    %c0_i32 = arith.constant 0 : i32
    %c0_i32_0 = arith.constant 0 : i32
    %c0_i32_1 = arith.constant 0 : i32
    %c0_i32_2 = arith.constant 0 : i32
    return %c0_i32, %c0_i32_0, %c0_i32_1 : i32, i32, i32
  }
  func.func @transform_7(%arg0: i32) -> (i32, i32, i32) {
    %c0_i32 = arith.constant 0 : i32
    %c0_i32_0 = arith.constant 0 : i32
    %c0_i32_1 = arith.constant 0 : i32
    %c0_i32_2 = arith.constant 0 : i32
    return %c0_i32, %c0_i32_0, %c0_i32_1 : i32, i32, i32
  }
  func.func @transform_8(%arg0: i32) -> (i32, i32, i32) {
    %c0_i32 = arith.constant 0 : i32
    %c0_i32_0 = arith.constant 0 : i32
    %c0_i32_1 = arith.constant 0 : i32
    %c0_i32_2 = arith.constant 0 : i32
    return %c0_i32, %c0_i32_0, %c0_i32_1 : i32, i32, i32
  }
  func.func @transform_9(%arg0: i32) -> (i32, i32, i32) {
    %c0_i32 = arith.constant 0 : i32
    %c0_i32_0 = arith.constant 0 : i32
    %c0_i32_1 = arith.constant 0 : i32
    %c0_i32_2 = arith.constant 0 : i32
    return %c0_i32, %c0_i32_0, %c0_i32_1 : i32, i32, i32
  }
  func.func @transform_10(%arg0: i32) -> (i32, i32) {
    %c0_i32 = arith.constant 0 : i32
    %c0_i32_0 = arith.constant 0 : i32
    %c0_i32_1 = arith.constant 0 : i32
    return %c0_i32, %c0_i32_0 : i32, i32
  }
  func.func @transform_11(%arg0: i32) -> (i32, i32) {
    %c0_i32 = arith.constant 0 : i32
    %c0_i32_0 = arith.constant 0 : i32
    %c0_i32_1 = arith.constant 0 : i32
    return %c0_i32, %c0_i32_0 : i32, i32
  }
  func.func @transform_12(%arg0: i32) -> (i32, i32, i32) {
    %c0_i32 = arith.constant 0 : i32
    %c0_i32_0 = arith.constant 0 : i32
    %c0_i32_1 = arith.constant 0 : i32
    return %arg0, %c0_i32, %c0_i32_0 : i32, i32, i32
  }
}

</mosaic_0001>

<llo_original>
// kernel: bert_for_token_classification.1
$region0: #{bert_for_token_classification.1}
  #allocation0 [shape = 'u32[]', space=smem, size = 0x4, offset = 0x4, fixed_abs, tag = 'smem constant byte address 0x4 - core index']
  #allocation1 [shape = 'u32[144,128]{1,0:T(1,128)}', space=vmem, size = 0x12000, scoped, tag = 'internal scratch']
  %s0 = inlined_call_operand.vmem [shape: f32[2,16,128], index: 0, kind: input, shape index: {}]
  %s1 = inlined_call_operand.vmem [shape: f32[2,16,16], index: 1, kind: input, shape index: {}]
  %s2 = inlined_call_operand.vmem [shape: f32[2,128], index: 2, kind: input, shape index: {}]
  %s3 = inlined_call_operand.vmem [shape: bf16[24,32,128], index: 3, kind: input, shape index: {}]
  %s4 = inlined_call_operand.vmem [shape: f32[24,1,32], index: 4, kind: input, shape index: {}]
  %s5 = inlined_call_operand.hbm [shape: bf16[2,128,128], index: 5, kind: input, shape index: {}]
  %s6 = inlined_call_operand.vmem [shape: bf16[2,128,256], index: 6, kind: input, shape index: {}]
  %s7 = inlined_call_operand.vmem [shape: f32[2,1,256], index: 7, kind: input, shape index: {}]
  %s8 = inlined_call_operand.vmem [shape: bf16[2,256,128], index: 8, kind: input, shape index: {}]
  %s9 = inlined_call_operand.vmem [shape: f32[2,6,128], index: 9, kind: input, shape index: {}]
  %s10 = inlined_call_operand.vmem [shape: bf16[128,128], index: 10, kind: input, shape index: {}]
  %s11 = inlined_call_operand.vmem [shape: f32[1,128], index: 11, kind: input, shape index: {}]
  %s12 = inlined_call_operand.vmem [shape: f32[2,16,128], index: 12, kind: output, shape index: {}]
  %s13 = sld [smem:[#allocation0]]
  $region85: #{bert_for_token_classification.1} parent=0
    _
  %s15 = ssub.s32 1, %s13
  %s16 = scalar_select 0, %s15, %s13
  $region1: #{bert_for_token_classification.1} parent=0
    #allocation2 [shape = 'u8[65536]{0}', space=vmem, size = 0x10000, scoped, tag = 'input window, operand 5, single buffered']
    #allocation3 [shape = 's32[2]{0}', space=sflag, size = 0x8, scoped, tag = 'scoped memory for bert_for_token_classification.1']
    %17 = vsyncpa [#allocation3], 0
    loop: start=0, step=1, limit=4
    $region2: #{bert_for_token_classification.1} parent=1 // loop_pre_header
      _
    $region3: #{bert_for_token_classification.1} parent=1 // loop_header
      %s19 = sphi 0, %s23
      %p20 = scmp.ge.s32.totalorder %s19, 4
      %s29 = sphi 0, %s31
      %s32 = sphi 0, %s29
      %s33 = sphi 0, %s32
      %s49 = sphi 0, %s33
      %s55 = sphi 0, %s57
      %s58 = sphi 0, %s55
      %s59 = sphi 0, %s58
      %s75 = sphi 0, %s59
      %s79 = sphi 0, %s79
      %s81 = sphi 0, %s79
      %s82 = sphi 0, %s81
      %s96 = sphi 0, %s82
      %s100 = sphi 0, %s100
      %s102 = sphi 0, %s100
      %s103 = sphi 0, %s102
      %s117 = sphi 0, %s103
      %s121 = sphi 0, %s121
      %s123 = sphi 0, %s121
      %s124 = sphi 0, %s123
      %s138 = sphi 0, %s124
      %s142 = sphi 0, %s142
      %s144 = sphi 0, %s142
      %s145 = sphi 0, %s144
      %s159 = sphi 0, %s145
      %s163 = sphi 0, %s163
      %s165 = sphi 0, %s163
      %s166 = sphi 0, %s165
      %s180 = sphi 0, %s166
      %s184 = sphi 0, %s184
      %s186 = sphi 0, %s184
      %s187 = sphi 0, %s186
      %s201 = sphi 0, %s187
      %s205 = sphi 0, %s205
      %s207 = sphi 0, %s205
      %s208 = sphi 0, %s207
      %s222 = sphi 0, %s208
      %s226 = sphi 0, %s226
      %s228 = sphi 0, %s226
      %s229 = sphi 0, %s228
      %s243 = sphi 0, %s229
      %s247 = sphi 0, %s247
      %s249 = sphi 0, %s247
      %s250 = sphi 0, %s249
      %s264 = sphi 0, %s250
      %s268 = sphi 0, %s268
      %s270 = sphi 0, %s268
      %s271 = sphi 0, %s270
      %s285 = sphi 0, %s271
      %s291 = sphi 0, %s293
      %s294 = sphi 0, %s291
      %s295 = sphi 0, %s294
      %s311 = sphi 0, %s295
    $region4: #{bert_for_token_classification.1} parent=1 // loop_header_branch
      %22 = sbr.rel (%p20) target = $region8
    $region5: #{bert_for_token_classification.1} parent=1 // loop_body
      %s24 = ssub.s32 %s19, 1
      %s25 = ssub.s32 %s19, 2
      %s26 = sadd.s32 %s19, 1
      %s27 = ssub.s32 %s19, %s26
      %p28 = scmp.eq.s32.totalorder %s27, 0
      %s30 = sadd.s32 %s29, 1
      %s31 = scalar_select %p28, %s29, %s30
      %p34 = pneg %p28
      %p35 = scmp.eq.s32.totalorder %s19, 1
      %p36 = por %p34, %p35
      %p37 = scmp.ne.s32.totalorder %s29, %s32
      %p38 = scmp.eq.s32.totalorder %s19, 0
      %p39 = por %p37, %p38
      %p40 = scmp.ne.s32.totalorder %s29, %s32
      %p41 = scmp.eq.s32.totalorder %s24, 1
      %p42 = por %p40, %p41
      %p43 = scmp.ne.s32.totalorder %s32, %s33
      %p44 = scmp.eq.s32.totalorder %s24, 0
      %p45 = por %p43, %p44
      %p46 = scmp.ne.s32.totalorder %s32, %s33
      %p47 = scmp.eq.s32.totalorder %s25, 1
      %p48 = por %p46, %p47
      %p50 = scmp.ne.s32.totalorder %s33, %s49
      %p51 = scmp.eq.s32.totalorder %s25, 0
      %p52 = por %p50, %p51
      %s53 = ssub.s32 %s19, %s26
      %p54 = scmp.eq.s32.totalorder %s53, 0
      %s56 = sadd.s32 %s55, 1
      %s57 = scalar_select %p54, %s55, %s56
      %p60 = pneg %p54
      %p61 = scmp.eq.s32.totalorder %s19, 1
      %p62 = por %p60, %p61
      %p63 = scmp.ne.s32.totalorder %s55, %s58
      %p64 = scmp.eq.s32.totalorder %s19, 0
      %p65 = por %p63, %p64
      %p66 = scmp.ne.s32.totalorder %s55, %s58
      %p67 = scmp.eq.s32.totalorder %s24, 1
      %p68 = por %p66, %p67
      %p69 = scmp.ne.s32.totalorder %s58, %s59
      %p70 = scmp.eq.s32.totalorder %s24, 0
      %p71 = por %p69, %p70
      %p72 = scmp.ne.s32.totalorder %s58, %s59
      %p73 = scmp.eq.s32.totalorder %s25, 1
      %p74 = por %p72, %p73
      %p76 = scmp.ne.s32.totalorder %s59, %s75
      %p77 = scmp.eq.s32.totalorder %s25, 0
      %p78 = por %p76, %p77
      %s80 = sadd.s32 %s79, 1
      %p83 = scmp.eq.s32.totalorder %s19, 1
      %p84 = scmp.ne.s32.totalorder %s79, %s81
      %p85 = scmp.eq.s32.totalorder %s19, 0
      %p86 = por %p84, %p85
      %p87 = scmp.ne.s32.totalorder %s79, %s81
      %p88 = scmp.eq.s32.totalorder %s24, 1
      %p89 = por %p87, %p88
      %p90 = scmp.ne.s32.totalorder %s81, %s82
      %p91 = scmp.eq.s32.totalorder %s24, 0
      %p92 = por %p90, %p91
      %p93 = scmp.ne.s32.totalorder %s81, %s82
      %p94 = scmp.eq.s32.totalorder %s25, 1
      %p95 = por %p93, %p94
      %p97 = scmp.ne.s32.totalorder %s82, %s96
      %p98 = scmp.eq.s32.totalorder %s25, 0
      %p99 = por %p97, %p98
      %s101 = sadd.s32 %s100, 1
      %p104 = scmp.eq.s32.totalorder %s19, 1
      %p105 = scmp.ne.s32.totalorder %s100, %s102
      %p106 = scmp.eq.s32.totalorder %s19, 0
      %p107 = por %p105, %p106
      %p108 = scmp.ne.s32.totalorder %s100, %s102
      %p109 = scmp.eq.s32.totalorder %s24, 1
      %p110 = por %p108, %p109
      %p111 = scmp.ne.s32.totalorder %s102, %s103
      %p112 = scmp.eq.s32.totalorder %s24, 0
      %p113 = por %p111, %p112
      %p114 = scmp.ne.s32.totalorder %s102, %s103
      %p115 = scmp.eq.s32.totalorder %s25, 1
      %p116 = por %p114, %p115
      %p118 = scmp.ne.s32.totalorder %s103, %s117
      %p119 = scmp.eq.s32.totalorder %s25, 0
      %p120 = por %p118, %p119
      %s122 = sadd.s32 %s121, 1
      %p125 = scmp.eq.s32.totalorder %s19, 1
      %p126 = scmp.ne.s32.totalorder %s121, %s123
      %p127 = scmp.eq.s32.totalorder %s19, 0
      %p128 = por %p126, %p127
      %p129 = scmp.ne.s32.totalorder %s121, %s123
      %p130 = scmp.eq.s32.totalorder %s24, 1
      %p131 = por %p129, %p130
      %p132 = scmp.ne.s32.totalorder %s123, %s124
      %p133 = scmp.eq.s32.totalorder %s24, 0
      %p134 = por %p132, %p133
      %p135 = scmp.ne.s32.totalorder %s123, %s124
      %p136 = scmp.eq.s32.totalorder %s25, 1
      %p137 = por %p135, %p136
      %p139 = scmp.ne.s32.totalorder %s124, %s138
      %p140 = scmp.eq.s32.totalorder %s25, 0
      %p141 = por %p139, %p140
      %s143 = sadd.s32 %s142, 1
      %p146 = scmp.eq.s32.totalorder %s19, 1
      %p147 = scmp.ne.s32.totalorder %s142, %s144
      %p148 = scmp.eq.s32.totalorder %s19, 0
      %p149 = por %p147, %p148
      %p150 = scmp.ne.s32.totalorder %s142, %s144
      %p151 = scmp.eq.s32.totalorder %s24, 1
      %p152 = por %p150, %p151
      %p153 = scmp.ne.s32.totalorder %s144, %s145
      %p154 = scmp.eq.s32.totalorder %s24, 0
      %p155 = por %p153, %p154
      %p156 = scmp.ne.s32.totalorder %s144, %s145
      %p157 = scmp.eq.s32.totalorder %s25, 1
      %p158 = por %p156, %p157
      %p160 = scmp.ne.s32.totalorder %s145, %s159
      %p161 = scmp.eq.s32.totalorder %s25, 0
      %p162 = por %p160, %p161
      %s164 = sadd.s32 %s163, 1
      %p167 = scmp.eq.s32.totalorder %s19, 1
      %p168 = scmp.ne.s32.totalorder %s163, %s165
      %p169 = scmp.eq.s32.totalorder %s19, 0
      %p170 = por %p168, %p169
      %p171 = scmp.ne.s32.totalorder %s163, %s165
      %p172 = scmp.eq.s32.totalorder %s24, 1
      %p173 = por %p171, %p172
      %p174 = scmp.ne.s32.totalorder %s165, %s166
      %p175 = scmp.eq.s32.totalorder %s24, 0
      %p176 = por %p174, %p175
      %p177 = scmp.ne.s32.totalorder %s165, %s166
      %p178 = scmp.eq.s32.totalorder %s25, 1
      %p179 = por %p177, %p178
      %p181 = scmp.ne.s32.totalorder %s166, %s180
      %p182 = scmp.eq.s32.totalorder %s25, 0
      %p183 = por %p181, %p182
      %s185 = sadd.s32 %s184, 1
      %p188 = scmp.eq.s32.totalorder %s19, 1
      %p189 = scmp.ne.s32.totalorder %s184, %s186
      %p190 = scmp.eq.s32.totalorder %s19, 0
      %p191 = por %p189, %p190
      %p192 = scmp.ne.s32.totalorder %s184, %s186
      %p193 = scmp.eq.s32.totalorder %s24, 1
      %p194 = por %p192, %p193
      %p195 = scmp.ne.s32.totalorder %s186, %s187
      %p196 = scmp.eq.s32.totalorder %s24, 0
      %p197 = por %p195, %p196
      %p198 = scmp.ne.s32.totalorder %s186, %s187
      %p199 = scmp.eq.s32.totalorder %s25, 1
      %p200 = por %p198, %p199
      %p202 = scmp.ne.s32.totalorder %s187, %s201
      %p203 = scmp.eq.s32.totalorder %s25, 0
      %p204 = por %p202, %p203
      %s206 = sadd.s32 %s205, 1
      %p209 = scmp.eq.s32.totalorder %s19, 1
      %p210 = scmp.ne.s32.totalorder %s205, %s207
      %p211 = scmp.eq.s32.totalorder %s19, 0
      %p212 = por %p210, %p211
      %p213 = scmp.ne.s32.totalorder %s205, %s207
      %p214 = scmp.eq.s32.totalorder %s24, 1
      %p215 = por %p213, %p214
      %p216 = scmp.ne.s32.totalorder %s207, %s208
      %p217 = scmp.eq.s32.totalorder %s24, 0
      %p218 = por %p216, %p217
      %p219 = scmp.ne.s32.totalorder %s207, %s208
      %p220 = scmp.eq.s32.totalorder %s25, 1
      %p221 = por %p219, %p220
      %p223 = scmp.ne.s32.totalorder %s208, %s222
      %p224 = scmp.eq.s32.totalorder %s25, 0
      %p225 = por %p223, %p224
      %s227 = sadd.s32 %s226, 1
      %p230 = scmp.eq.s32.totalorder %s19, 1
      %p231 = scmp.ne.s32.totalorder %s226, %s228
      %p232 = scmp.eq.s32.totalorder %s19, 0
      %p233 = por %p231, %p232
      %p234 = scmp.ne.s32.totalorder %s226, %s228
      %p235 = scmp.eq.s32.totalorder %s24, 1
      %p236 = por %p234, %p235
      %p237 = scmp.ne.s32.totalorder %s228, %s229
      %p238 = scmp.eq.s32.totalorder %s24, 0
      %p239 = por %p237, %p238
      %p240 = scmp.ne.s32.totalorder %s228, %s229
      %p241 = scmp.eq.s32.totalorder %s25, 1
      %p242 = por %p240, %p241
      %p244 = scmp.ne.s32.totalorder %s229, %s243
      %p245 = scmp.eq.s32.totalorder %s25, 0
      %p246 = por %p244, %p245
      %s248 = sadd.s32 %s247, 1
      %p251 = scmp.eq.s32.totalorder %s19, 1
      %p252 = scmp.ne.s32.totalorder %s247, %s249
      %p253 = scmp.eq.s32.totalorder %s19, 0
      %p254 = por %p252, %p253
      %p255 = scmp.ne.s32.totalorder %s247, %s249
      %p256 = scmp.eq.s32.totalorder %s24, 1
      %p257 = por %p255, %p256
      %p258 = scmp.ne.s32.totalorder %s249, %s250
      %p259 = scmp.eq.s32.totalorder %s24, 0
      %p260 = por %p258, %p259
      %p261 = scmp.ne.s32.totalorder %s249, %s250
      %p262 = scmp.eq.s32.totalorder %s25, 1
      %p263 = por %p261, %p262
      %p265 = scmp.ne.s32.totalorder %s250, %s264
      %p266 = scmp.eq.s32.totalorder %s25, 0
      %p267 = por %p265, %p266
      %s269 = sadd.s32 %s268, 1
      %p272 = scmp.eq.s32.totalorder %s19, 1
      %p273 = scmp.ne.s32.totalorder %s268, %s270
      %p274 = scmp.eq.s32.totalorder %s19, 0
      %p275 = por %p273, %p274
      %p276 = scmp.ne.s32.totalorder %s268, %s270
      %p277 = scmp.eq.s32.totalorder %s24, 1
      %p278 = por %p276, %p277
      %p279 = scmp.ne.s32.totalorder %s270, %s271
      %p280 = scmp.eq.s32.totalorder %s24, 0
      %p281 = por %p279, %p280
      %p282 = scmp.ne.s32.totalorder %s270, %s271
      %p283 = scmp.eq.s32.totalorder %s25, 1
      %p284 = por %p282, %p283
      %p286 = scmp.ne.s32.totalorder %s271, %s285
      %p287 = scmp.eq.s32.totalorder %s25, 0
      %p288 = por %p286, %p287
      %s289 = ssub.s32 %s19, %s26
      %p290 = scmp.eq.s32.totalorder %s289, 0
      %s292 = sadd.s32 %s291, 1
      %s293 = scalar_select %p290, %s291, %s292
      %p296 = pneg %p290
      %p297 = scmp.eq.s32.totalorder %s19, 1
      %p298 = por %p296, %p297
      %p299 = scmp.ne.s32.totalorder %s291, %s294
      %p300 = scmp.eq.s32.totalorder %s19, 0
      %p301 = por %p299, %p300
      %p302 = scmp.ne.s32.totalorder %s291, %s294
      %p303 = scmp.eq.s32.totalorder %s24, 1
      %p304 = por %p302, %p303
      %p305 = scmp.ne.s32.totalorder %s294, %s295
      %p306 = scmp.eq.s32.totalorder %s24, 0
      %p307 = por %p305, %p306
      %p308 = scmp.ne.s32.totalorder %s294, %s295
      %p309 = scmp.eq.s32.totalorder %s25, 1
      %p310 = por %p308, %p309
      %p312 = scmp.ne.s32.totalorder %s295, %s311
      %p313 = scmp.eq.s32.totalorder %s25, 0
      %p314 = por %p312, %p313
      %p315 = scmp.le.s32.totalorder 1, %s19
      %p316 = scmp.lt.s32.totalorder %s19, 3
      %p317 = pnand %p315, %p316
      %p318 = pneg %p317
      // Predicated region
      $region9: #{bert_for_token_classification.1} parent=5 // pred_check
        _
      $region10: #{bert_for_token_classification.1} parent=5 // pred_check_branch
        %320 = sbr.rel (%p317) target = $region12
      $region11: #{bert_for_token_classification.1} parent=5 // pred_region
        %s321 = ssub.s32 %s19, 1
        // Predicated region
        $region13: #{bert_for_token_classification.1} parent=11 // pred_check
          %p322 = pneg %p92
        $region14: #{bert_for_token_classification.1} parent=11 // pred_check_branch
          %324 = sbr.rel (%p322) target = $region16
        $region15: #{bert_for_token_classification.1} parent=11 // pred_region
          _
        $region16: #{bert_for_token_classification.1} parent=11 // pred_fallthru
          _
        // Predicated region
        $region17: #{bert_for_token_classification.1} parent=11 // pred_check
          %p325 = pneg %p113
        $region18: #{bert_for_token_classification.1} parent=11 // pred_check_branch
          %327 = sbr.rel (%p325) target = $region20
        $region19: #{bert_for_token_classification.1} parent=11 // pred_region
          _
        $region20: #{bert_for_token_classification.1} parent=11 // pred_fallthru
          _
        // Predicated region
        $region21: #{bert_for_token_classification.1} parent=11 // pred_check
          %p328 = pneg %p134
        $region22: #{bert_for_token_classification.1} parent=11 // pred_check_branch
          %330 = sbr.rel (%p328) target = $region24
        $region23: #{bert_for_token_classification.1} parent=11 // pred_region
          _
        $region24: #{bert_for_token_classification.1} parent=11 // pred_fallthru
          _
        // Predicated region
        $region25: #{bert_for_token_classification.1} parent=11 // pred_check
          %p331 = pneg %p155
        $region26: #{bert_for_token_classification.1} parent=11 // pred_check_branch
          %333 = sbr.rel (%p331) target = $region28
        $region27: #{bert_for_token_classification.1} parent=11 // pred_region
          %s335 = ssub.s32 2048, 2048
          %336 = vsyncadd [#allocation3], %s335
          %s337 = sshll.u32 [#allocation2], 4
          %s338 = int_to_ptr.vmem [resolvable:$true] %s337
          %343 = dma.hbm_to_vmem [thread:$0]  %s5, 2048, %s338, [#allocation3], 64, 64, 4
        $region28: #{bert_for_token_classification.1} parent=11 // pred_fallthru
          _
        // Predicated region
        $region29: #{bert_for_token_classification.1} parent=11 // pred_check
          %p344 = pneg %p176
        $region30: #{bert_for_token_classification.1} parent=11 // pred_check_branch
          %346 = sbr.rel (%p344) target = $region32
        $region31: #{bert_for_token_classification.1} parent=11 // pred_region
          _
        $region32: #{bert_for_token_classification.1} parent=11 // pred_fallthru
          _
        // Predicated region
        $region33: #{bert_for_token_classification.1} parent=11 // pred_check
          %p347 = pneg %p197
        $region34: #{bert_for_token_classification.1} parent=11 // pred_check_branch
          %349 = sbr.rel (%p347) target = $region36
        $region35: #{bert_for_token_classification.1} parent=11 // pred_region
          _
        $region36: #{bert_for_token_classification.1} parent=11 // pred_fallthru
          _
        // Predicated region
        $region37: #{bert_for_token_classification.1} parent=11 // pred_check
          %p350 = pneg %p218
        $region38: #{bert_for_token_classification.1} parent=11 // pred_check_branch
          %352 = sbr.rel (%p350) target = $region40
        $region39: #{bert_for_token_classification.1} parent=11 // pred_region
          _
        $region40: #{bert_for_token_classification.1} parent=11 // pred_fallthru
          _
        // Predicated region
        $region41: #{bert_for_token_classification.1} parent=11 // pred_check
          %p353 = pneg %p239
        $region42: #{bert_for_token_classification.1} parent=11 // pred_check_branch
          %355 = sbr.rel (%p353) target = $region44
        $region43: #{bert_for_token_classification.1} parent=11 // pred_region
          _
        $region44: #{bert_for_token_classification.1} parent=11 // pred_fallthru
          _
        // Predicated region
        $region45: #{bert_for_token_classification.1} parent=11 // pred_check
          %p356 = pneg %p260
        $region46: #{bert_for_token_classification.1} parent=11 // pred_check_branch
          %358 = sbr.rel (%p356) target = $region48
        $region47: #{bert_for_token_classification.1} parent=11 // pred_region
          _
        $region48: #{bert_for_token_classification.1} parent=11 // pred_fallthru
          _
        // Predicated region
        $region49: #{bert_for_token_classification.1} parent=11 // pred_check
          %p359 = pneg %p281
        $region50: #{bert_for_token_classification.1} parent=11 // pred_check_branch
          %361 = sbr.rel (%p359) target = $region52
        $region51: #{bert_for_token_classification.1} parent=11 // pred_region
          _
        $region52: #{bert_for_token_classification.1} parent=11 // pred_fallthru
          _
      $region12: #{bert_for_token_classification.1} parent=5 // pred_fallthru
        _
      %p362 = scmp.lt.s32.totalorder %s19, 2
      // Predicated region
      $region53: #{bert_for_token_classification.1} parent=5 // pred_check
        %p363 = pneg %p362
      $region54: #{bert_for_token_classification.1} parent=5 // pred_check_branch
        %365 = sbr.rel (%p363) target = $region56
      $region55: #{bert_for_token_classification.1} parent=5 // pred_region
        // Predicated region
        $region57: #{bert_for_token_classification.1} parent=55 // pred_check
          %p366 = pneg %p39
        $region58: #{bert_for_token_classification.1} parent=55 // pred_check_branch
          %368 = sbr.rel (%p366) target = $region60
        $region59: #{bert_for_token_classification.1} parent=55 // pred_region
          %p369 = scmp.lt.s32.totalorder %s19, 1
          %s370 = scalar_select %p369, %s19, 1
          %s371 = smul.addr %s370, 2
          %s372 = smul.addr %s371, 8
          %s373 = scalar_lea.vmem %s0, %s372
        $region60: #{bert_for_token_classification.1} parent=55 // pred_fallthru
          _
        // Predicated region
        $region61: #{bert_for_token_classification.1} parent=55 // pred_check
          %p374 = pneg %p65
        $region62: #{bert_for_token_classification.1} parent=55 // pred_check_branch
          %376 = sbr.rel (%p374) target = $region64
        $region63: #{bert_for_token_classification.1} parent=55 // pred_region
          %p377 = scmp.lt.s32.totalorder %s19, 1
          %s378 = scalar_select %p377, %s19, 1
          %s379 = smul.addr %s378, 2
          %s380 = smul.addr %s379, 8
          %s381 = scalar_lea.vmem %s1, %s380
        $region64: #{bert_for_token_classification.1} parent=55 // pred_fallthru
          _
      $region56: #{bert_for_token_classification.1} parent=5 // pred_fallthru
        _
      %p382 = scmp.le.s32.totalorder 1, %s19
      %p383 = scmp.lt.s32.totalorder %s19, 3
      %p384 = pnand %p382, %p383
      %p385 = pneg %p384
      // Predicated region
      $region65: #{bert_for_token_classification.1} parent=5 // pred_check
        _
      $region66: #{bert_for_token_classification.1} parent=5 // pred_check_branch
        %387 = sbr.rel (%p384) target = $region68
      $region67: #{bert_for_token_classification.1} parent=5 // pred_region
        %s388 = ssub.s32 %s19, 1
        // Predicated region
        $region69: #{bert_for_token_classification.1} parent=67 // pred_check
          %p389 = pneg %p155
        $region70: #{bert_for_token_classification.1} parent=67 // pred_check_branch
          %391 = sbr.rel (%p389) target = $region72
        $region71: #{bert_for_token_classification.1} parent=67 // pred_region
          %392 = dma.done [#allocation3], 2048
        $region72: #{bert_for_token_classification.1} parent=67 // pred_fallthru
          _
        %p393 = scmp.lt.s32.totalorder %s24, 1
        %s394 = scalar_select %p393, %s24, 1
        %s395 = smul.addr %s394, 2
        %s396 = smul.addr %s395, 8
        %s397 = scalar_lea.vmem %s0, %s396
        %p398 = pneg %p45
        %p399 = pneg %p42
        %p400 = scmp.lt.s32.totalorder %s24, 1
        %s401 = scalar_select %p400, %s24, 1
        %s402 = smul.addr %s401, 2
        %s403 = smul.addr %s402, 8
        %s404 = scalar_lea.vmem %s1, %s403
        %p405 = pneg %p71
        %p406 = pneg %p68
        %p407 = pneg %p92
        %p408 = pneg %p89
        %p409 = pneg %p113
        %p410 = pneg %p110
        %p411 = pneg %p134
        %p412 = pneg %p131
        %p413 = pneg %p155
        %p414 = pneg %p152
        %p415 = pneg %p176
        %p416 = pneg %p173
        %p417 = pneg %p197
        %p418 = pneg %p194
        %p419 = pneg %p218
        %p420 = pneg %p215
        %p421 = pneg %p239
        %p422 = pneg %p236
        %p423 = pneg %p260
        %p424 = pneg %p257
        %p425 = pneg %p281
        %p426 = pneg %p278
        %p427 = pneg %p307
        %p428 = pneg %p304
        %p429 = scmp.lt.s32.totalorder %s24, 1
        %s430 = scalar_select %p429, %s24, 1
        %s431 = smul.addr %s430, 2
        %s432 = smul.addr %s431, 8
        %s433 = scalar_lea.vmem %s12, %s432
        %p434 = scmp.lt.s32.totalorder %s24, 1
        %s435 = scalar_select %p434, %s24, 1
        %s436 = smul.addr %s435, 2
        %s437 = smul.addr %s436, 8
        %s438 = scalar_lea.vmem %s0, %s437
        %p439 = scmp.lt.s32.totalorder %s24, 1
        %s440 = scalar_select %p439, %s24, 1
        %s441 = smul.addr %s440, 2
        %s442 = smul.addr %s441, 8
        %s443 = scalar_lea.vmem %s1, %s442
        %p444 = scmp.lt.s32.totalorder %s24, 1
        %s445 = scalar_select %p444, %s24, 1
        %s446 = smul.addr %s445, 2
        %s447 = smul.addr %s446, 8
        %s448 = scalar_lea.vmem %s12, %s447
        %v450 = vld [vmem:[%s443] sm:$0xff]
        %v451 = vld [vmem:[%s443 + $0x8] sm:$0xff]
        %v452 = vld [vmem:[%s438] sm:$0xff]
        %v453 = vld [vmem:[%s438 + $0x8] sm:$0xff]
        %v454 = vld [vmem:[%s2] sm:$0x1]
        %v455 = vld [vmem:[%s2 + $0x1] sm:$0x1]
        %456 = vadd.xlane.f32.xlu0 %v452
        %v457 = vpop.xlane.xlu0 %456
        %458 = vadd.xlane.f32.xlu0 %v453
        %v459 = vpop.xlane.xlu0 %458
        %v460 = vrcp.pop 128.0
        %v461 = vmul.f32 %v457, %v460
        %v462 = vmul.f32 %v459, %v460
        %v463 = vsub.f32 %v452, %v461
        %v464 = vsub.f32 %v453, %v462
        %v465 = vmul.f32 %v463, %v463
        %v466 = vmul.f32 %v464, %v464
        %467 = vadd.xlane.f32.xlu0 %v465
        %v468 = vpop.xlane.xlu0 %467
        %469 = vadd.xlane.f32.xlu0 %v466
        %v470 = vpop.xlane.xlu0 %469
        %v471 = vmul.f32 %v468, %v460
        %v472 = vmul.f32 %v470, %v460
        %v473 = vadd.f32 %v471, 1e-12
        %v474 = vadd.f32 %v472, 1e-12
        %v475 = vrsqrt.pop %v473
        %v476 = vrsqrt.pop %v474
        %v477 = vmul.f32 %v463, %v475
        %v478 = vmul.f32 %v464, %v476
        %v479 = vlaneseq
        %v480 = vshrl.u32 %v479, 7
        %v481 = vsub.s32 0, %v480
        %v482 = vrot.slane %v454, %v481
        %v483 = vmul.f32 %v477, %v482
        %v484 = vmul.f32 %v478, %v482
        %v485 = vlaneseq
        %v486 = vshrl.u32 %v485, 7
        %v487 = vsub.s32 0, %v486
        %v488 = vrot.slane %v455, %v487
        %v489 = vadd.f32 %v483, %v488
        %v490 = vadd.f32 %v484, %v488
        %v491 = vpack.c.bf16 %v490, %v489
        %v492 = vld [vmem:[%s3] sm:$0xf]
        %v493 = vld [vmem:[%s3 + $0x4] sm:$0xf]
        %v494 = vld [vmem:[%s3 + $0x8] sm:$0xf]
        %v495 = vld [vmem:[%s3 + $0xc] sm:$0xf]
        %v496 = vld [vmem:[%s4] sm:$0x1]
        %v498 = vlaneseq
        %v499 = vshrl.u32 %v498, 7
        %v500 = vsub.s32 0, %v499
        %v501 = vrot.slane %v496, %v500
        %v507 = vunpack.c.l.b16 %v492
        %v508 = vunpack.c.l.b16 %v493
        %v509 = vunpack.c.l.b16 %v494
        %v510 = vunpack.c.l.b16 %v495
        %v511 = vpack.c.b16 %v508, %v507
        %v512 = vpack.c.b16 %v510, %v509
        %515 = vmatprep.subr.bf16.mxu0 0
        %516 = vmatpush1.bf16.xpose.msra.mxu0 0
        %517 = vmatprep.subr.bf16.mxu0 0
        %518 = vmatpush1.bf16.xpose.msra.mxu0 0
        %519 = vmatprep.subr.bf16.mxu0 0
        %520 = vmatpush1.bf16.xpose.msra.mxu0 0
        %521 = vmatprep.subr.bf16.mxu0 0
        %522 = vmatpush1.bf16.xpose.msra.mxu0 0
        %523 = vmatprep.subr.bf16.mxu0 0
        %524 = vmatpush1.bf16.xpose.msra.mxu0 0
        %525 = vmatprep.subr.bf16.mxu0 0
        %526 = vmatpush1.bf16.xpose.msra.mxu0 0
        %527 = vmatprep.subr.bf16.mxu0 0
        %528 = vmatpush1.bf16.xpose.msra.mxu0 %v512
        %529 = vmatprep.subr.bf16.mxu0 0
        %530 = vmatpush1.bf16.xpose.msra.mxu0 %v511
        %531 = vmatprep.subr.bf16.mxu0 0
        %532 = vmatpush2.bf16.xpose.msra.mxu0 0
        %533 = vmatprep.subr.bf16.mxu0 0
        %534 = vmatpush2.bf16.xpose.msra.mxu0 0
        %535 = vmatprep.subr.bf16.mxu0 0
        %536 = vmatpush2.bf16.xpose.msra.mxu0 0
        %537 = vmatprep.subr.bf16.mxu0 0
        %538 = vmatpush2.bf16.xpose.msra.mxu0 0
        %539 = vmatprep.subr.bf16.mxu0 0
        %540 = vmatpush2.bf16.xpose.msra.mxu0 0
        %541 = vmatprep.subr.bf16.mxu0 0
        %542 = vmatpush2.bf16.xpose.msra.mxu0 0
        %543 = vmatprep.subr.bf16.mxu0 0
        %544 = vmatpush2.bf16.xpose.msra.mxu0 0
        %545 = vmatprep.subr.bf16.mxu0 0
        %546 = vmatpush2.bf16.xpose.msra.mxu0 0
        %547 = vmatprep.mubr.bf16.mxu0 0
        %548 = vmatmul.mubr.bf16.gmra.mxu0 %v491
        %v549 = vpop.f32.mrf.mxu0
        %v550 = vadd.f32 %v501, %v549
        %v551 = vpop.f32.mrf.mxu0
        %v552 = vpop.f32.mrf.mxu0
        %v553 = vadd.f32 %v501, %v552
        %v554 = vpop.f32.mrf.mxu0
        %555 = vdwg.mxu0
        %s556 = scalar_lea.vmem %s3, 64
        %v557 = vld [vmem:[%s556] sm:$0xf]
        %v558 = vld [vmem:[%s556 + $0x4] sm:$0xf]
        %v559 = vld [vmem:[%s556 + $0x8] sm:$0xf]
        %v560 = vld [vmem:[%s556 + $0xc] sm:$0xf]
        %s561 = scalar_lea.vmem %s4, 4
        %v562 = vld [vmem:[%s561] sm:$0x1]
        %v564 = vlaneseq
        %v565 = vshrl.u32 %v564, 7
        %v566 = vsub.s32 0, %v565
        %v567 = vrot.slane %v562, %v566
        %v573 = vunpack.c.l.b16 %v557
        %v574 = vunpack.c.l.b16 %v558
        %v575 = vunpack.c.l.b16 %v559
        %v576 = vunpack.c.l.b16 %v560
        %v577 = vpack.c.b16 %v574, %v573
        %v578 = vpack.c.b16 %v576, %v575
        %581 = vmatprep.subr.bf16.mxu0 0
        %582 = vmatpush1.bf16.xpose.msra.mxu0 0
        %583 = vmatprep.subr.bf16.mxu0 0
        %584 = vmatpush1.bf16.xpose.msra.mxu0 0
        %585 = vmatprep.subr.bf16.mxu0 0
        %586 = vmatpush1.bf16.xpose.msra.mxu0 0
        %587 = vmatprep.subr.bf16.mxu0 0
        %588 = vmatpush1.bf16.xpose.msra.mxu0 0
        %589 = vmatprep.subr.bf16.mxu0 0
        %590 = vmatpush1.bf16.xpose.msra.mxu0 0
        %591 = vmatprep.subr.bf16.mxu0 0
        %592 = vmatpush1.bf16.xpose.msra.mxu0 0
        %593 = vmatprep.subr.bf16.mxu0 0
        %594 = vmatpush1.bf16.xpose.msra.mxu0 %v578
        %595 = vmatprep.subr.bf16.mxu0 0
        %596 = vmatpush1.bf16.xpose.msra.mxu0 %v577
        %597 = vmatprep.subr.bf16.mxu0 0
        %598 = vmatpush2.bf16.xpose.msra.mxu0 0
        %599 = vmatprep.subr.bf16.mxu0 0
        %600 = vmatpush2.bf16.xpose.msra.mxu0 0
        %601 = vmatprep.subr.bf16.mxu0 0
        %602 = vmatpush2.bf16.xpose.msra.mxu0 0
        %603 = vmatprep.subr.bf16.mxu0 0
        %604 = vmatpush2.bf16.xpose.msra.mxu0 0
        %605 = vmatprep.subr.bf16.mxu0 0
        %606 = vmatpush2.bf16.xpose.msra.mxu0 0
        %607 = vmatprep.subr.bf16.mxu0 0
        %608 = vmatpush2.bf16.xpose.msra.mxu0 0
        %609 = vmatprep.subr.bf16.mxu0 0
        %610 = vmatpush2.bf16.xpose.msra.mxu0 0
        %611 = vmatprep.subr.bf16.mxu0 0
        %612 = vmatpush2.bf16.xpose.msra.mxu0 0
        %613 = vmatprep.mubr.bf16.mxu0 0
        %614 = vmatmul.mubr.bf16.gmra.mxu0 %v491
        %v615 = vpop.f32.mrf.mxu0
        %v616 = vadd.f32 %v567, %v615
        %v617 = vpop.f32.mrf.mxu0
        %v618 = vpop.f32.mrf.mxu0
        %v619 = vadd.f32 %v567, %v618
        %v620 = vpop.f32.mrf.mxu0
        %621 = vdwg.mxu0
        %s622 = scalar_lea.vmem %s3, 128
        %v623 = vld [vmem:[%s622] sm:$0xf]
        %v624 = vld [vmem:[%s622 + $0x4] sm:$0xf]
        %v625 = vld [vmem:[%s622 + $0x8] sm:$0xf]
        %v626 = vld [vmem:[%s622 + $0xc] sm:$0xf]
        %s627 = scalar_lea.vmem %s4, 8
        %v628 = vld [vmem:[%s627] sm:$0x1]
        %v630 = vlaneseq
        %v631 = vshrl.u32 %v630, 7
        %v632 = vsub.s32 0, %v631
        %v633 = vrot.slane %v628, %v632
        %v639 = vunpack.c.l.b16 %v623
        %v640 = vunpack.c.l.b16 %v624
        %v641 = vunpack.c.l.b16 %v625
        %v642 = vunpack.c.l.b16 %v626
        %v643 = vpack.c.b16 %v640, %v639
        %v644 = vpack.c.b16 %v642, %v641
        %647 = vmatprep.subr.bf16.mxu0 0
        %648 = vmatpush1.bf16.xpose.msra.mxu0 0
        %649 = vmatprep.subr.bf16.mxu0 0
        %650 = vmatpush1.bf16.xpose.msra.mxu0 0
        %651 = vmatprep.subr.bf16.mxu0 0
        %652 = vmatpush1.bf16.xpose.msra.mxu0 0
        %653 = vmatprep.subr.bf16.mxu0 0
        %654 = vmatpush1.bf16.xpose.msra.mxu0 0
        %655 = vmatprep.subr.bf16.mxu0 0
        %656 = vmatpush1.bf16.xpose.msra.mxu0 0
        %657 = vmatprep.subr.bf16.mxu0 0
        %658 = vmatpush1.bf16.xpose.msra.mxu0 0
        %659 = vmatprep.subr.bf16.mxu0 0
        %660 = vmatpush1.bf16.xpose.msra.mxu0 %v644
        %661 = vmatprep.subr.bf16.mxu0 0
        %662 = vmatpush1.bf16.xpose.msra.mxu0 %v643
        %663 = vmatprep.subr.bf16.mxu0 0
        %664 = vmatpush2.bf16.xpose.msra.mxu0 0
        %665 = vmatprep.subr.bf16.mxu0 0
        %666 = vmatpush2.bf16.xpose.msra.mxu0 0
        %667 = vmatprep.subr.bf16.mxu0 0
        %668 = vmatpush2.bf16.xpose.msra.mxu0 0
        %669 = vmatprep.subr.bf16.mxu0 0
        %670 = vmatpush2.bf16.xpose.msra.mxu0 0
        %671 = vmatprep.subr.bf16.mxu0 0
        %672 = vmatpush2.bf16.xpose.msra.mxu0 0
        %673 = vmatprep.subr.bf16.mxu0 0
        %674 = vmatpush2.bf16.xpose.msra.mxu0 0
        %675 = vmatprep.subr.bf16.mxu0 0
        %676 = vmatpush2.bf16.xpose.msra.mxu0 0
        %677 = vmatprep.subr.bf16.mxu0 0
        %678 = vmatpush2.bf16.xpose.msra.mxu0 0
        %679 = vmatprep.mubr.bf16.mxu0 0
        %680 = vmatmul.mubr.bf16.gmra.mxu0 %v491
        %v681 = vpop.f32.mrf.mxu0
        %v682 = vadd.f32 %v633, %v681
        %v683 = vpop.f32.mrf.mxu0
        %v684 = vpop.f32.mrf.mxu0
        %v685 = vadd.f32 %v633, %v684
        %v686 = vpop.f32.mrf.mxu0
        %687 = vdwg.mxu0
        %v688 = vpack.c.bf16 %v553, %v550
        %v689 = vpack.c.bf16 %v619, %v616
        %vm690 = vcmask 261120
        %v692 = vsel %vm690, %v688, 0
        %v695 = vsel %vm690, %v689, 0
        %697 = vmatprep.subr.bf16.mxu0 0
        %698 = vmatpush1.bf16.xpose.msra.mxu0 0
        %699 = vmatprep.subr.bf16.mxu0 0
        %700 = vmatpush1.bf16.xpose.msra.mxu0 0
        %701 = vmatprep.subr.bf16.mxu0 0
        %702 = vmatpush1.bf16.xpose.msra.mxu0 0
        %703 = vmatprep.subr.bf16.mxu0 0
        %704 = vmatpush1.bf16.xpose.msra.mxu0 0
        %705 = vmatprep.subr.bf16.mxu0 0
        %706 = vmatpush1.bf16.xpose.msra.mxu0 0
        %707 = vmatprep.subr.bf16.mxu0 0
        %708 = vmatpush1.bf16.xpose.msra.mxu0 0
        %709 = vmatprep.subr.bf16.mxu0 0
        %710 = vmatpush1.bf16.xpose.msra.mxu0 0
        %711 = vmatprep.subr.bf16.mxu0 0
        %712 = vmatpush1.bf16.xpose.msra.mxu0 %v695
        %713 = vmatprep.subr.bf16.mxu0 0
        %714 = vmatpush2.bf16.xpose.msra.mxu0 0
        %715 = vmatprep.subr.bf16.mxu0 0
        %716 = vmatpush2.bf16.xpose.msra.mxu0 0
        %717 = vmatprep.subr.bf16.mxu0 0
        %718 = vmatpush2.bf16.xpose.msra.mxu0 0
        %719 = vmatprep.subr.bf16.mxu0 0
        %720 = vmatpush2.bf16.xpose.msra.mxu0 0
        %721 = vmatprep.subr.bf16.mxu0 0
        %722 = vmatpush2.bf16.xpose.msra.mxu0 0
        %723 = vmatprep.subr.bf16.mxu0 0
        %724 = vmatpush2.bf16.xpose.msra.mxu0 0
        %725 = vmatprep.subr.bf16.mxu0 0
        %726 = vmatpush2.bf16.xpose.msra.mxu0 0
        %727 = vmatprep.subr.bf16.mxu0 0
        %728 = vmatpush2.bf16.xpose.msra.mxu0 0
        %729 = vmatprep.mubr.bf16.mxu0 0
        %730 = vmatmul.mubr.bf16.gmra.mxu0 %v692
        %v731 = vpop.f32.mrf.mxu0
        %v732 = vadd.f32 %v450, %v731
        %v733 = vpop.f32.mrf.mxu0
        %v734 = vpop.f32.mrf.mxu0
        %v735 = vadd.f32 %v451, %v734
        %v736 = vpop.f32.mrf.mxu0
        %737 = vdwg.mxu0
        %vm738 = vcmask 130048
        %v739 = vsel %vm738, %v732, -inf
        %740 = vmax.xlane.f32.xlu0 %v739
        %v741 = vpop.xlane.xlu0 %740
        %v742 = vsel %vm738, %v735, -inf
        %743 = vmax.xlane.f32.xlu0 %v742
        %v744 = vpop.xlane.xlu0 %743
        %v745 = vsub.f32 %v732, %v741
        %v746 = vsub.f32 %v735, %v744
        %v747 = vmul.f32 %v745, 1.442695
        %v748 = vpow.pop %v747
        %v749 = vmul.f32 %v746, 1.442695
        %v750 = vpow.pop %v749
        %v751 = vsel %vm738, %v748, 0.0
        %752 = vadd.xlane.f32.xlu0 %v751
        %v753 = vpop.xlane.xlu0 %752
        %v754 = vsel %vm738, %v750, 0.0
        %755 = vadd.xlane.f32.xlu0 %v754
        %v756 = vpop.xlane.xlu0 %755
        %v757 = vrcp.pop %v753
        %v758 = vrcp.pop %v756
        %v759 = vmul.f32 %v748, %v757
        %v760 = vmul.f32 %v750, %v758
        %v761 = vpack.c.bf16 %v760, %v759
        %v762 = vpack.c.bf16 %v685, %v682
        %v764 = vsel %vm738, %v761, 0
        %766 = vmatprep.subr.bf16.mxu0 0
        %767 = vmatpush1.bf16.msra.mxu0 0
        %768 = vmatprep.subr.bf16.mxu0 0
        %769 = vmatpush1.bf16.msra.mxu0 0
        %770 = vmatprep.subr.bf16.mxu0 0
        %771 = vmatpush1.bf16.msra.mxu0 0
        %772 = vmatprep.subr.bf16.mxu0 0
        %773 = vmatpush1.bf16.msra.mxu0 0
        %774 = vmatprep.subr.bf16.mxu0 0
        %775 = vmatpush1.bf16.msra.mxu0 0
        %776 = vmatprep.subr.bf16.mxu0 0
        %777 = vmatpush1.bf16.msra.mxu0 0
        %778 = vmatprep.subr.bf16.mxu0 0
        %779 = vmatpush1.bf16.msra.mxu0 0
        %780 = vmatprep.subr.bf16.mxu0 0
        %781 = vmatpush1.bf16.msra.mxu0 %v762
        %782 = vmatprep.subr.bf16.mxu0 0
        %783 = vmatpush2.bf16.msra.mxu0 0
        %784 = vmatprep.subr.bf16.mxu0 0
        %785 = vmatpush2.bf16.msra.mxu0 0
        %786 = vmatprep.subr.bf16.mxu0 0
        %787 = vmatpush2.bf16.msra.mxu0 0
        %788 = vmatprep.subr.bf16.mxu0 0
        %789 = vmatpush2.bf16.msra.mxu0 0
        %790 = vmatprep.subr.bf16.mxu0 0
        %791 = vmatpush2.bf16.msra.mxu0 0
        %792 = vmatprep.subr.bf16.mxu0 0
        %793 = vmatpush2.bf16.msra.mxu0 0
        %794 = vmatprep.subr.bf16.mxu0 0
        %795 = vmatpush2.bf16.msra.mxu0 0
        %796 = vmatprep.subr.bf16.mxu0 0
        %797 = vmatpush2.bf16.msra.mxu0 0
        %798 = vmatprep.mubr.bf16.mxu0 0
        %799 = vmatmul.mubr.bf16.gmra.mxu0 %v764
        %v800 = vpop.f32.mrf.mxu0
        %v801 = vadd.f32 0.0, %v800
        %v802 = vpop.f32.mrf.mxu0
        %v803 = vpop.f32.mrf.mxu0
        %v804 = vadd.f32 0.0, %v803
        %v805 = vpop.f32.mrf.mxu0
        %806 = vdwg.mxu0
        %s807 = scalar_lea.vmem %s3, 16
        %v808 = vld [vmem:[%s807] sm:$0xf]
        %v809 = vld [vmem:[%s807 + $0x4] sm:$0xf]
        %v810 = vld [vmem:[%s807 + $0x8] sm:$0xf]
        %v811 = vld [vmem:[%s807 + $0xc] sm:$0xf]
        %s812 = scalar_lea.vmem %s4, 1
        %v813 = vld [vmem:[%s812] sm:$0x1]
        %v815 = vlaneseq
        %v816 = vshrl.u32 %v815, 7
        %v817 = vsub.s32 0, %v816
        %v818 = vrot.slane %v813, %v817
        %v824 = vunpack.c.l.b16 %v808
        %v825 = vunpack.c.l.b16 %v809
        %v826 = vunpack.c.l.b16 %v810
        %v827 = vunpack.c.l.b16 %v811
        %v828 = vpack.c.b16 %v825, %v824
        %v829 = vpack.c.b16 %v827, %v826
        %832 = vmatprep.subr.bf16.mxu0 0
        %833 = vmatpush1.bf16.xpose.msra.mxu0 0
        %834 = vmatprep.subr.bf16.mxu0 0
        %835 = vmatpush1.bf16.xpose.msra.mxu0 0
        %836 = vmatprep.subr.bf16.mxu0 0
        %837 = vmatpush1.bf16.xpose.msra.mxu0 0
        %838 = vmatprep.subr.bf16.mxu0 0
        %839 = vmatpush1.bf16.xpose.msra.mxu0 0
        %840 = vmatprep.subr.bf16.mxu0 0
        %841 = vmatpush1.bf16.xpose.msra.mxu0 0
        %842 = vmatprep.subr.bf16.mxu0 0
        %843 = vmatpush1.bf16.xpose.msra.mxu0 0
        %844 = vmatprep.subr.bf16.mxu0 0
        %845 = vmatpush1.bf16.xpose.msra.mxu0 %v829
        %846 = vmatprep.subr.bf16.mxu0 0
        %847 = vmatpush1.bf16.xpose.msra.mxu0 %v828
        %848 = vmatprep.subr.bf16.mxu0 0
        %849 = vmatpush2.bf16.xpose.msra.mxu0 0
        %850 = vmatprep.subr.bf16.mxu0 0
        %851 = vmatpush2.bf16.xpose.msra.mxu0 0
        %852 = vmatprep.subr.bf16.mxu0 0
        %853 = vmatpush2.bf16.xpose.msra.mxu0 0
        %854 = vmatprep.subr.bf16.mxu0 0
        %855 = vmatpush2.bf16.xpose.msra.mxu0 0
        %856 = vmatprep.subr.bf16.mxu0 0
        %857 = vmatpush2.bf16.xpose.msra.mxu0 0
        %858 = vmatprep.subr.bf16.mxu0 0
        %859 = vmatpush2.bf16.xpose.msra.mxu0 0
        %860 = vmatprep.subr.bf16.mxu0 0
        %861 = vmatpush2.bf16.xpose.msra.mxu0 0
        %862 = vmatprep.subr.bf16.mxu0 0
        %863 = vmatpush2.bf16.xpose.msra.mxu0 0
        %864 = vmatprep.mubr.bf16.mxu0 0
        %865 = vmatmul.mubr.bf16.gmra.mxu0 %v491
        %v866 = vpop.f32.mrf.mxu0
        %v867 = vadd.f32 %v818, %v866
        %v868 = vpop.f32.mrf.mxu0
        %v869 = vpop.f32.mrf.mxu0
        %v870 = vadd.f32 %v818, %v869
        %v871 = vpop.f32.mrf.mxu0
        %872 = vdwg.mxu0
        %s873 = scalar_lea.vmem %s3, 80
        %v874 = vld [vmem:[%s873] sm:$0xf]
        %v875 = vld [vmem:[%s873 + $0x4] sm:$0xf]
        %v876 = vld [vmem:[%s873 + $0x8] sm:$0xf]
        %v877 = vld [vmem:[%s873 + $0xc] sm:$0xf]
        %s878 = scalar_lea.vmem %s4, 5
        %v879 = vld [vmem:[%s878] sm:$0x1]
        %v881 = vlaneseq
        %v882 = vshrl.u32 %v881, 7
        %v883 = vsub.s32 0, %v882
        %v884 = vrot.slane %v879, %v883
        %v890 = vunpack.c.l.b16 %v874
        %v891 = vunpack.c.l.b16 %v875
        %v892 = vunpack.c.l.b16 %v876
        %v893 = vunpack.c.l.b16 %v877
        %v894 = vpack.c.b16 %v891, %v890
        %v895 = vpack.c.b16 %v893, %v892
        %898 = vmatprep.subr.bf16.mxu0 0
        %899 = vmatpush1.bf16.xpose.msra.mxu0 0
        %900 = vmatprep.subr.bf16.mxu0 0
        %901 = vmatpush1.bf16.xpose.msra.mxu0 0
        %902 = vmatprep.subr.bf16.mxu0 0
        %903 = vmatpush1.bf16.xpose.msra.mxu0 0
        %904 = vmatprep.subr.bf16.mxu0 0
        %905 = vmatpush1.bf16.xpose.msra.mxu0 0
        %906 = vmatprep.subr.bf16.mxu0 0
        %907 = vmatpush1.bf16.xpose.msra.mxu0 0
        %908 = vmatprep.subr.bf16.mxu0 0
        %909 = vmatpush1.bf16.xpose.msra.mxu0 0
        %910 = vmatprep.subr.bf16.mxu0 0
        %911 = vmatpush1.bf16.xpose.msra.mxu0 %v895
        %912 = vmatprep.subr.bf16.mxu0 0
        %913 = vmatpush1.bf16.xpose.msra.mxu0 %v894
        %914 = vmatprep.subr.bf16.mxu0 0
        %915 = vmatpush2.bf16.xpose.msra.mxu0 0
        %916 = vmatprep.subr.bf16.mxu0 0
        %917 = vmatpush2.bf16.xpose.msra.mxu0 0
        %918 = vmatprep.subr.bf16.mxu0 0
        %919 = vmatpush2.bf16.xpose.msra.mxu0 0
        %920 = vmatprep.subr.bf16.mxu0 0
        %921 = vmatpush2.bf16.xpose.msra.mxu0 0
        %922 = vmatprep.subr.bf16.mxu0 0
        %923 = vmatpush2.bf16.xpose.msra.mxu0 0
        %924 = vmatprep.subr.bf16.mxu0 0
        %925 = vmatpush2.bf16.xpose.msra.mxu0 0
        %926 = vmatprep.subr.bf16.mxu0 0
        %927 = vmatpush2.bf16.xpose.msra.mxu0 0
        %928 = vmatprep.subr.bf16.mxu0 0
        %929 = vmatpush2.bf16.xpose.msra.mxu0 0
        %930 = vmatprep.mubr.bf16.mxu0 0
        %931 = vmatmul.mubr.bf16.gmra.mxu0 %v491
        %v932 = vpop.f32.mrf.mxu0
        %v933 = vadd.f32 %v884, %v932
        %v934 = vpop.f32.mrf.mxu0
        %v935 = vpop.f32.mrf.mxu0
        %v936 = vadd.f32 %v884, %v935
        %v937 = vpop.f32.mrf.mxu0
        %938 = vdwg.mxu0
        %s939 = scalar_lea.vmem %s3, 144
        %v940 = vld [vmem:[%s939] sm:$0xf]
        %v941 = vld [vmem:[%s939 + $0x4] sm:$0xf]
        %v942 = vld [vmem:[%s939 + $0x8] sm:$0xf]
        %v943 = vld [vmem:[%s939 + $0xc] sm:$0xf]
        %s944 = scalar_lea.vmem %s4, 9
        %v945 = vld [vmem:[%s944] sm:$0x1]
        %v947 = vlaneseq
        %v948 = vshrl.u32 %v947, 7
        %v949 = vsub.s32 0, %v948
        %v950 = vrot.slane %v945, %v949
        %v956 = vunpack.c.l.b16 %v940
        %v957 = vunpack.c.l.b16 %v941
        %v958 = vunpack.c.l.b16 %v942
        %v959 = vunpack.c.l.b16 %v943
        %v960 = vpack.c.b16 %v957, %v956
        %v961 = vpack.c.b16 %v959, %v958
        %964 = vmatprep.subr.bf16.mxu0 0
        %965 = vmatpush1.bf16.xpose.msra.mxu0 0
        %966 = vmatprep.subr.bf16.mxu0 0
        %967 = vmatpush1.bf16.xpose.msra.mxu0 0
        %968 = vmatprep.subr.bf16.mxu0 0
        %969 = vmatpush1.bf16.xpose.msra.mxu0 0
        %970 = vmatprep.subr.bf16.mxu0 0
        %971 = vmatpush1.bf16.xpose.msra.mxu0 0
        %972 = vmatprep.subr.bf16.mxu0 0
        %973 = vmatpush1.bf16.xpose.msra.mxu0 0
        %974 = vmatprep.subr.bf16.mxu0 0
        %975 = vmatpush1.bf16.xpose.msra.mxu0 0
        %976 = vmatprep.subr.bf16.mxu0 0
        %977 = vmatpush1.bf16.xpose.msra.mxu0 %v961
        %978 = vmatprep.subr.bf16.mxu0 0
        %979 = vmatpush1.bf16.xpose.msra.mxu0 %v960
        %980 = vmatprep.subr.bf16.mxu0 0
        %981 = vmatpush2.bf16.xpose.msra.mxu0 0
        %982 = vmatprep.subr.bf16.mxu0 0
        %983 = vmatpush2.bf16.xpose.msra.mxu0 0
        %984 = vmatprep.subr.bf16.mxu0 0
        %985 = vmatpush2.bf16.xpose.msra.mxu0 0
        %986 = vmatprep.subr.bf16.mxu0 0
        %987 = vmatpush2.bf16.xpose.msra.mxu0 0
        %988 = vmatprep.subr.bf16.mxu0 0
        %989 = vmatpush2.bf16.xpose.msra.mxu0 0
        %990 = vmatprep.subr.bf16.mxu0 0
        %991 = vmatpush2.bf16.xpose.msra.mxu0 0
        %992 = vmatprep.subr.bf16.mxu0 0
        %993 = vmatpush2.bf16.xpose.msra.mxu0 0
        %994 = vmatprep.subr.bf16.mxu0 0
        %995 = vmatpush2.bf16.xpose.msra.mxu0 0
        %996 = vmatprep.mubr.bf16.mxu0 0
        %997 = vmatmul.mubr.bf16.gmra.mxu0 %v491
        %v998 = vpop.f32.mrf.mxu0
        %v999 = vadd.f32 %v950, %v998
        %v1000 = vpop.f32.mrf.mxu0
        %v1001 = vpop.f32.mrf.mxu0
        %v1002 = vadd.f32 %v950, %v1001
        %v1003 = vpop.f32.mrf.mxu0
        %1004 = vdwg.mxu0
        %v1005 = vpack.c.bf16 %v870, %v867
        %v1006 = vpack.c.bf16 %v936, %v933
        %v1008 = vsel %vm690, %v1005, 0
        %v1011 = vsel %vm690, %v1006, 0
        %1013 = vmatprep.subr.bf16.mxu0 0
        %1014 = vmatpush1.bf16.xpose.msra.mxu0 0
        %1015 = vmatprep.subr.bf16.mxu0 0
        %1016 = vmatpush1.bf16.xpose.msra.mxu0 0
        %1017 = vmatprep.subr.bf16.mxu0 0
        %1018 = vmatpush1.bf16.xpose.msra.mxu0 0
        %1019 = vmatprep.subr.bf16.mxu0 0
        %1020 = vmatpush1.bf16.xpose.msra.mxu0 0
        %1021 = vmatprep.subr.bf16.mxu0 0
        %1022 = vmatpush1.bf16.xpose.msra.mxu0 0
        %1023 = vmatprep.subr.bf16.mxu0 0
        %1024 = vmatpush1.bf16.xpose.msra.mxu0 0
        %1025 = vmatprep.subr.bf16.mxu0 0
        %1026 = vmatpush1.bf16.xpose.msra.mxu0 0
        %1027 = vmatprep.subr.bf16.mxu0 0
        %1028 = vmatpush1.bf16.xpose.msra.mxu0 %v1011
        %1029 = vmatprep.subr.bf16.mxu0 0
        %1030 = vmatpush2.bf16.xpose.msra.mxu0 0
        %1031 = vmatprep.subr.bf16.mxu0 0
        %1032 = vmatpush2.bf16.xpose.msra.mxu0 0
        %1033 = vmatprep.subr.bf16.mxu0 0
        %1034 = vmatpush2.bf16.xpose.msra.mxu0 0
        %1035 = vmatprep.subr.bf16.mxu0 0
        %1036 = vmatpush2.bf16.xpose.msra.mxu0 0
        %1037 = vmatprep.subr.bf16.mxu0 0
        %1038 = vmatpush2.bf16.xpose.msra.mxu0 0
        %1039 = vmatprep.subr.bf16.mxu0 0
        %1040 = vmatpush2.bf16.xpose.msra.mxu0 0
        %1041 = vmatprep.subr.bf16.mxu0 0
        %1042 = vmatpush2.bf16.xpose.msra.mxu0 0
        %1043 = vmatprep.subr.bf16.mxu0 0
        %1044 = vmatpush2.bf16.xpose.msra.mxu0 0
        %1045 = vmatprep.mubr.bf16.mxu0 0
        %1046 = vmatmul.mubr.bf16.gmra.mxu0 %v1008
        %v1047 = vpop.f32.mrf.mxu0
        %v1048 = vadd.f32 %v450, %v1047
        %v1049 = vpop.f32.mrf.mxu0
        %v1050 = vpop.f32.mrf.mxu0
        %v1051 = vadd.f32 %v451, %v1050
        %v1052 = vpop.f32.mrf.mxu0
        %1053 = vdwg.mxu0
        %v1054 = vsel %vm738, %v1048, -inf
        %1055 = vmax.xlane.f32.xlu0 %v1054
        %v1056 = vpop.xlane.xlu0 %1055
        %v1057 = vsel %vm738, %v1051, -inf
        %1058 = vmax.xlane.f32.xlu0 %v1057
        %v1059 = vpop.xlane.xlu0 %1058
        %v1060 = vsub.f32 %v1048, %v1056
        %v1061 = vsub.f32 %v1051, %v1059
        %v1062 = vmul.f32 %v1060, 1.442695
        %v1063 = vpow.pop %v1062
        %v1064 = vmul.f32 %v1061, 1.442695
        %v1065 = vpow.pop %v1064
        %v1066 = vsel %vm738, %v1063, 0.0
        %1067 = vadd.xlane.f32.xlu0 %v1066
        %v1068 = vpop.xlane.xlu0 %1067
        %v1069 = vsel %vm738, %v1065, 0.0
        %1070 = vadd.xlane.f32.xlu0 %v1069
        %v1071 = vpop.xlane.xlu0 %1070
        %v1072 = vrcp.pop %v1068
        %v1073 = vrcp.pop %v1071
        %v1074 = vmul.f32 %v1063, %v1072
        %v1075 = vmul.f32 %v1065, %v1073
        %v1076 = vpack.c.bf16 %v1075, %v1074
        %v1077 = vpack.c.bf16 %v1002, %v999
        %v1079 = vsel %vm738, %v1076, 0
        %1081 = vmatprep.subr.bf16.mxu0 0
        %1082 = vmatpush1.bf16.msra.mxu0 0
        %1083 = vmatprep.subr.bf16.mxu0 0
        %1084 = vmatpush1.bf16.msra.mxu0 0
        %1085 = vmatprep.subr.bf16.mxu0 0
        %1086 = vmatpush1.bf16.msra.mxu0 0
        %1087 = vmatprep.subr.bf16.mxu0 0
        %1088 = vmatpush1.bf16.msra.mxu0 0
        %1089 = vmatprep.subr.bf16.mxu0 0
        %1090 = vmatpush1.bf16.msra.mxu0 0
        %1091 = vmatprep.subr.bf16.mxu0 0
        %1092 = vmatpush1.bf16.msra.mxu0 0
        %1093 = vmatprep.subr.bf16.mxu0 0
        %1094 = vmatpush1.bf16.msra.mxu0 0
        %1095 = vmatprep.subr.bf16.mxu0 0
        %1096 = vmatpush1.bf16.msra.mxu0 %v1077
        %1097 = vmatprep.subr.bf16.mxu0 0
        %1098 = vmatpush2.bf16.msra.mxu0 0
        %1099 = vmatprep.subr.bf16.mxu0 0
        %1100 = vmatpush2.bf16.msra.mxu0 0
        %1101 = vmatprep.subr.bf16.mxu0 0
        %1102 = vmatpush2.bf16.msra.mxu0 0
        %1103 = vmatprep.subr.bf16.mxu0 0
        %1104 = vmatpush2.bf16.msra.mxu0 0
        %1105 = vmatprep.subr.bf16.mxu0 0
        %1106 = vmatpush2.bf16.msra.mxu0 0
        %1107 = vmatprep.subr.bf16.mxu0 0
        %1108 = vmatpush2.bf16.msra.mxu0 0
        %1109 = vmatprep.subr.bf16.mxu0 0
        %1110 = vmatpush2.bf16.msra.mxu0 0
        %1111 = vmatprep.subr.bf16.mxu0 0
        %1112 = vmatpush2.bf16.msra.mxu0 0
        %1113 = vmatprep.mubr.bf16.mxu0 0
        %1114 = vmatmul.mubr.bf16.gmra.mxu0 %v1079
        %v1115 = vpop.f32.mrf.mxu0
        %v1116 = vadd.f32 0.0, %v1115
        %v1117 = vpop.f32.mrf.mxu0
        %v1118 = vpop.f32.mrf.mxu0
        %v1119 = vadd.f32 0.0, %v1118
        %v1120 = vpop.f32.mrf.mxu0
        %1121 = vdwg.mxu0
        %s1122 = scalar_lea.vmem %s3, 32
        %v1123 = vld [vmem:[%s1122] sm:$0xf]
        %v1124 = vld [vmem:[%s1122 + $0x4] sm:$0xf]
        %v1125 = vld [vmem:[%s1122 + $0x8] sm:$0xf]
        %v1126 = vld [vmem:[%s1122 + $0xc] sm:$0xf]
        %s1127 = scalar_lea.vmem %s4, 2
        %v1128 = vld [vmem:[%s1127] sm:$0x1]
        %v1130 = vlaneseq
        %v1131 = vshrl.u32 %v1130, 7
        %v1132 = vsub.s32 0, %v1131
        %v1133 = vrot.slane %v1128, %v1132
        %v1139 = vunpack.c.l.b16 %v1123
        %v1140 = vunpack.c.l.b16 %v1124
        %v1141 = vunpack.c.l.b16 %v1125
        %v1142 = vunpack.c.l.b16 %v1126
        %v1143 = vpack.c.b16 %v1140, %v1139
        %v1144 = vpack.c.b16 %v1142, %v1141
        %1147 = vmatprep.subr.bf16.mxu0 0
        %1148 = vmatpush1.bf16.xpose.msra.mxu0 0
        %1149 = vmatprep.subr.bf16.mxu0 0
        %1150 = vmatpush1.bf16.xpose.msra.mxu0 0
        %1151 = vmatprep.subr.bf16.mxu0 0
        %1152 = vmatpush1.bf16.xpose.msra.mxu0 0
        %1153 = vmatprep.subr.bf16.mxu0 0
        %1154 = vmatpush1.bf16.xpose.msra.mxu0 0
        %1155 = vmatprep.subr.bf16.mxu0 0
        %1156 = vmatpush1.bf16.xpose.msra.mxu0 0
        %1157 = vmatprep.subr.bf16.mxu0 0
        %1158 = vmatpush1.bf16.xpose.msra.mxu0 0
        %1159 = vmatprep.subr.bf16.mxu0 0
        %1160 = vmatpush1.bf16.xpose.msra.mxu0 %v1144
        %1161 = vmatprep.subr.bf16.mxu0 0
        %1162 = vmatpush1.bf16.xpose.msra.mxu0 %v1143
        %1163 = vmatprep.subr.bf16.mxu0 0
        %1164 = vmatpush2.bf16.xpose.msra.mxu0 0
        %1165 = vmatprep.subr.bf16.mxu0 0
        %1166 = vmatpush2.bf16.xpose.msra.mxu0 0
        %1167 = vmatprep.subr.bf16.mxu0 0
        %1168 = vmatpush2.bf16.xpose.msra.mxu0 0
        %1169 = vmatprep.subr.bf16.mxu0 0
        %1170 = vmatpush2.bf16.xpose.msra.mxu0 0
        %1171 = vmatprep.subr.bf16.mxu0 0
        %1172 = vmatpush2.bf16.xpose.msra.mxu0 0
        %1173 = vmatprep.subr.bf16.mxu0 0
        %1174 = vmatpush2.bf16.xpose.msra.mxu0 0
        %1175 = vmatprep.subr.bf16.mxu0 0
        %1176 = vmatpush2.bf16.xpose.msra.mxu0 0
        %1177 = vmatprep.subr.bf16.mxu0 0
        %1178 = vmatpush2.bf16.xpose.msra.mxu0 0
        %1179 = vmatprep.mubr.bf16.mxu0 0
        %1180 = vmatmul.mubr.bf16.gmra.mxu0 %v491
        %v1181 = vpop.f32.mrf.mxu0
        %v1182 = vadd.f32 %v1133, %v1181
        %v1183 = vpop.f32.mrf.mxu0
        %v1184 = vpop.f32.mrf.mxu0
        %v1185 = vadd.f32 %v1133, %v1184
        %v1186 = vpop.f32.mrf.mxu0
        %1187 = vdwg.mxu0
        %s1188 = scalar_lea.vmem %s3, 96
        %v1189 = vld [vmem:[%s1188] sm:$0xf]
        %v1190 = vld [vmem:[%s1188 + $0x4] sm:$0xf]
        %v1191 = vld [vmem:[%s1188 + $0x8] sm:$0xf]
        %v1192 = vld [vmem:[%s1188 + $0xc] sm:$0xf]
        %s1193 = scalar_lea.vmem %s4, 6
        %v1194 = vld [vmem:[%s1193] sm:$0x1]
        %v1196 = vlaneseq
        %v1197 = vshrl.u32 %v1196, 7
        %v1198 = vsub.s32 0, %v1197
        %v1199 = vrot.slane %v1194, %v1198
        %v1205 = vunpack.c.l.b16 %v1189
        %v1206 = vunpack.c.l.b16 %v1190
        %v1207 = vunpack.c.l.b16 %v1191
        %v1208 = vunpack.c.l.b16 %v1192
        %v1209 = vpack.c.b16 %v1206, %v1205
        %v1210 = vpack.c.b16 %v1208, %v1207
        %1213 = vmatprep.subr.bf16.mxu0 0
        %1214 = vmatpush1.bf16.xpose.msra.mxu0 0
        %1215 = vmatprep.subr.bf16.mxu0 0
        %1216 = vmatpush1.bf16.xpose.msra.mxu0 0
        %1217 = vmatprep.subr.bf16.mxu0 0
        %1218 = vmatpush1.bf16.xpose.msra.mxu0 0
        %1219 = vmatprep.subr.bf16.mxu0 0
        %1220 = vmatpush1.bf16.xpose.msra.mxu0 0
        %1221 = vmatprep.subr.bf16.mxu0 0
        %1222 = vmatpush1.bf16.xpose.msra.mxu0 0
        %1223 = vmatprep.subr.bf16.mxu0 0
        %1224 = vmatpush1.bf16.xpose.msra.mxu0 0
        %1225 = vmatprep.subr.bf16.mxu0 0
        %1226 = vmatpush1.bf16.xpose.msra.mxu0 %v1210
        %1227 = vmatprep.subr.bf16.mxu0 0
        %1228 = vmatpush1.bf16.xpose.msra.mxu0 %v1209
        %1229 = vmatprep.subr.bf16.mxu0 0
        %1230 = vmatpush2.bf16.xpose.msra.mxu0 0
        %1231 = vmatprep.subr.bf16.mxu0 0
        %1232 = vmatpush2.bf16.xpose.msra.mxu0 0
        %1233 = vmatprep.subr.bf16.mxu0 0
        %1234 = vmatpush2.bf16.xpose.msra.mxu0 0
        %1235 = vmatprep.subr.bf16.mxu0 0
        %1236 = vmatpush2.bf16.xpose.msra.mxu0 0
        %1237 = vmatprep.subr.bf16.mxu0 0
        %1238 = vmatpush2.bf16.xpose.msra.mxu0 0
        %1239 = vmatprep.subr.bf16.mxu0 0
        %1240 = vmatpush2.bf16.xpose.msra.mxu0 0
        %1241 = vmatprep.subr.bf16.mxu0 0
        %1242 = vmatpush2.bf16.xpose.msra.mxu0 0
        %1243 = vmatprep.subr.bf16.mxu0 0
        %1244 = vmatpush2.bf16.xpose.msra.mxu0 0
        %1245 = vmatprep.mubr.bf16.mxu0 0
        %1246 = vmatmul.mubr.bf16.gmra.mxu0 %v491
        %v1247 = vpop.f32.mrf.mxu0
        %v1248 = vadd.f32 %v1199, %v1247
        %v1249 = vpop.f32.mrf.mxu0
        %v1250 = vpop.f32.mrf.mxu0
        %v1251 = vadd.f32 %v1199, %v1250
        %v1252 = vpop.f32.mrf.mxu0
        %1253 = vdwg.mxu0
        %s1254 = scalar_lea.vmem %s3, 160
        %v1255 = vld [vmem:[%s1254] sm:$0xf]
        %v1256 = vld [vmem:[%s1254 + $0x4] sm:$0xf]
        %v1257 = vld [vmem:[%s1254 + $0x8] sm:$0xf]
        %v1258 = vld [vmem:[%s1254 + $0xc] sm:$0xf]
        %s1259 = scalar_lea.vmem %s4, 10
        %v1260 = vld [vmem:[%s1259] sm:$0x1]
        %v1262 = vlaneseq
        %v1263 = vshrl.u32 %v1262, 7
        %v1264 = vsub.s32 0, %v1263
        %v1265 = vrot.slane %v1260, %v1264
        %v1271 = vunpack.c.l.b16 %v1255
        %v1272 = vunpack.c.l.b16 %v1256
        %v1273 = vunpack.c.l.b16 %v1257
        %v1274 = vunpack.c.l.b16 %v1258
        %v1275 = vpack.c.b16 %v1272, %v1271
        %v1276 = vpack.c.b16 %v1274, %v1273
        %1279 = vmatprep.subr.bf16.mxu0 0
        %1280 = vmatpush1.bf16.xpose.msra.mxu0 0
        %1281 = vmatprep.subr.bf16.mxu0 0
        %1282 = vmatpush1.bf16.xpose.msra.mxu0 0
        %1283 = vmatprep.subr.bf16.mxu0 0
        %1284 = vmatpush1.bf16.xpose.msra.mxu0 0
        %1285 = vmatprep.subr.bf16.mxu0 0
        %1286 = vmatpush1.bf16.xpose.msra.mxu0 0
        %1287 = vmatprep.subr.bf16.mxu0 0
        %1288 = vmatpush1.bf16.xpose.msra.mxu0 0
        %1289 = vmatprep.subr.bf16.mxu0 0
        %1290 = vmatpush1.bf16.xpose.msra.mxu0 0
        %1291 = vmatprep.subr.bf16.mxu0 0
        %1292 = vmatpush1.bf16.xpose.msra.mxu0 %v1276
        %1293 = vmatprep.subr.bf16.mxu0 0
        %1294 = vmatpush1.bf16.xpose.msra.mxu0 %v1275
        %1295 = vmatprep.subr.bf16.mxu0 0
        %1296 = vmatpush2.bf16.xpose.msra.mxu0 0
        %1297 = vmatprep.subr.bf16.mxu0 0
        %1298 = vmatpush2.bf16.xpose.msra.mxu0 0
        %1299 = vmatprep.subr.bf16.mxu0 0
        %1300 = vmatpush2.bf16.xpose.msra.mxu0 0
        %1301 = vmatprep.subr.bf16.mxu0 0
        %1302 = vmatpush2.bf16.xpose.msra.mxu0 0
        %1303 = vmatprep.subr.bf16.mxu0 0
        %1304 = vmatpush2.bf16.xpose.msra.mxu0 0
        %1305 = vmatprep.subr.bf16.mxu0 0
        %1306 = vmatpush2.bf16.xpose.msra.mxu0 0
        %1307 = vmatprep.subr.bf16.mxu0 0
        %1308 = vmatpush2.bf16.xpose.msra.mxu0 0
        %1309 = vmatprep.subr.bf16.mxu0 0
        %1310 = vmatpush2.bf16.xpose.msra.mxu0 0
        %1311 = vmatprep.mubr.bf16.mxu0 0
        %1312 = vmatmul.mubr.bf16.gmra.mxu0 %v491
        %v1313 = vpop.f32.mrf.mxu0
        %v1314 = vadd.f32 %v1265, %v1313
        %v1315 = vpop.f32.mrf.mxu0
        %v1316 = vpop.f32.mrf.mxu0
        %v1317 = vadd.f32 %v1265, %v1316
        %v1318 = vpop.f32.mrf.mxu0
        %1319 = vdwg.mxu0
        %v1320 = vpack.c.bf16 %v1185, %v1182
        %v1321 = vpack.c.bf16 %v1251, %v1248
        %v1323 = vsel %vm690, %v1320, 0
        %v1326 = vsel %vm690, %v1321, 0
        %1328 = vmatprep.subr.bf16.mxu0 0
        %1329 = vmatpush1.bf16.xpose.msra.mxu0 0
        %1330 = vmatprep.subr.bf16.mxu0 0
        %1331 = vmatpush1.bf16.xpose.msra.mxu0 0
        %1332 = vmatprep.subr.bf16.mxu0 0
        %1333 = vmatpush1.bf16.xpose.msra.mxu0 0
        %1334 = vmatprep.subr.bf16.mxu0 0
        %1335 = vmatpush1.bf16.xpose.msra.mxu0 0
        %1336 = vmatprep.subr.bf16.mxu0 0
        %1337 = vmatpush1.bf16.xpose.msra.mxu0 0
        %1338 = vmatprep.subr.bf16.mxu0 0
        %1339 = vmatpush1.bf16.xpose.msra.mxu0 0
        %1340 = vmatprep.subr.bf16.mxu0 0
        %1341 = vmatpush1.bf16.xpose.msra.mxu0 0
        %1342 = vmatprep.subr.bf16.mxu0 0
        %1343 = vmatpush1.bf16.xpose.msra.mxu0 %v1326
        %1344 = vmatprep.subr.bf16.mxu0 0
        %1345 = vmatpush2.bf16.xpose.msra.mxu0 0
        %1346 = vmatprep.subr.bf16.mxu0 0
        %1347 = vmatpush2.bf16.xpose.msra.mxu0 0
        %1348 = vmatprep.subr.bf16.mxu0 0
        %1349 = vmatpush2.bf16.xpose.msra.mxu0 0
        %1350 = vmatprep.subr.bf16.mxu0 0
        %1351 = vmatpush2.bf16.xpose.msra.mxu0 0
        %1352 = vmatprep.subr.bf16.mxu0 0
        %1353 = vmatpush2.bf16.xpose.msra.mxu0 0
        %1354 = vmatprep.subr.bf16.mxu0 0
        %1355 = vmatpush2.bf16.xpose.msra.mxu0 0
        %1356 = vmatprep.subr.bf16.mxu0 0
        %1357 = vmatpush2.bf16.xpose.msra.mxu0 0
        %1358 = vmatprep.subr.bf16.mxu0 0
        %1359 = vmatpush2.bf16.xpose.msra.mxu0 0
        %1360 = vmatprep.mubr.bf16.mxu0 0
        %1361 = vmatmul.mubr.bf16.gmra.mxu0 %v1323
        %v1362 = vpop.f32.mrf.mxu0
        %v1363 = vadd.f32 %v450, %v1362
        %v1364 = vpop.f32.mrf.mxu0
        %v1365 = vpop.f32.mrf.mxu0
        %v1366 = vadd.f32 %v451, %v1365
        %v1367 = vpop.f32.mrf.mxu0
        %1368 = vdwg.mxu0
        %v1369 = vsel %vm738, %v1363, -inf
        %1370 = vmax.xlane.f32.xlu0 %v1369
        %v1371 = vpop.xlane.xlu0 %1370
        %v1372 = vsel %vm738, %v1366, -inf
        %1373 = vmax.xlane.f32.xlu0 %v1372
        %v1374 = vpop.xlane.xlu0 %1373
        %v1375 = vsub.f32 %v1363, %v1371
        %v1376 = vsub.f32 %v1366, %v1374
        %v1377 = vmul.f32 %v1375, 1.442695
        %v1378 = vpow.pop %v1377
        %v1379 = vmul.f32 %v1376, 1.442695
        %v1380 = vpow.pop %v1379
        %v1381 = vsel %vm738, %v1378, 0.0
        %1382 = vadd.xlane.f32.xlu0 %v1381
        %v1383 = vpop.xlane.xlu0 %1382
        %v1384 = vsel %vm738, %v1380, 0.0
        %1385 = vadd.xlane.f32.xlu0 %v1384
        %v1386 = vpop.xlane.xlu0 %1385
        %v1387 = vrcp.pop %v1383
        %v1388 = vrcp.pop %v1386
        %v1389 = vmul.f32 %v1378, %v1387
        %v1390 = vmul.f32 %v1380, %v1388
        %v1391 = vpack.c.bf16 %v1390, %v1389
        %v1392 = vpack.c.bf16 %v1317, %v1314
        %v1394 = vsel %vm738, %v1391, 0
        %1396 = vmatprep.subr.bf16.mxu0 0
        %1397 = vmatpush1.bf16.msra.mxu0 0
        %1398 = vmatprep.subr.bf16.mxu0 0
        %1399 = vmatpush1.bf16.msra.mxu0 0
        %1400 = vmatprep.subr.bf16.mxu0 0
        %1401 = vmatpush1.bf16.msra.mxu0 0
        %1402 = vmatprep.subr.bf16.mxu0 0
        %1403 = vmatpush1.bf16.msra.mxu0 0
        %1404 = vmatprep.subr.bf16.mxu0 0
        %1405 = vmatpush1.bf16.msra.mxu0 0
        %1406 = vmatprep.subr.bf16.mxu0 0
        %1407 = vmatpush1.bf16.msra.mxu0 0
        %1408 = vmatprep.subr.bf16.mxu0 0
        %1409 = vmatpush1.bf16.msra.mxu0 0
        %1410 = vmatprep.subr.bf16.mxu0 0
        %1411 = vmatpush1.bf16.msra.mxu0 %v1392
        %1412 = vmatprep.subr.bf16.mxu0 0
        %1413 = vmatpush2.bf16.msra.mxu0 0
        %1414 = vmatprep.subr.bf16.mxu0 0
        %1415 = vmatpush2.bf16.msra.mxu0 0
        %1416 = vmatprep.subr.bf16.mxu0 0
        %1417 = vmatpush2.bf16.msra.mxu0 0
        %1418 = vmatprep.subr.bf16.mxu0 0
        %1419 = vmatpush2.bf16.msra.mxu0 0
        %1420 = vmatprep.subr.bf16.mxu0 0
        %1421 = vmatpush2.bf16.msra.mxu0 0
        %1422 = vmatprep.subr.bf16.mxu0 0
        %1423 = vmatpush2.bf16.msra.mxu0 0
        %1424 = vmatprep.subr.bf16.mxu0 0
        %1425 = vmatpush2.bf16.msra.mxu0 0
        %1426 = vmatprep.subr.bf16.mxu0 0
        %1427 = vmatpush2.bf16.msra.mxu0 0
        %1428 = vmatprep.mubr.bf16.mxu0 0
        %1429 = vmatmul.mubr.bf16.gmra.mxu0 %v1394
        %v1430 = vpop.f32.mrf.mxu0
        %v1431 = vadd.f32 0.0, %v1430
        %v1432 = vpop.f32.mrf.mxu0
        %v1433 = vpop.f32.mrf.mxu0
        %v1434 = vadd.f32 0.0, %v1433
        %v1435 = vpop.f32.mrf.mxu0
        %1436 = vdwg.mxu0
        %s1437 = scalar_lea.vmem %s3, 48
        %v1438 = vld [vmem:[%s1437] sm:$0xf]
        %v1439 = vld [vmem:[%s1437 + $0x4] sm:$0xf]
        %v1440 = vld [vmem:[%s1437 + $0x8] sm:$0xf]
        %v1441 = vld [vmem:[%s1437 + $0xc] sm:$0xf]
        %s1442 = scalar_lea.vmem %s4, 3
        %v1443 = vld [vmem:[%s1442] sm:$0x1]
        %v1445 = vlaneseq
        %v1446 = vshrl.u32 %v1445, 7
        %v1447 = vsub.s32 0, %v1446
        %v1448 = vrot.slane %v1443, %v1447
        %v1454 = vunpack.c.l.b16 %v1438
        %v1455 = vunpack.c.l.b16 %v1439
        %v1456 = vunpack.c.l.b16 %v1440
        %v1457 = vunpack.c.l.b16 %v1441
        %v1458 = vpack.c.b16 %v1455, %v1454
        %v1459 = vpack.c.b16 %v1457, %v1456
        %1462 = vmatprep.subr.bf16.mxu0 0
        %1463 = vmatpush1.bf16.xpose.msra.mxu0 0
        %1464 = vmatprep.subr.bf16.mxu0 0
        %1465 = vmatpush1.bf16.xpose.msra.mxu0 0
        %1466 = vmatprep.subr.bf16.mxu0 0
        %1467 = vmatpush1.bf16.xpose.msra.mxu0 0
        %1468 = vmatprep.subr.bf16.mxu0 0
        %1469 = vmatpush1.bf16.xpose.msra.mxu0 0
        %1470 = vmatprep.subr.bf16.mxu0 0
        %1471 = vmatpush1.bf16.xpose.msra.mxu0 0
        %1472 = vmatprep.subr.bf16.mxu0 0
        %1473 = vmatpush1.bf16.xpose.msra.mxu0 0
        %1474 = vmatprep.subr.bf16.mxu0 0
        %1475 = vmatpush1.bf16.xpose.msra.mxu0 %v1459
        %1476 = vmatprep.subr.bf16.mxu0 0
        %1477 = vmatpush1.bf16.xpose.msra.mxu0 %v1458
        %1478 = vmatprep.subr.bf16.mxu0 0
        %1479 = vmatpush2.bf16.xpose.msra.mxu0 0
        %1480 = vmatprep.subr.bf16.mxu0 0
        %1481 = vmatpush2.bf16.xpose.msra.mxu0 0
        %1482 = vmatprep.subr.bf16.mxu0 0
        %1483 = vmatpush2.bf16.xpose.msra.mxu0 0
        %1484 = vmatprep.subr.bf16.mxu0 0
        %1485 = vmatpush2.bf16.xpose.msra.mxu0 0
        %1486 = vmatprep.subr.bf16.mxu0 0
        %1487 = vmatpush2.bf16.xpose.msra.mxu0 0
        %1488 = vmatprep.subr.bf16.mxu0 0
        %1489 = vmatpush2.bf16.xpose.msra.mxu0 0
        %1490 = vmatprep.subr.bf16.mxu0 0
        %1491 = vmatpush2.bf16.xpose.msra.mxu0 0
        %1492 = vmatprep.subr.bf16.mxu0 0
        %1493 = vmatpush2.bf16.xpose.msra.mxu0 0
        %1494 = vmatprep.mubr.bf16.mxu0 0
        %1495 = vmatmul.mubr.bf16.gmra.mxu0 %v491
        %v1496 = vpop.f32.mrf.mxu0
        %v1497 = vadd.f32 %v1448, %v1496
        %v1498 = vpop.f32.mrf.mxu0
        %v1499 = vpop.f32.mrf.mxu0
        %v1500 = vadd.f32 %v1448, %v1499
        %v1501 = vpop.f32.mrf.mxu0
        %1502 = vdwg.mxu0
        %s1503 = scalar_lea.vmem %s3, 112
        %v1504 = vld [vmem:[%s1503] sm:$0xf]
        %v1505 = vld [vmem:[%s1503 + $0x4] sm:$0xf]
        %v1506 = vld [vmem:[%s1503 + $0x8] sm:$0xf]
        %v1507 = vld [vmem:[%s1503 + $0xc] sm:$0xf]
        %s1508 = scalar_lea.vmem %s4, 7
        %v1509 = vld [vmem:[%s1508] sm:$0x1]
        %v1511 = vlaneseq
        %v1512 = vshrl.u32 %v1511, 7
        %v1513 = vsub.s32 0, %v1512
        %v1514 = vrot.slane %v1509, %v1513
        %v1520 = vunpack.c.l.b16 %v1504
        %v1521 = vunpack.c.l.b16 %v1505
        %v1522 = vunpack.c.l.b16 %v1506
        %v1523 = vunpack.c.l.b16 %v1507
        %v1524 = vpack.c.b16 %v1521, %v1520
        %v1525 = vpack.c.b16 %v1523, %v1522
        %1528 = vmatprep.subr.bf16.mxu0 0
        %1529 = vmatpush1.bf16.xpose.msra.mxu0 0
        %1530 = vmatprep.subr.bf16.mxu0 0
        %1531 = vmatpush1.bf16.xpose.msra.mxu0 0
        %1532 = vmatprep.subr.bf16.mxu0 0
        %1533 = vmatpush1.bf16.xpose.msra.mxu0 0
        %1534 = vmatprep.subr.bf16.mxu0 0
        %1535 = vmatpush1.bf16.xpose.msra.mxu0 0
        %1536 = vmatprep.subr.bf16.mxu0 0
        %1537 = vmatpush1.bf16.xpose.msra.mxu0 0
        %1538 = vmatprep.subr.bf16.mxu0 0
        %1539 = vmatpush1.bf16.xpose.msra.mxu0 0
        %1540 = vmatprep.subr.bf16.mxu0 0
        %1541 = vmatpush1.bf16.xpose.msra.mxu0 %v1525
        %1542 = vmatprep.subr.bf16.mxu0 0
        %1543 = vmatpush1.bf16.xpose.msra.mxu0 %v1524
        %1544 = vmatprep.subr.bf16.mxu0 0
        %1545 = vmatpush2.bf16.xpose.msra.mxu0 0
        %1546 = vmatprep.subr.bf16.mxu0 0
        %1547 = vmatpush2.bf16.xpose.msra.mxu0 0
        %1548 = vmatprep.subr.bf16.mxu0 0
        %1549 = vmatpush2.bf16.xpose.msra.mxu0 0
        %1550 = vmatprep.subr.bf16.mxu0 0
        %1551 = vmatpush2.bf16.xpose.msra.mxu0 0
        %1552 = vmatprep.subr.bf16.mxu0 0
        %1553 = vmatpush2.bf16.xpose.msra.mxu0 0
        %1554 = vmatprep.subr.bf16.mxu0 0
        %1555 = vmatpush2.bf16.xpose.msra.mxu0 0
        %1556 = vmatprep.subr.bf16.mxu0 0
        %1557 = vmatpush2.bf16.xpose.msra.mxu0 0
        %1558 = vmatprep.subr.bf16.mxu0 0
        %1559 = vmatpush2.bf16.xpose.msra.mxu0 0
        %1560 = vmatprep.mubr.bf16.mxu0 0
        %1561 = vmatmul.mubr.bf16.gmra.mxu0 %v491
        %v1562 = vpop.f32.mrf.mxu0
        %v1563 = vadd.f32 %v1514, %v1562
        %v1564 = vpop.f32.mrf.mxu0
        %v1565 = vpop.f32.mrf.mxu0
        %v1566 = vadd.f32 %v1514, %v1565
        %v1567 = vpop.f32.mrf.mxu0
        %1568 = vdwg.mxu0
        %s1569 = scalar_lea.vmem %s3, 176
        %v1570 = vld [vmem:[%s1569] sm:$0xf]
        %v1571 = vld [vmem:[%s1569 + $0x4] sm:$0xf]
        %v1572 = vld [vmem:[%s1569 + $0x8] sm:$0xf]
        %v1573 = vld [vmem:[%s1569 + $0xc] sm:$0xf]
        %s1574 = scalar_lea.vmem %s4, 11
        %v1575 = vld [vmem:[%s1574] sm:$0x1]
        %v1577 = vlaneseq
        %v1578 = vshrl.u32 %v1577, 7
        %v1579 = vsub.s32 0, %v1578
        %v1580 = vrot.slane %v1575, %v1579
        %v1586 = vunpack.c.l.b16 %v1570
        %v1587 = vunpack.c.l.b16 %v1571
        %v1588 = vunpack.c.l.b16 %v1572
        %v1589 = vunpack.c.l.b16 %v1573
        %v1590 = vpack.c.b16 %v1587, %v1586
        %v1591 = vpack.c.b16 %v1589, %v1588
        %1594 = vmatprep.subr.bf16.mxu0 0
        %1595 = vmatpush1.bf16.xpose.msra.mxu0 0
        %1596 = vmatprep.subr.bf16.mxu0 0
        %1597 = vmatpush1.bf16.xpose.msra.mxu0 0
        %1598 = vmatprep.subr.bf16.mxu0 0
        %1599 = vmatpush1.bf16.xpose.msra.mxu0 0
        %1600 = vmatprep.subr.bf16.mxu0 0
        %1601 = vmatpush1.bf16.xpose.msra.mxu0 0
        %1602 = vmatprep.subr.bf16.mxu0 0
        %1603 = vmatpush1.bf16.xpose.msra.mxu0 0
        %1604 = vmatprep.subr.bf16.mxu0 0
        %1605 = vmatpush1.bf16.xpose.msra.mxu0 0
        %1606 = vmatprep.subr.bf16.mxu0 0
        %1607 = vmatpush1.bf16.xpose.msra.mxu0 %v1591
        %1608 = vmatprep.subr.bf16.mxu0 0
        %1609 = vmatpush1.bf16.xpose.msra.mxu0 %v1590
        %1610 = vmatprep.subr.bf16.mxu0 0
        %1611 = vmatpush2.bf16.xpose.msra.mxu0 0
        %1612 = vmatprep.subr.bf16.mxu0 0
        %1613 = vmatpush2.bf16.xpose.msra.mxu0 0
        %1614 = vmatprep.subr.bf16.mxu0 0
        %1615 = vmatpush2.bf16.xpose.msra.mxu0 0
        %1616 = vmatprep.subr.bf16.mxu0 0
        %1617 = vmatpush2.bf16.xpose.msra.mxu0 0
        %1618 = vmatprep.subr.bf16.mxu0 0
        %1619 = vmatpush2.bf16.xpose.msra.mxu0 0
        %1620 = vmatprep.subr.bf16.mxu0 0
        %1621 = vmatpush2.bf16.xpose.msra.mxu0 0
        %1622 = vmatprep.subr.bf16.mxu0 0
        %1623 = vmatpush2.bf16.xpose.msra.mxu0 0
        %1624 = vmatprep.subr.bf16.mxu0 0
        %1625 = vmatpush2.bf16.xpose.msra.mxu0 0
        %1626 = vmatprep.mubr.bf16.mxu0 0
        %1627 = vmatmul.mubr.bf16.gmra.mxu0 %v491
        %v1628 = vpop.f32.mrf.mxu0
        %v1629 = vadd.f32 %v1580, %v1628
        %v1630 = vpop.f32.mrf.mxu0
        %v1631 = vpop.f32.mrf.mxu0
        %v1632 = vadd.f32 %v1580, %v1631
        %v1633 = vpop.f32.mrf.mxu0
        %1634 = vdwg.mxu0
        %v1635 = vpack.c.bf16 %v1500, %v1497
        %v1636 = vpack.c.bf16 %v1566, %v1563
        %v1638 = vsel %vm690, %v1635, 0
        %v1641 = vsel %vm690, %v1636, 0
        %1643 = vmatprep.subr.bf16.mxu0 0
        %1644 = vmatpush1.bf16.xpose.msra.mxu0 0
        %1645 = vmatprep.subr.bf16.mxu0 0
        %1646 = vmatpush1.bf16.xpose.msra.mxu0 0
        %1647 = vmatprep.subr.bf16.mxu0 0
        %1648 = vmatpush1.bf16.xpose.msra.mxu0 0
        %1649 = vmatprep.subr.bf16.mxu0 0
        %1650 = vmatpush1.bf16.xpose.msra.mxu0 0
        %1651 = vmatprep.subr.bf16.mxu0 0
        %1652 = vmatpush1.bf16.xpose.msra.mxu0 0
        %1653 = vmatprep.subr.bf16.mxu0 0
        %1654 = vmatpush1.bf16.xpose.msra.mxu0 0
        %1655 = vmatprep.subr.bf16.mxu0 0
        %1656 = vmatpush1.bf16.xpose.msra.mxu0 0
        %1657 = vmatprep.subr.bf16.mxu0 0
        %1658 = vmatpush1.bf16.xpose.msra.mxu0 %v1641
        %1659 = vmatprep.subr.bf16.mxu0 0
        %1660 = vmatpush2.bf16.xpose.msra.mxu0 0
        %1661 = vmatprep.subr.bf16.mxu0 0
        %1662 = vmatpush2.bf16.xpose.msra.mxu0 0
        %1663 = vmatprep.subr.bf16.mxu0 0
        %1664 = vmatpush2.bf16.xpose.msra.mxu0 0
        %1665 = vmatprep.subr.bf16.mxu0 0
        %1666 = vmatpush2.bf16.xpose.msra.mxu0 0
        %1667 = vmatprep.subr.bf16.mxu0 0
        %1668 = vmatpush2.bf16.xpose.msra.mxu0 0
        %1669 = vmatprep.subr.bf16.mxu0 0
        %1670 = vmatpush2.bf16.xpose.msra.mxu0 0
        %1671 = vmatprep.subr.bf16.mxu0 0
        %1672 = vmatpush2.bf16.xpose.msra.mxu0 0
        %1673 = vmatprep.subr.bf16.mxu0 0
        %1674 = vmatpush2.bf16.xpose.msra.mxu0 0
        %1675 = vmatprep.mubr.bf16.mxu0 0
        %1676 = vmatmul.mubr.bf16.gmra.mxu0 %v1638
        %v1677 = vpop.f32.mrf.mxu0
        %v1678 = vadd.f32 %v450, %v1677
        %v1679 = vpop.f32.mrf.mxu0
        %v1680 = vpop.f32.mrf.mxu0
        %v1681 = vadd.f32 %v451, %v1680
        %v1682 = vpop.f32.mrf.mxu0
        %1683 = vdwg.mxu0
        %v1684 = vsel %vm738, %v1678, -inf
        %1685 = vmax.xlane.f32.xlu0 %v1684
        %v1686 = vpop.xlane.xlu0 %1685
        %v1687 = vsel %vm738, %v1681, -inf
        %1688 = vmax.xlane.f32.xlu0 %v1687
        %v1689 = vpop.xlane.xlu0 %1688
        %v1690 = vsub.f32 %v1678, %v1686
        %v1691 = vsub.f32 %v1681, %v1689
        %v1692 = vmul.f32 %v1690, 1.442695
        %v1693 = vpow.pop %v1692
        %v1694 = vmul.f32 %v1691, 1.442695
        %v1695 = vpow.pop %v1694
        %v1696 = vsel %vm738, %v1693, 0.0
        %1697 = vadd.xlane.f32.xlu0 %v1696
        %v1698 = vpop.xlane.xlu0 %1697
        %v1699 = vsel %vm738, %v1695, 0.0
        %1700 = vadd.xlane.f32.xlu0 %v1699
        %v1701 = vpop.xlane.xlu0 %1700
        %v1702 = vrcp.pop %v1698
        %v1703 = vrcp.pop %v1701
        %v1704 = vmul.f32 %v1693, %v1702
        %v1705 = vmul.f32 %v1695, %v1703
        %v1706 = vpack.c.bf16 %v1705, %v1704
        %v1707 = vpack.c.bf16 %v1632, %v1629
        %v1709 = vsel %vm738, %v1706, 0
        %1711 = vmatprep.subr.bf16.mxu0 0
        %1712 = vmatpush1.bf16.msra.mxu0 0
        %1713 = vmatprep.subr.bf16.mxu0 0
        %1714 = vmatpush1.bf16.msra.mxu0 0
        %1715 = vmatprep.subr.bf16.mxu0 0
        %1716 = vmatpush1.bf16.msra.mxu0 0
        %1717 = vmatprep.subr.bf16.mxu0 0
        %1718 = vmatpush1.bf16.msra.mxu0 0
        %1719 = vmatprep.subr.bf16.mxu0 0
        %1720 = vmatpush1.bf16.msra.mxu0 0
        %1721 = vmatprep.subr.bf16.mxu0 0
        %1722 = vmatpush1.bf16.msra.mxu0 0
        %1723 = vmatprep.subr.bf16.mxu0 0
        %1724 = vmatpush1.bf16.msra.mxu0 0
        %1725 = vmatprep.subr.bf16.mxu0 0
        %1726 = vmatpush1.bf16.msra.mxu0 %v1707
        %1727 = vmatprep.subr.bf16.mxu0 0
        %1728 = vmatpush2.bf16.msra.mxu0 0
        %1729 = vmatprep.subr.bf16.mxu0 0
        %1730 = vmatpush2.bf16.msra.mxu0 0
        %1731 = vmatprep.subr.bf16.mxu0 0
        %1732 = vmatpush2.bf16.msra.mxu0 0
        %1733 = vmatprep.subr.bf16.mxu0 0
        %1734 = vmatpush2.bf16.msra.mxu0 0
        %1735 = vmatprep.subr.bf16.mxu0 0
        %1736 = vmatpush2.bf16.msra.mxu0 0
        %1737 = vmatprep.subr.bf16.mxu0 0
        %1738 = vmatpush2.bf16.msra.mxu0 0
        %1739 = vmatprep.subr.bf16.mxu0 0
        %1740 = vmatpush2.bf16.msra.mxu0 0
        %1741 = vmatprep.subr.bf16.mxu0 0
        %1742 = vmatpush2.bf16.msra.mxu0 0
        %1743 = vmatprep.mubr.bf16.mxu0 0
        %1744 = vmatmul.mubr.bf16.gmra.mxu0 %v1709
        %v1745 = vpop.f32.mrf.mxu0
        %v1746 = vadd.f32 0.0, %v1745
        %v1747 = vpop.f32.mrf.mxu0
        %v1748 = vpop.f32.mrf.mxu0
        %v1749 = vadd.f32 0.0, %v1748
        %v1750 = vpop.f32.mrf.mxu0
        %1751 = vdwg.mxu0
        %1754 = vrot.lane.b32.xlu0 %v1116, 32
        %v1755 = vpop.permute.xlu0 %1754
        %1756 = vrot.lane.b32.xlu0 %v1119, 32
        %v1757 = vpop.permute.xlu0 %1756
        %1762 = vrot.lane.b32.xlu0 %v1431, 64
        %v1763 = vpop.permute.xlu0 %1762
        %1764 = vrot.lane.b32.xlu0 %v1434, 64
        %v1765 = vpop.permute.xlu0 %1764
        %1770 = vrot.lane.b32.xlu0 %v1746, 96
        %v1771 = vpop.permute.xlu0 %1770
        %1772 = vrot.lane.b32.xlu0 %v1749, 96
        %v1773 = vpop.permute.xlu0 %1772
        %v1776 = vsel %vm690, %v801, %v1755
        %v1777 = vsel %vm690, %v804, %v1757
        %vm1778 = vcmask 523264
        %v1779 = vsel %vm1778, %v1776, %v1763
        %v1780 = vsel %vm1778, %v1777, %v1765
        %vm1781 = vcmask 785408
        %v1782 = vsel %vm1781, %v1779, %v1771
        %v1783 = vsel %vm1781, %v1780, %v1773
        %v1784 = vld [vmem:[#allocation2] sm:$0xf]
        %v1785 = vld [vmem:[#allocation2 + $0x4] sm:$0xf]
        %v1786 = vld [vmem:[#allocation2 + $0x8] sm:$0xf]
        %v1787 = vld [vmem:[#allocation2 + $0xc] sm:$0xf]
        %v1788 = vld [vmem:[#allocation2 + $0x10] sm:$0xf]
        %v1789 = vld [vmem:[#allocation2 + $0x14] sm:$0xf]
        %v1790 = vld [vmem:[#allocation2 + $0x18] sm:$0xf]
        %v1791 = vld [vmem:[#allocation2 + $0x1c] sm:$0xf]
        %v1792 = vld [vmem:[#allocation2 + $0x20] sm:$0xf]
        %v1793 = vld [vmem:[#allocation2 + $0x24] sm:$0xf]
        %v1794 = vld [vmem:[#allocation2 + $0x28] sm:$0xf]
        %v1795 = vld [vmem:[#allocation2 + $0x2c] sm:$0xf]
        %v1796 = vld [vmem:[#allocation2 + $0x30] sm:$0xf]
        %v1797 = vld [vmem:[#allocation2 + $0x34] sm:$0xf]
        %v1798 = vld [vmem:[#allocation2 + $0x38] sm:$0xf]
        %v1799 = vld [vmem:[#allocation2 + $0x3c] sm:$0xf]
        %v1800 = vld [vmem:[%s9] sm:$0x1]
        %v1801 = vpack.c.bf16 %v1783, %v1782
        %v1802 = vlaneseq
        %v1803 = vshrl.u32 %v1802, 7
        %v1804 = vsub.s32 0, %v1803
        %v1805 = vrot.slane %v1800, %v1804
        %v1822 = vunpack.c.l.b16 %v1784
        %v1823 = vunpack.c.l.b16 %v1785
        %v1824 = vunpack.c.l.b16 %v1786
        %v1825 = vunpack.c.l.b16 %v1787
        %v1826 = vunpack.c.l.b16 %v1788
        %v1827 = vunpack.c.l.b16 %v1789
        %v1828 = vunpack.c.l.b16 %v1790
        %v1829 = vunpack.c.l.b16 %v1791
        %v1830 = vunpack.c.l.b16 %v1792
        %v1831 = vunpack.c.l.b16 %v1793
        %v1832 = vunpack.c.l.b16 %v1794
        %v1833 = vunpack.c.l.b16 %v1795
        %v1834 = vunpack.c.l.b16 %v1796
        %v1835 = vunpack.c.l.b16 %v1797
        %v1836 = vunpack.c.l.b16 %v1798
        %v1837 = vunpack.c.l.b16 %v1799
        %v1838 = vpack.c.b16 %v1823, %v1822
        %v1839 = vpack.c.b16 %v1825, %v1824
        %v1840 = vpack.c.b16 %v1827, %v1826
        %v1841 = vpack.c.b16 %v1829, %v1828
        %v1842 = vpack.c.b16 %v1831, %v1830
        %v1843 = vpack.c.b16 %v1833, %v1832
        %v1844 = vpack.c.b16 %v1835, %v1834
        %v1845 = vpack.c.b16 %v1837, %v1836
        %1854 = vmatprep.subr.bf16.mxu0 0
        %1855 = vmatpush1.bf16.msra.mxu0 %v1845
        %1856 = vmatprep.subr.bf16.mxu0 0
        %1857 = vmatpush1.bf16.msra.mxu0 %v1844
        %1858 = vmatprep.subr.bf16.mxu0 0
        %1859 = vmatpush1.bf16.msra.mxu0 %v1843
        %1860 = vmatprep.subr.bf16.mxu0 0
        %1861 = vmatpush1.bf16.msra.mxu0 %v1842
        %1862 = vmatprep.subr.bf16.mxu0 0
        %1863 = vmatpush1.bf16.msra.mxu0 %v1841
        %1864 = vmatprep.subr.bf16.mxu0 0
        %1865 = vmatpush1.bf16.msra.mxu0 %v1840
        %1866 = vmatprep.subr.bf16.mxu0 0
        %1867 = vmatpush1.bf16.msra.mxu0 %v1839
        %1868 = vmatprep.subr.bf16.mxu0 0
        %1869 = vmatpush1.bf16.msra.mxu0 %v1838
        %1870 = vmatprep.subr.bf16.mxu0 0
        %1871 = vmatpush2.bf16.msra.mxu0 0
        %1872 = vmatprep.subr.bf16.mxu0 0
        %1873 = vmatpush2.bf16.msra.mxu0 0
        %1874 = vmatprep.subr.bf16.mxu0 0
        %1875 = vmatpush2.bf16.msra.mxu0 0
        %1876 = vmatprep.subr.bf16.mxu0 0
        %1877 = vmatpush2.bf16.msra.mxu0 0
        %1878 = vmatprep.subr.bf16.mxu0 0
        %1879 = vmatpush2.bf16.msra.mxu0 0
        %1880 = vmatprep.subr.bf16.mxu0 0
        %1881 = vmatpush2.bf16.msra.mxu0 0
        %1882 = vmatprep.subr.bf16.mxu0 0
        %1883 = vmatpush2.bf16.msra.mxu0 0
        %1884 = vmatprep.subr.bf16.mxu0 0
        %1885 = vmatpush2.bf16.msra.mxu0 0
        %1886 = vmatprep.mubr.bf16.mxu0 0
        %1887 = vmatmul.mubr.bf16.gmra.mxu0 %v1801
        %v1888 = vpop.f32.mrf.mxu0
        %v1889 = vadd.f32 %v1805, %v1888
        %v1890 = vpop.f32.mrf.mxu0
        %v1891 = vpop.f32.mrf.mxu0
        %v1892 = vadd.f32 %v1805, %v1891
        %v1893 = vpop.f32.mrf.mxu0
        %1894 = vdwg.mxu0
        %v1895 = vadd.f32 %v1889, %v489
        %v1896 = vadd.f32 %v1892, %v490
        %v1897 = vld [vmem:[%s9 + $0x1] sm:$0x1]
        %v1898 = vld [vmem:[%s9 + $0x2] sm:$0x1]
        %1899 = vadd.xlane.f32.xlu0 %v1895
        %v1900 = vpop.xlane.xlu0 %1899
        %1901 = vadd.xlane.f32.xlu0 %v1896
        %v1902 = vpop.xlane.xlu0 %1901
        %v1903 = vmul.f32 %v1900, %v460
        %v1904 = vmul.f32 %v1902, %v460
        %v1905 = vsub.f32 %v1895, %v1903
        %v1906 = vsub.f32 %v1896, %v1904
        %v1907 = vmul.f32 %v1905, %v1905
        %v1908 = vmul.f32 %v1906, %v1906
        %1909 = vadd.xlane.f32.xlu0 %v1907
        %v1910 = vpop.xlane.xlu0 %1909
        %1911 = vadd.xlane.f32.xlu0 %v1908
        %v1912 = vpop.xlane.xlu0 %1911
        %v1913 = vmul.f32 %v1910, %v460
        %v1914 = vmul.f32 %v1912, %v460
        %v1915 = vadd.f32 %v1913, 1e-12
        %v1916 = vadd.f32 %v1914, 1e-12
        %v1917 = vrsqrt.pop %v1915
        %v1918 = vrsqrt.pop %v1916
        %v1919 = vmul.f32 %v1905, %v1917
        %v1920 = vmul.f32 %v1906, %v1918
        %v1921 = vlaneseq
        %v1922 = vshrl.u32 %v1921, 7
        %v1923 = vsub.s32 0, %v1922
        %v1924 = vrot.slane %v1897, %v1923
        %v1925 = vmul.f32 %v1919, %v1924
        %v1926 = vmul.f32 %v1920, %v1924
        %v1927 = vlaneseq
        %v1928 = vshrl.u32 %v1927, 7
        %v1929 = vsub.s32 0, %v1928
        %v1930 = vrot.slane %v1898, %v1929
        %v1931 = vadd.f32 %v1925, %v1930
        %v1932 = vadd.f32 %v1926, %v1930
        %v1933 = vld [vmem:[%s6] sm:$0xff]
        %v1934 = vld [vmem:[%s6 + $0x8] sm:$0xff]
        %v1935 = vld [vmem:[%s6 + $0x10] sm:$0xff]
        %v1936 = vld [vmem:[%s6 + $0x18] sm:$0xff]
        %v1937 = vld [vmem:[%s6 + $0x20] sm:$0xff]
        %v1938 = vld [vmem:[%s6 + $0x28] sm:$0xff]
        %v1939 = vld [vmem:[%s6 + $0x30] sm:$0xff]
        %v1940 = vld [vmem:[%s6 + $0x38] sm:$0xff]
        %v1941 = vld [vmem:[%s6 + $0x40] sm:$0xff]
        %v1942 = vld [vmem:[%s6 + $0x48] sm:$0xff]
        %v1943 = vld [vmem:[%s6 + $0x50] sm:$0xff]
        %v1944 = vld [vmem:[%s6 + $0x58] sm:$0xff]
        %v1945 = vld [vmem:[%s6 + $0x60] sm:$0xff]
        %v1946 = vld [vmem:[%s6 + $0x68] sm:$0xff]
        %v1947 = vld [vmem:[%s6 + $0x70] sm:$0xff]
        %v1948 = vld [vmem:[%s6 + $0x78] sm:$0xff]
        %v1949 = vld [vmem:[%s7] sm:$0x3]
        %v1950 = vpack.c.bf16 %v1932, %v1931
        %v1952 = vlaneseq
        %v1953 = vshrl.u32 %v1952, 7
        %v1954 = vsub.s32 0, %v1953
        %v1955 = vrot.slane %v1949, %v1954
        %v1956 = vlaneseq
        %v1957 = vshrl.u32 %v1956, 7
        %v1958 = vsub.s32 1, %v1957
        %v1959 = vrot.slane %v1949, %v1958
        %v1978 = vunpack.c.l.b16 %v1933
        %v1979 = vunpack.c.h.b16 %v1933
        %v1980 = vunpack.c.l.b16 %v1934
        %v1981 = vunpack.c.h.b16 %v1934
        %v1982 = vunpack.c.l.b16 %v1935
        %v1983 = vunpack.c.h.b16 %v1935
        %v1984 = vunpack.c.l.b16 %v1936
        %v1985 = vunpack.c.h.b16 %v1936
        %v1986 = vunpack.c.l.b16 %v1937
        %v1987 = vunpack.c.h.b16 %v1937
        %v1988 = vunpack.c.l.b16 %v1938
        %v1989 = vunpack.c.h.b16 %v1938
        %v1990 = vunpack.c.l.b16 %v1939
        %v1991 = vunpack.c.h.b16 %v1939
        %v1992 = vunpack.c.l.b16 %v1940
        %v1993 = vunpack.c.h.b16 %v1940
        %v1994 = vunpack.c.l.b16 %v1941
        %v1995 = vunpack.c.h.b16 %v1941
        %v1996 = vunpack.c.l.b16 %v1942
        %v1997 = vunpack.c.h.b16 %v1942
        %v1998 = vunpack.c.l.b16 %v1943
        %v1999 = vunpack.c.h.b16 %v1943
        %v2000 = vunpack.c.l.b16 %v1944
        %v2001 = vunpack.c.h.b16 %v1944
        %v2002 = vunpack.c.l.b16 %v1945
        %v2003 = vunpack.c.h.b16 %v1945
        %v2004 = vunpack.c.l.b16 %v1946
        %v2005 = vunpack.c.h.b16 %v1946
        %v2006 = vunpack.c.l.b16 %v1947
        %v2007 = vunpack.c.h.b16 %v1947
        %v2008 = vunpack.c.l.b16 %v1948
        %v2009 = vunpack.c.h.b16 %v1948
        %v2010 = vpack.c.b16 %v1980, %v1978
        %v2011 = vpack.c.b16 %v1981, %v1979
        %v2012 = vpack.c.b16 %v1984, %v1982
        %v2013 = vpack.c.b16 %v1985, %v1983
        %v2014 = vpack.c.b16 %v1988, %v1986
        %v2015 = vpack.c.b16 %v1989, %v1987
        %v2016 = vpack.c.b16 %v1992, %v1990
        %v2017 = vpack.c.b16 %v1993, %v1991
        %v2018 = vpack.c.b16 %v1996, %v1994
        %v2019 = vpack.c.b16 %v1997, %v1995
        %v2020 = vpack.c.b16 %v2000, %v1998
        %v2021 = vpack.c.b16 %v2001, %v1999
        %v2022 = vpack.c.b16 %v2004, %v2002
        %v2023 = vpack.c.b16 %v2005, %v2003
        %v2024 = vpack.c.b16 %v2008, %v2006
        %v2025 = vpack.c.b16 %v2009, %v2007
        %2042 = vmatprep.subr.bf16.mxu0 %v2025
        %2043 = vmatpush1.bf16.msra.mxu0 %v2024
        %2044 = vmatprep.subr.bf16.mxu0 %v2023
        %2045 = vmatpush1.bf16.msra.mxu0 %v2022
        %2046 = vmatprep.subr.bf16.mxu0 %v2021
        %2047 = vmatpush1.bf16.msra.mxu0 %v2020
        %2048 = vmatprep.subr.bf16.mxu0 %v2019
        %2049 = vmatpush1.bf16.msra.mxu0 %v2018
        %2050 = vmatprep.subr.bf16.mxu0 %v2017
        %2051 = vmatpush1.bf16.msra.mxu0 %v2016
        %2052 = vmatprep.subr.bf16.mxu0 %v2015
        %2053 = vmatpush1.bf16.msra.mxu0 %v2014
        %2054 = vmatprep.subr.bf16.mxu0 %v2013
        %2055 = vmatpush1.bf16.msra.mxu0 %v2012
        %2056 = vmatprep.subr.bf16.mxu0 %v2011
        %2057 = vmatpush1.bf16.msra.mxu0 %v2010
        %2058 = vmatprep.subr.bf16.mxu0 0
        %2059 = vmatpush2.bf16.msra.mxu0 0
        %2060 = vmatprep.subr.bf16.mxu0 0
        %2061 = vmatpush2.bf16.msra.mxu0 0
        %2062 = vmatprep.subr.bf16.mxu0 0
        %2063 = vmatpush2.bf16.msra.mxu0 0
        %2064 = vmatprep.subr.bf16.mxu0 0
        %2065 = vmatpush2.bf16.msra.mxu0 0
        %2066 = vmatprep.subr.bf16.mxu0 0
        %2067 = vmatpush2.bf16.msra.mxu0 0
        %2068 = vmatprep.subr.bf16.mxu0 0
        %2069 = vmatpush2.bf16.msra.mxu0 0
        %2070 = vmatprep.subr.bf16.mxu0 0
        %2071 = vmatpush2.bf16.msra.mxu0 0
        %2072 = vmatprep.subr.bf16.mxu0 0
        %2073 = vmatpush2.bf16.msra.mxu0 0
        %2074 = vmatprep.mubr.bf16.mxu0 0
        %2075 = vmatmul.mubr.bf16.gmra.mxu0 %v1950
        %v2076 = vpop.f32.mrf.mxu0
        %v2077 = vadd.f32 %v1955, %v2076
        %v2078 = vpop.f32.mrf.mxu0
        %v2079 = vadd.f32 %v1959, %v2078
        %v2080 = vpop.f32.mrf.mxu0
        %v2081 = vadd.f32 %v1955, %v2080
        %v2082 = vpop.f32.mrf.mxu0
        %v2083 = vadd.f32 %v1959, %v2082
        %2084 = vdwg.mxu0
        %v2085 = vmul.f32 %v2077, 0.5
        %v2086 = vmul.f32 %v2079, 0.5
        %v2087 = vmul.f32 %v2081, 0.5
        %v2088 = vmul.f32 %v2083, 0.5
        %v2089 = vmul.f32 %v2077, 0.044715
        %v2090 = vmul.f32 %v2079, 0.044715
        %v2091 = vmul.f32 %v2081, 0.044715
        %v2092 = vmul.f32 %v2083, 0.044715
        %v2093 = vmul.f32 %v2089, %v2077
        %v2094 = vmul.f32 %v2090, %v2079
        %v2095 = vmul.f32 %v2091, %v2081
        %v2096 = vmul.f32 %v2092, %v2083
        %v2097 = vmul.f32 %v2093, %v2077
        %v2098 = vmul.f32 %v2094, %v2079
        %v2099 = vmul.f32 %v2095, %v2081
        %v2100 = vmul.f32 %v2096, %v2083
        %v2101 = vadd.f32 %v2077, %v2097
        %v2102 = vadd.f32 %v2079, %v2098
        %v2103 = vadd.f32 %v2081, %v2099
        %v2104 = vadd.f32 %v2083, %v2100
        %v2105 = vmul.f32 %v2101, 0.7978846
        %v2106 = vmul.f32 %v2102, 0.7978846
        %v2107 = vmul.f32 %v2103, 0.7978846
        %v2108 = vmul.f32 %v2104, 0.7978846
        %v2109 = vtanh.pop %v2105
        %v2110 = vtanh.pop %v2106
        %v2111 = vtanh.pop %v2107
        %v2112 = vtanh.pop %v2108
        %v2113 = vadd.f32 %v2109, 1.0
        %v2114 = vadd.f32 %v2110, 1.0
        %v2115 = vadd.f32 %v2111, 1.0
        %v2116 = vadd.f32 %v2112, 1.0
        %v2117 = vmul.f32 %v2085, %v2113
        %v2118 = vmul.f32 %v2086, %v2114
        %v2119 = vmul.f32 %v2087, %v2115
        %v2120 = vmul.f32 %v2088, %v2116
        %v2121 = vld [vmem:[%s8] sm:$0xf]
        %v2122 = vld [vmem:[%s8 + $0x4] sm:$0xf]
        %v2123 = vld [vmem:[%s8 + $0x8] sm:$0xf]
        %v2124 = vld [vmem:[%s8 + $0xc] sm:$0xf]
        %v2125 = vld [vmem:[%s8 + $0x10] sm:$0xf]
        %v2126 = vld [vmem:[%s8 + $0x14] sm:$0xf]
        %v2127 = vld [vmem:[%s8 + $0x18] sm:$0xf]
        %v2128 = vld [vmem:[%s8 + $0x1c] sm:$0xf]
        %v2129 = vld [vmem:[%s8 + $0x20] sm:$0xf]
        %v2130 = vld [vmem:[%s8 + $0x24] sm:$0xf]
        %v2131 = vld [vmem:[%s8 + $0x28] sm:$0xf]
        %v2132 = vld [vmem:[%s8 + $0x2c] sm:$0xf]
        %v2133 = vld [vmem:[%s8 + $0x30] sm:$0xf]
        %v2134 = vld [vmem:[%s8 + $0x34] sm:$0xf]
        %v2135 = vld [vmem:[%s8 + $0x38] sm:$0xf]
        %v2136 = vld [vmem:[%s8 + $0x3c] sm:$0xf]
        %v2137 = vld [vmem:[%s8 + $0x40] sm:$0xf]
        %v2138 = vld [vmem:[%s8 + $0x44] sm:$0xf]
        %v2139 = vld [vmem:[%s8 + $0x48] sm:$0xf]
        %v2140 = vld [vmem:[%s8 + $0x4c] sm:$0xf]
        %v2141 = vld [vmem:[%s8 + $0x50] sm:$0xf]
        %v2142 = vld [vmem:[%s8 + $0x54] sm:$0xf]
        %v2143 = vld [vmem:[%s8 + $0x58] sm:$0xf]
        %v2144 = vld [vmem:[%s8 + $0x5c] sm:$0xf]
        %v2145 = vld [vmem:[%s8 + $0x60] sm:$0xf]
        %v2146 = vld [vmem:[%s8 + $0x64] sm:$0xf]
        %v2147 = vld [vmem:[%s8 + $0x68] sm:$0xf]
        %v2148 = vld [vmem:[%s8 + $0x6c] sm:$0xf]
        %v2149 = vld [vmem:[%s8 + $0x70] sm:$0xf]
        %v2150 = vld [vmem:[%s8 + $0x74] sm:$0xf]
        %v2151 = vld [vmem:[%s8 + $0x78] sm:$0xf]
        %v2152 = vld [vmem:[%s8 + $0x7c] sm:$0xf]
        %v2153 = vld [vmem:[%s9 + $0x3] sm:$0x1]
        %v2154 = vpack.c.bf16 %v2119, %v2117
        %v2155 = vpack.c.bf16 %v2120, %v2118
        %v2156 = vlaneseq
        %v2157 = vshrl.u32 %v2156, 7
        %v2158 = vsub.s32 0, %v2157
        %v2159 = vrot.slane %v2153, %v2158
        %v2192 = vunpack.c.l.b16 %v2121
        %v2193 = vunpack.c.l.b16 %v2122
        %v2194 = vunpack.c.l.b16 %v2123
        %v2195 = vunpack.c.l.b16 %v2124
        %v2196 = vunpack.c.l.b16 %v2125
        %v2197 = vunpack.c.l.b16 %v2126
        %v2198 = vunpack.c.l.b16 %v2127
        %v2199 = vunpack.c.l.b16 %v2128
        %v2200 = vunpack.c.l.b16 %v2129
        %v2201 = vunpack.c.l.b16 %v2130
        %v2202 = vunpack.c.l.b16 %v2131
        %v2203 = vunpack.c.l.b16 %v2132
        %v2204 = vunpack.c.l.b16 %v2133
        %v2205 = vunpack.c.l.b16 %v2134
        %v2206 = vunpack.c.l.b16 %v2135
        %v2207 = vunpack.c.l.b16 %v2136
        %v2208 = vunpack.c.l.b16 %v2137
        %v2209 = vunpack.c.l.b16 %v2138
        %v2210 = vunpack.c.l.b16 %v2139
        %v2211 = vunpack.c.l.b16 %v2140
        %v2212 = vunpack.c.l.b16 %v2141
        %v2213 = vunpack.c.l.b16 %v2142
        %v2214 = vunpack.c.l.b16 %v2143
        %v2215 = vunpack.c.l.b16 %v2144
        %v2216 = vunpack.c.l.b16 %v2145
        %v2217 = vunpack.c.l.b16 %v2146
        %v2218 = vunpack.c.l.b16 %v2147
        %v2219 = vunpack.c.l.b16 %v2148
        %v2220 = vunpack.c.l.b16 %v2149
        %v2221 = vunpack.c.l.b16 %v2150
        %v2222 = vunpack.c.l.b16 %v2151
        %v2223 = vunpack.c.l.b16 %v2152
        %v2224 = vpack.c.b16 %v2193, %v2192
        %v2225 = vpack.c.b16 %v2195, %v2194
        %v2226 = vpack.c.b16 %v2197, %v2196
        %v2227 = vpack.c.b16 %v2199, %v2198
        %v2228 = vpack.c.b16 %v2201, %v2200
        %v2229 = vpack.c.b16 %v2203, %v2202
        %v2230 = vpack.c.b16 %v2205, %v2204
        %v2231 = vpack.c.b16 %v2207, %v2206
        %v2232 = vpack.c.b16 %v2209, %v2208
        %v2233 = vpack.c.b16 %v2211, %v2210
        %v2234 = vpack.c.b16 %v2213, %v2212
        %v2235 = vpack.c.b16 %v2215, %v2214
        %v2236 = vpack.c.b16 %v2217, %v2216
        %v2237 = vpack.c.b16 %v2219, %v2218
        %v2238 = vpack.c.b16 %v2221, %v2220
        %v2239 = vpack.c.b16 %v2223, %v2222
        %2256 = vmatprep.subr.bf16.mxu0 0
        %2257 = vmatpush1.bf16.msra.mxu0 %v2231
        %2258 = vmatprep.subr.bf16.mxu0 0
        %2259 = vmatpush1.bf16.msra.mxu0 %v2230
        %2260 = vmatprep.subr.bf16.mxu0 0
        %2261 = vmatpush1.bf16.msra.mxu0 %v2229
        %2262 = vmatprep.subr.bf16.mxu0 0
        %2263 = vmatpush1.bf16.msra.mxu0 %v2228
        %2264 = vmatprep.subr.bf16.mxu0 0
        %2265 = vmatpush1.bf16.msra.mxu0 %v2227
        %2266 = vmatprep.subr.bf16.mxu0 0
        %2267 = vmatpush1.bf16.msra.mxu0 %v2226
        %2268 = vmatprep.subr.bf16.mxu0 0
        %2269 = vmatpush1.bf16.msra.mxu0 %v2225
        %2270 = vmatprep.subr.bf16.mxu0 0
        %2271 = vmatpush1.bf16.msra.mxu0 %v2224
        %2272 = vmatprep.subr.bf16.mxu0 0
        %2273 = vmatpush2.bf16.msra.mxu0 %v2239
        %2274 = vmatprep.subr.bf16.mxu0 0
        %2275 = vmatpush2.bf16.msra.mxu0 %v2238
        %2276 = vmatprep.subr.bf16.mxu0 0
        %2277 = vmatpush2.bf16.msra.mxu0 %v2237
        %2278 = vmatprep.subr.bf16.mxu0 0
        %2279 = vmatpush2.bf16.msra.mxu0 %v2236
        %2280 = vmatprep.subr.bf16.mxu0 0
        %2281 = vmatpush2.bf16.msra.mxu0 %v2235
        %2282 = vmatprep.subr.bf16.mxu0 0
        %2283 = vmatpush2.bf16.msra.mxu0 %v2234
        %2284 = vmatprep.subr.bf16.mxu0 0
        %2285 = vmatpush2.bf16.msra.mxu0 %v2233
        %2286 = vmatprep.subr.bf16.mxu0 0
        %2287 = vmatpush2.bf16.msra.mxu0 %v2232
        %2288 = vmatprep.mubr.bf16.mxu0 %v2155
        %2289 = vmatmul.mubr.bf16.gmra.mxu0 %v2154
        %v2290 = vpop.f32.mrf.mxu0
        %v2291 = vadd.f32 %v2159, %v2290
        %v2292 = vpop.f32.mrf.mxu0
        %v2293 = vpop.f32.mrf.mxu0
        %v2294 = vadd.f32 %v2159, %v2293
        %v2295 = vpop.f32.mrf.mxu0
        %2296 = vdwg.mxu0
        %v2297 = vadd.f32 %v2291, %v1931
        %v2298 = vadd.f32 %v2294, %v1932
        %v2299 = vld [vmem:[%s9 + $0x4] sm:$0x1]
        %v2300 = vld [vmem:[%s9 + $0x5] sm:$0x1]
        %2301 = vadd.xlane.f32.xlu0 %v2297
        %v2302 = vpop.xlane.xlu0 %2301
        %2303 = vadd.xlane.f32.xlu0 %v2298
        %v2304 = vpop.xlane.xlu0 %2303
        %v2305 = vmul.f32 %v2302, %v460
        %v2306 = vmul.f32 %v2304, %v460
        %v2307 = vsub.f32 %v2297, %v2305
        %v2308 = vsub.f32 %v2298, %v2306
        %v2309 = vmul.f32 %v2307, %v2307
        %v2310 = vmul.f32 %v2308, %v2308
        %2311 = vadd.xlane.f32.xlu0 %v2309
        %v2312 = vpop.xlane.xlu0 %2311
        %2313 = vadd.xlane.f32.xlu0 %v2310
        %v2314 = vpop.xlane.xlu0 %2313
        %v2315 = vmul.f32 %v2312, %v460
        %v2316 = vmul.f32 %v2314, %v460
        %v2317 = vadd.f32 %v2315, 1e-12
        %v2318 = vadd.f32 %v2316, 1e-12
        %v2319 = vrsqrt.pop %v2317
        %v2320 = vrsqrt.pop %v2318
        %v2321 = vmul.f32 %v2307, %v2319
        %v2322 = vmul.f32 %v2308, %v2320
        %v2323 = vlaneseq
        %v2324 = vshrl.u32 %v2323, 7
        %v2325 = vsub.s32 0, %v2324
        %v2326 = vrot.slane %v2299, %v2325
        %v2327 = vmul.f32 %v2321, %v2326
        %v2328 = vmul.f32 %v2322, %v2326
        %v2329 = vlaneseq
        %v2330 = vshrl.u32 %v2329, 7
        %v2331 = vsub.s32 0, %v2330
        %v2332 = vrot.slane %v2300, %v2331
        %v2333 = vadd.f32 %v2327, %v2332
        %v2334 = vadd.f32 %v2328, %v2332
        %v2335 = vpack.c.bf16 %v2334, %v2333
        %s2336 = scalar_lea.vmem %s3, 192
        %v2337 = vld [vmem:[%s2336] sm:$0xf]
        %v2338 = vld [vmem:[%s2336 + $0x4] sm:$0xf]
        %v2339 = vld [vmem:[%s2336 + $0x8] sm:$0xf]
        %v2340 = vld [vmem:[%s2336 + $0xc] sm:$0xf]
        %s2341 = scalar_lea.vmem %s4, 12
        %v2342 = vld [vmem:[%s2341] sm:$0x1]
        %v2344 = vlaneseq
        %v2345 = vshrl.u32 %v2344, 7
        %v2346 = vsub.s32 0, %v2345
        %v2347 = vrot.slane %v2342, %v2346
        %v2353 = vunpack.c.l.b16 %v2337
        %v2354 = vunpack.c.l.b16 %v2338
        %v2355 = vunpack.c.l.b16 %v2339
        %v2356 = vunpack.c.l.b16 %v2340
        %v2357 = vpack.c.b16 %v2354, %v2353
        %v2358 = vpack.c.b16 %v2356, %v2355
        %2361 = vmatprep.subr.bf16.mxu0 0
        %2362 = vmatpush1.bf16.xpose.msra.mxu0 0
        %2363 = vmatprep.subr.bf16.mxu0 0
        %2364 = vmatpush1.bf16.xpose.msra.mxu0 0
        %2365 = vmatprep.subr.bf16.mxu0 0
        %2366 = vmatpush1.bf16.xpose.msra.mxu0 0
        %2367 = vmatprep.subr.bf16.mxu0 0
        %2368 = vmatpush1.bf16.xpose.msra.mxu0 0
        %2369 = vmatprep.subr.bf16.mxu0 0
        %2370 = vmatpush1.bf16.xpose.msra.mxu0 0
        %2371 = vmatprep.subr.bf16.mxu0 0
        %2372 = vmatpush1.bf16.xpose.msra.mxu0 0
        %2373 = vmatprep.subr.bf16.mxu0 0
        %2374 = vmatpush1.bf16.xpose.msra.mxu0 %v2358
        %2375 = vmatprep.subr.bf16.mxu0 0
        %2376 = vmatpush1.bf16.xpose.msra.mxu0 %v2357
        %2377 = vmatprep.subr.bf16.mxu0 0
        %2378 = vmatpush2.bf16.xpose.msra.mxu0 0
        %2379 = vmatprep.subr.bf16.mxu0 0
        %2380 = vmatpush2.bf16.xpose.msra.mxu0 0
        %2381 = vmatprep.subr.bf16.mxu0 0
        %2382 = vmatpush2.bf16.xpose.msra.mxu0 0
        %2383 = vmatprep.subr.bf16.mxu0 0
        %2384 = vmatpush2.bf16.xpose.msra.mxu0 0
        %2385 = vmatprep.subr.bf16.mxu0 0
        %2386 = vmatpush2.bf16.xpose.msra.mxu0 0
        %2387 = vmatprep.subr.bf16.mxu0 0
        %2388 = vmatpush2.bf16.xpose.msra.mxu0 0
        %2389 = vmatprep.subr.bf16.mxu0 0
        %2390 = vmatpush2.bf16.xpose.msra.mxu0 0
        %2391 = vmatprep.subr.bf16.mxu0 0
        %2392 = vmatpush2.bf16.xpose.msra.mxu0 0
        %2393 = vmatprep.mubr.bf16.mxu0 0
        %2394 = vmatmul.mubr.bf16.gmra.mxu0 %v2335
        %v2395 = vpop.f32.mrf.mxu0
        %v2396 = vadd.f32 %v2347, %v2395
        %v2397 = vpop.f32.mrf.mxu0
        %v2398 = vpop.f32.mrf.mxu0
        %v2399 = vadd.f32 %v2347, %v2398
        %v2400 = vpop.f32.mrf.mxu0
        %2401 = vdwg.mxu0
        %s2402 = scalar_lea.vmem %s3, 256
        %v2403 = vld [vmem:[%s2402] sm:$0xf]
        %v2404 = vld [vmem:[%s2402 + $0x4] sm:$0xf]
        %v2405 = vld [vmem:[%s2402 + $0x8] sm:$0xf]
        %v2406 = vld [vmem:[%s2402 + $0xc] sm:$0xf]
        %s2407 = scalar_lea.vmem %s4, 16
        %v2408 = vld [vmem:[%s2407] sm:$0x1]
        %v2410 = vlaneseq
        %v2411 = vshrl.u32 %v2410, 7
        %v2412 = vsub.s32 0, %v2411
        %v2413 = vrot.slane %v2408, %v2412
        %v2419 = vunpack.c.l.b16 %v2403
        %v2420 = vunpack.c.l.b16 %v2404
        %v2421 = vunpack.c.l.b16 %v2405
        %v2422 = vunpack.c.l.b16 %v2406
        %v2423 = vpack.c.b16 %v2420, %v2419
        %v2424 = vpack.c.b16 %v2422, %v2421
        %2427 = vmatprep.subr.bf16.mxu0 0
        %2428 = vmatpush1.bf16.xpose.msra.mxu0 0
        %2429 = vmatprep.subr.bf16.mxu0 0
        %2430 = vmatpush1.bf16.xpose.msra.mxu0 0
        %2431 = vmatprep.subr.bf16.mxu0 0
        %2432 = vmatpush1.bf16.xpose.msra.mxu0 0
        %2433 = vmatprep.subr.bf16.mxu0 0
        %2434 = vmatpush1.bf16.xpose.msra.mxu0 0
        %2435 = vmatprep.subr.bf16.mxu0 0
        %2436 = vmatpush1.bf16.xpose.msra.mxu0 0
        %2437 = vmatprep.subr.bf16.mxu0 0
        %2438 = vmatpush1.bf16.xpose.msra.mxu0 0
        %2439 = vmatprep.subr.bf16.mxu0 0
        %2440 = vmatpush1.bf16.xpose.msra.mxu0 %v2424
        %2441 = vmatprep.subr.bf16.mxu0 0
        %2442 = vmatpush1.bf16.xpose.msra.mxu0 %v2423
        %2443 = vmatprep.subr.bf16.mxu0 0
        %2444 = vmatpush2.bf16.xpose.msra.mxu0 0
        %2445 = vmatprep.subr.bf16.mxu0 0
        %2446 = vmatpush2.bf16.xpose.msra.mxu0 0
        %2447 = vmatprep.subr.bf16.mxu0 0
        %2448 = vmatpush2.bf16.xpose.msra.mxu0 0
        %2449 = vmatprep.subr.bf16.mxu0 0
        %2450 = vmatpush2.bf16.xpose.msra.mxu0 0
        %2451 = vmatprep.subr.bf16.mxu0 0
        %2452 = vmatpush2.bf16.xpose.msra.mxu0 0
        %2453 = vmatprep.subr.bf16.mxu0 0
        %2454 = vmatpush2.bf16.xpose.msra.mxu0 0
        %2455 = vmatprep.subr.bf16.mxu0 0
        %2456 = vmatpush2.bf16.xpose.msra.mxu0 0
        %2457 = vmatprep.subr.bf16.mxu0 0
        %2458 = vmatpush2.bf16.xpose.msra.mxu0 0
        %2459 = vmatprep.mubr.bf16.mxu0 0
        %2460 = vmatmul.mubr.bf16.gmra.mxu0 %v2335
        %v2461 = vpop.f32.mrf.mxu0
        %v2462 = vadd.f32 %v2413, %v2461
        %v2463 = vpop.f32.mrf.mxu0
        %v2464 = vpop.f32.mrf.mxu0
        %v2465 = vadd.f32 %v2413, %v2464
        %v2466 = vpop.f32.mrf.mxu0
        %2467 = vdwg.mxu0
        %s2468 = scalar_lea.vmem %s3, 320
        %v2469 = vld [vmem:[%s2468] sm:$0xf]
        %v2470 = vld [vmem:[%s2468 + $0x4] sm:$0xf]
        %v2471 = vld [vmem:[%s2468 + $0x8] sm:$0xf]
        %v2472 = vld [vmem:[%s2468 + $0xc] sm:$0xf]
        %s2473 = scalar_lea.vmem %s4, 20
        %v2474 = vld [vmem:[%s2473] sm:$0x1]
        %v2476 = vlaneseq
        %v2477 = vshrl.u32 %v2476, 7
        %v2478 = vsub.s32 0, %v2477
        %v2479 = vrot.slane %v2474, %v2478
        %v2485 = vunpack.c.l.b16 %v2469
        %v2486 = vunpack.c.l.b16 %v2470
        %v2487 = vunpack.c.l.b16 %v2471
        %v2488 = vunpack.c.l.b16 %v2472
        %v2489 = vpack.c.b16 %v2486, %v2485
        %v2490 = vpack.c.b16 %v2488, %v2487
        %2493 = vmatprep.subr.bf16.mxu0 0
        %2494 = vmatpush1.bf16.xpose.msra.mxu0 0
        %2495 = vmatprep.subr.bf16.mxu0 0
        %2496 = vmatpush1.bf16.xpose.msra.mxu0 0
        %2497 = vmatprep.subr.bf16.mxu0 0
        %2498 = vmatpush1.bf16.xpose.msra.mxu0 0
        %2499 = vmatprep.subr.bf16.mxu0 0
        %2500 = vmatpush1.bf16.xpose.msra.mxu0 0
        %2501 = vmatprep.subr.bf16.mxu0 0
        %2502 = vmatpush1.bf16.xpose.msra.mxu0 0
        %2503 = vmatprep.subr.bf16.mxu0 0
        %2504 = vmatpush1.bf16.xpose.msra.mxu0 0
        %2505 = vmatprep.subr.bf16.mxu0 0
        %2506 = vmatpush1.bf16.xpose.msra.mxu0 %v2490
        %2507 = vmatprep.subr.bf16.mxu0 0
        %2508 = vmatpush1.bf16.xpose.msra.mxu0 %v2489
        %2509 = vmatprep.subr.bf16.mxu0 0
        %2510 = vmatpush2.bf16.xpose.msra.mxu0 0
        %2511 = vmatprep.subr.bf16.mxu0 0
        %2512 = vmatpush2.bf16.xpose.msra.mxu0 0
        %2513 = vmatprep.subr.bf16.mxu0 0
        %2514 = vmatpush2.bf16.xpose.msra.mxu0 0
        %2515 = vmatprep.subr.bf16.mxu0 0
        %2516 = vmatpush2.bf16.xpose.msra.mxu0 0
        %2517 = vmatprep.subr.bf16.mxu0 0
        %2518 = vmatpush2.bf16.xpose.msra.mxu0 0
        %2519 = vmatprep.subr.bf16.mxu0 0
        %2520 = vmatpush2.bf16.xpose.msra.mxu0 0
        %2521 = vmatprep.subr.bf16.mxu0 0
        %2522 = vmatpush2.bf16.xpose.msra.mxu0 0
        %2523 = vmatprep.subr.bf16.mxu0 0
        %2524 = vmatpush2.bf16.xpose.msra.mxu0 0
        %2525 = vmatprep.mubr.bf16.mxu0 0
        %2526 = vmatmul.mubr.bf16.gmra.mxu0 %v2335
        %v2527 = vpop.f32.mrf.mxu0
        %v2528 = vadd.f32 %v2479, %v2527
        %v2529 = vpop.f32.mrf.mxu0
        %v2530 = vpop.f32.mrf.mxu0
        %v2531 = vadd.f32 %v2479, %v2530
        %v2532 = vpop.f32.mrf.mxu0
        %2533 = vdwg.mxu0
        %v2534 = vpack.c.bf16 %v2399, %v2396
        %v2535 = vpack.c.bf16 %v2465, %v2462
        %v2537 = vsel %vm690, %v2534, 0
        %v2540 = vsel %vm690, %v2535, 0
        %2542 = vmatprep.subr.bf16.mxu0 0
        %2543 = vmatpush1.bf16.xpose.msra.mxu0 0
        %2544 = vmatprep.subr.bf16.mxu0 0
        %2545 = vmatpush1.bf16.xpose.msra.mxu0 0
        %2546 = vmatprep.subr.bf16.mxu0 0
        %2547 = vmatpush1.bf16.xpose.msra.mxu0 0
        %2548 = vmatprep.subr.bf16.mxu0 0
        %2549 = vmatpush1.bf16.xpose.msra.mxu0 0
        %2550 = vmatprep.subr.bf16.mxu0 0
        %2551 = vmatpush1.bf16.xpose.msra.mxu0 0
        %2552 = vmatprep.subr.bf16.mxu0 0
        %2553 = vmatpush1.bf16.xpose.msra.mxu0 0
        %2554 = vmatprep.subr.bf16.mxu0 0
        %2555 = vmatpush1.bf16.xpose.msra.mxu0 0
        %2556 = vmatprep.subr.bf16.mxu0 0
        %2557 = vmatpush1.bf16.xpose.msra.mxu0 %v2540
        %2558 = vmatprep.subr.bf16.mxu0 0
        %2559 = vmatpush2.bf16.xpose.msra.mxu0 0
        %2560 = vmatprep.subr.bf16.mxu0 0
        %2561 = vmatpush2.bf16.xpose.msra.mxu0 0
        %2562 = vmatprep.subr.bf16.mxu0 0
        %2563 = vmatpush2.bf16.xpose.msra.mxu0 0
        %2564 = vmatprep.subr.bf16.mxu0 0
        %2565 = vmatpush2.bf16.xpose.msra.mxu0 0
        %2566 = vmatprep.subr.bf16.mxu0 0
        %2567 = vmatpush2.bf16.xpose.msra.mxu0 0
        %2568 = vmatprep.subr.bf16.mxu0 0
        %2569 = vmatpush2.bf16.xpose.msra.mxu0 0
        %2570 = vmatprep.subr.bf16.mxu0 0
        %2571 = vmatpush2.bf16.xpose.msra.mxu0 0
        %2572 = vmatprep.subr.bf16.mxu0 0
        %2573 = vmatpush2.bf16.xpose.msra.mxu0 0
        %2574 = vmatprep.mubr.bf16.mxu0 0
        %2575 = vmatmul.mubr.bf16.gmra.mxu0 %v2537
        %v2576 = vpop.f32.mrf.mxu0
        %v2577 = vadd.f32 %v450, %v2576
        %v2578 = vpop.f32.mrf.mxu0
        %v2579 = vpop.f32.mrf.mxu0
        %v2580 = vadd.f32 %v451, %v2579
        %v2581 = vpop.f32.mrf.mxu0
        %2582 = vdwg.mxu0
        %v2583 = vsel %vm738, %v2577, -inf
        %2584 = vmax.xlane.f32.xlu0 %v2583
        %v2585 = vpop.xlane.xlu0 %2584
        %v2586 = vsel %vm738, %v2580, -inf
        %2587 = vmax.xlane.f32.xlu0 %v2586
        %v2588 = vpop.xlane.xlu0 %2587
        %v2589 = vsub.f32 %v2577, %v2585
        %v2590 = vsub.f32 %v2580, %v2588
        %v2591 = vmul.f32 %v2589, 1.442695
        %v2592 = vpow.pop %v2591
        %v2593 = vmul.f32 %v2590, 1.442695
        %v2594 = vpow.pop %v2593
        %v2595 = vsel %vm738, %v2592, 0.0
        %2596 = vadd.xlane.f32.xlu0 %v2595
        %v2597 = vpop.xlane.xlu0 %2596
        %v2598 = vsel %vm738, %v2594, 0.0
        %2599 = vadd.xlane.f32.xlu0 %v2598
        %v2600 = vpop.xlane.xlu0 %2599
        %v2601 = vrcp.pop %v2597
        %v2602 = vrcp.pop %v2600
        %v2603 = vmul.f32 %v2592, %v2601
        %v2604 = vmul.f32 %v2594, %v2602
        %v2605 = vpack.c.bf16 %v2604, %v2603
        %v2606 = vpack.c.bf16 %v2531, %v2528
        %v2608 = vsel %vm738, %v2605, 0
        %2610 = vmatprep.subr.bf16.mxu0 0
        %2611 = vmatpush1.bf16.msra.mxu0 0
        %2612 = vmatprep.subr.bf16.mxu0 0
        %2613 = vmatpush1.bf16.msra.mxu0 0
        %2614 = vmatprep.subr.bf16.mxu0 0
        %2615 = vmatpush1.bf16.msra.mxu0 0
        %2616 = vmatprep.subr.bf16.mxu0 0
        %2617 = vmatpush1.bf16.msra.mxu0 0
        %2618 = vmatprep.subr.bf16.mxu0 0
        %2619 = vmatpush1.bf16.msra.mxu0 0
        %2620 = vmatprep.subr.bf16.mxu0 0
        %2621 = vmatpush1.bf16.msra.mxu0 0
        %2622 = vmatprep.subr.bf16.mxu0 0
        %2623 = vmatpush1.bf16.msra.mxu0 0
        %2624 = vmatprep.subr.bf16.mxu0 0
        %2625 = vmatpush1.bf16.msra.mxu0 %v2606
        %2626 = vmatprep.subr.bf16.mxu0 0
        %2627 = vmatpush2.bf16.msra.mxu0 0
        %2628 = vmatprep.subr.bf16.mxu0 0
        %2629 = vmatpush2.bf16.msra.mxu0 0
        %2630 = vmatprep.subr.bf16.mxu0 0
        %2631 = vmatpush2.bf16.msra.mxu0 0
        %2632 = vmatprep.subr.bf16.mxu0 0
        %2633 = vmatpush2.bf16.msra.mxu0 0
        %2634 = vmatprep.subr.bf16.mxu0 0
        %2635 = vmatpush2.bf16.msra.mxu0 0
        %2636 = vmatprep.subr.bf16.mxu0 0
        %2637 = vmatpush2.bf16.msra.mxu0 0
        %2638 = vmatprep.subr.bf16.mxu0 0
        %2639 = vmatpush2.bf16.msra.mxu0 0
        %2640 = vmatprep.subr.bf16.mxu0 0
        %2641 = vmatpush2.bf16.msra.mxu0 0
        %2642 = vmatprep.mubr.bf16.mxu0 0
        %2643 = vmatmul.mubr.bf16.gmra.mxu0 %v2608
        %v2644 = vpop.f32.mrf.mxu0
        %v2645 = vadd.f32 0.0, %v2644
        %v2646 = vpop.f32.mrf.mxu0
        %v2647 = vpop.f32.mrf.mxu0
        %v2648 = vadd.f32 0.0, %v2647
        %v2649 = vpop.f32.mrf.mxu0
        %2650 = vdwg.mxu0
        %s2651 = scalar_lea.vmem %s3, 208
        %v2652 = vld [vmem:[%s2651] sm:$0xf]
        %v2653 = vld [vmem:[%s2651 + $0x4] sm:$0xf]
        %v2654 = vld [vmem:[%s2651 + $0x8] sm:$0xf]
        %v2655 = vld [vmem:[%s2651 + $0xc] sm:$0xf]
        %s2656 = scalar_lea.vmem %s4, 13
        %v2657 = vld [vmem:[%s2656] sm:$0x1]
        %v2659 = vlaneseq
        %v2660 = vshrl.u32 %v2659, 7
        %v2661 = vsub.s32 0, %v2660
        %v2662 = vrot.slane %v2657, %v2661
        %v2668 = vunpack.c.l.b16 %v2652
        %v2669 = vunpack.c.l.b16 %v2653
        %v2670 = vunpack.c.l.b16 %v2654
        %v2671 = vunpack.c.l.b16 %v2655
        %v2672 = vpack.c.b16 %v2669, %v2668
        %v2673 = vpack.c.b16 %v2671, %v2670
        %2676 = vmatprep.subr.bf16.mxu0 0
        %2677 = vmatpush1.bf16.xpose.msra.mxu0 0
        %2678 = vmatprep.subr.bf16.mxu0 0
        %2679 = vmatpush1.bf16.xpose.msra.mxu0 0
        %2680 = vmatprep.subr.bf16.mxu0 0
        %2681 = vmatpush1.bf16.xpose.msra.mxu0 0
        %2682 = vmatprep.subr.bf16.mxu0 0
        %2683 = vmatpush1.bf16.xpose.msra.mxu0 0
        %2684 = vmatprep.subr.bf16.mxu0 0
        %2685 = vmatpush1.bf16.xpose.msra.mxu0 0
        %2686 = vmatprep.subr.bf16.mxu0 0
        %2687 = vmatpush1.bf16.xpose.msra.mxu0 0
        %2688 = vmatprep.subr.bf16.mxu0 0
        %2689 = vmatpush1.bf16.xpose.msra.mxu0 %v2673
        %2690 = vmatprep.subr.bf16.mxu0 0
        %2691 = vmatpush1.bf16.xpose.msra.mxu0 %v2672
        %2692 = vmatprep.subr.bf16.mxu0 0
        %2693 = vmatpush2.bf16.xpose.msra.mxu0 0
        %2694 = vmatprep.subr.bf16.mxu0 0
        %2695 = vmatpush2.bf16.xpose.msra.mxu0 0
        %2696 = vmatprep.subr.bf16.mxu0 0
        %2697 = vmatpush2.bf16.xpose.msra.mxu0 0
        %2698 = vmatprep.subr.bf16.mxu0 0
        %2699 = vmatpush2.bf16.xpose.msra.mxu0 0
        %2700 = vmatprep.subr.bf16.mxu0 0
        %2701 = vmatpush2.bf16.xpose.msra.mxu0 0
        %2702 = vmatprep.subr.bf16.mxu0 0
        %2703 = vmatpush2.bf16.xpose.msra.mxu0 0
        %2704 = vmatprep.subr.bf16.mxu0 0
        %2705 = vmatpush2.bf16.xpose.msra.mxu0 0
        %2706 = vmatprep.subr.bf16.mxu0 0
        %2707 = vmatpush2.bf16.xpose.msra.mxu0 0
        %2708 = vmatprep.mubr.bf16.mxu0 0
        %2709 = vmatmul.mubr.bf16.gmra.mxu0 %v2335
        %v2710 = vpop.f32.mrf.mxu0
        %v2711 = vadd.f32 %v2662, %v2710
        %v2712 = vpop.f32.mrf.mxu0
        %v2713 = vpop.f32.mrf.mxu0
        %v2714 = vadd.f32 %v2662, %v2713
        %v2715 = vpop.f32.mrf.mxu0
        %2716 = vdwg.mxu0
        %s2717 = scalar_lea.vmem %s3, 272
        %v2718 = vld [vmem:[%s2717] sm:$0xf]
        %v2719 = vld [vmem:[%s2717 + $0x4] sm:$0xf]
        %v2720 = vld [vmem:[%s2717 + $0x8] sm:$0xf]
        %v2721 = vld [vmem:[%s2717 + $0xc] sm:$0xf]
        %s2722 = scalar_lea.vmem %s4, 17
        %v2723 = vld [vmem:[%s2722] sm:$0x1]
        %v2725 = vlaneseq
        %v2726 = vshrl.u32 %v2725, 7
        %v2727 = vsub.s32 0, %v2726
        %v2728 = vrot.slane %v2723, %v2727
        %v2734 = vunpack.c.l.b16 %v2718
        %v2735 = vunpack.c.l.b16 %v2719
        %v2736 = vunpack.c.l.b16 %v2720
        %v2737 = vunpack.c.l.b16 %v2721
        %v2738 = vpack.c.b16 %v2735, %v2734
        %v2739 = vpack.c.b16 %v2737, %v2736
        %2742 = vmatprep.subr.bf16.mxu0 0
        %2743 = vmatpush1.bf16.xpose.msra.mxu0 0
        %2744 = vmatprep.subr.bf16.mxu0 0
        %2745 = vmatpush1.bf16.xpose.msra.mxu0 0
        %2746 = vmatprep.subr.bf16.mxu0 0
        %2747 = vmatpush1.bf16.xpose.msra.mxu0 0
        %2748 = vmatprep.subr.bf16.mxu0 0
        %2749 = vmatpush1.bf16.xpose.msra.mxu0 0
        %2750 = vmatprep.subr.bf16.mxu0 0
        %2751 = vmatpush1.bf16.xpose.msra.mxu0 0
        %2752 = vmatprep.subr.bf16.mxu0 0
        %2753 = vmatpush1.bf16.xpose.msra.mxu0 0
        %2754 = vmatprep.subr.bf16.mxu0 0
        %2755 = vmatpush1.bf16.xpose.msra.mxu0 %v2739
        %2756 = vmatprep.subr.bf16.mxu0 0
        %2757 = vmatpush1.bf16.xpose.msra.mxu0 %v2738
        %2758 = vmatprep.subr.bf16.mxu0 0
        %2759 = vmatpush2.bf16.xpose.msra.mxu0 0
        %2760 = vmatprep.subr.bf16.mxu0 0
        %2761 = vmatpush2.bf16.xpose.msra.mxu0 0
        %2762 = vmatprep.subr.bf16.mxu0 0
        %2763 = vmatpush2.bf16.xpose.msra.mxu0 0
        %2764 = vmatprep.subr.bf16.mxu0 0
        %2765 = vmatpush2.bf16.xpose.msra.mxu0 0
        %2766 = vmatprep.subr.bf16.mxu0 0
        %2767 = vmatpush2.bf16.xpose.msra.mxu0 0
        %2768 = vmatprep.subr.bf16.mxu0 0
        %2769 = vmatpush2.bf16.xpose.msra.mxu0 0
        %2770 = vmatprep.subr.bf16.mxu0 0
        %2771 = vmatpush2.bf16.xpose.msra.mxu0 0
        %2772 = vmatprep.subr.bf16.mxu0 0
        %2773 = vmatpush2.bf16.xpose.msra.mxu0 0
        %2774 = vmatprep.mubr.bf16.mxu0 0
        %2775 = vmatmul.mubr.bf16.gmra.mxu0 %v2335
        %v2776 = vpop.f32.mrf.mxu0
        %v2777 = vadd.f32 %v2728, %v2776
        %v2778 = vpop.f32.mrf.mxu0
        %v2779 = vpop.f32.mrf.mxu0
        %v2780 = vadd.f32 %v2728, %v2779
        %v2781 = vpop.f32.mrf.mxu0
        %2782 = vdwg.mxu0
        %s2783 = scalar_lea.vmem %s3, 336
        %v2784 = vld [vmem:[%s2783] sm:$0xf]
        %v2785 = vld [vmem:[%s2783 + $0x4] sm:$0xf]
        %v2786 = vld [vmem:[%s2783 + $0x8] sm:$0xf]
        %v2787 = vld [vmem:[%s2783 + $0xc] sm:$0xf]
        %s2788 = scalar_lea.vmem %s4, 21
        %v2789 = vld [vmem:[%s2788] sm:$0x1]
        %v2791 = vlaneseq
        %v2792 = vshrl.u32 %v2791, 7
        %v2793 = vsub.s32 0, %v2792
        %v2794 = vrot.slane %v2789, %v2793
        %v2800 = vunpack.c.l.b16 %v2784
        %v2801 = vunpack.c.l.b16 %v2785
        %v2802 = vunpack.c.l.b16 %v2786
        %v2803 = vunpack.c.l.b16 %v2787
        %v2804 = vpack.c.b16 %v2801, %v2800
        %v2805 = vpack.c.b16 %v2803, %v2802
        %2808 = vmatprep.subr.bf16.mxu0 0
        %2809 = vmatpush1.bf16.xpose.msra.mxu0 0
        %2810 = vmatprep.subr.bf16.mxu0 0
        %2811 = vmatpush1.bf16.xpose.msra.mxu0 0
        %2812 = vmatprep.subr.bf16.mxu0 0
        %2813 = vmatpush1.bf16.xpose.msra.mxu0 0
        %2814 = vmatprep.subr.bf16.mxu0 0
        %2815 = vmatpush1.bf16.xpose.msra.mxu0 0
        %2816 = vmatprep.subr.bf16.mxu0 0
        %2817 = vmatpush1.bf16.xpose.msra.mxu0 0
        %2818 = vmatprep.subr.bf16.mxu0 0
        %2819 = vmatpush1.bf16.xpose.msra.mxu0 0
        %2820 = vmatprep.subr.bf16.mxu0 0
        %2821 = vmatpush1.bf16.xpose.msra.mxu0 %v2805
        %2822 = vmatprep.subr.bf16.mxu0 0
        %2823 = vmatpush1.bf16.xpose.msra.mxu0 %v2804
        %2824 = vmatprep.subr.bf16.mxu0 0
        %2825 = vmatpush2.bf16.xpose.msra.mxu0 0
        %2826 = vmatprep.subr.bf16.mxu0 0
        %2827 = vmatpush2.bf16.xpose.msra.mxu0 0
        %2828 = vmatprep.subr.bf16.mxu0 0
        %2829 = vmatpush2.bf16.xpose.msra.mxu0 0
        %2830 = vmatprep.subr.bf16.mxu0 0
        %2831 = vmatpush2.bf16.xpose.msra.mxu0 0
        %2832 = vmatprep.subr.bf16.mxu0 0
        %2833 = vmatpush2.bf16.xpose.msra.mxu0 0
        %2834 = vmatprep.subr.bf16.mxu0 0
        %2835 = vmatpush2.bf16.xpose.msra.mxu0 0
        %2836 = vmatprep.subr.bf16.mxu0 0
        %2837 = vmatpush2.bf16.xpose.msra.mxu0 0
        %2838 = vmatprep.subr.bf16.mxu0 0
        %2839 = vmatpush2.bf16.xpose.msra.mxu0 0
        %2840 = vmatprep.mubr.bf16.mxu0 0
        %2841 = vmatmul.mubr.bf16.gmra.mxu0 %v2335
        %v2842 = vpop.f32.mrf.mxu0
        %v2843 = vadd.f32 %v2794, %v2842
        %v2844 = vpop.f32.mrf.mxu0
        %v2845 = vpop.f32.mrf.mxu0
        %v2846 = vadd.f32 %v2794, %v2845
        %v2847 = vpop.f32.mrf.mxu0
        %2848 = vdwg.mxu0
        %v2849 = vpack.c.bf16 %v2714, %v2711
        %v2850 = vpack.c.bf16 %v2780, %v2777
        %v2852 = vsel %vm690, %v2849, 0
        %v2855 = vsel %vm690, %v2850, 0
        %2857 = vmatprep.subr.bf16.mxu0 0
        %2858 = vmatpush1.bf16.xpose.msra.mxu0 0
        %2859 = vmatprep.subr.bf16.mxu0 0
        %2860 = vmatpush1.bf16.xpose.msra.mxu0 0
        %2861 = vmatprep.subr.bf16.mxu0 0
        %2862 = vmatpush1.bf16.xpose.msra.mxu0 0
        %2863 = vmatprep.subr.bf16.mxu0 0
        %2864 = vmatpush1.bf16.xpose.msra.mxu0 0
        %2865 = vmatprep.subr.bf16.mxu0 0
        %2866 = vmatpush1.bf16.xpose.msra.mxu0 0
        %2867 = vmatprep.subr.bf16.mxu0 0
        %2868 = vmatpush1.bf16.xpose.msra.mxu0 0
        %2869 = vmatprep.subr.bf16.mxu0 0
        %2870 = vmatpush1.bf16.xpose.msra.mxu0 0
        %2871 = vmatprep.subr.bf16.mxu0 0
        %2872 = vmatpush1.bf16.xpose.msra.mxu0 %v2855
        %2873 = vmatprep.subr.bf16.mxu0 0
        %2874 = vmatpush2.bf16.xpose.msra.mxu0 0
        %2875 = vmatprep.subr.bf16.mxu0 0
        %2876 = vmatpush2.bf16.xpose.msra.mxu0 0
        %2877 = vmatprep.subr.bf16.mxu0 0
        %2878 = vmatpush2.bf16.xpose.msra.mxu0 0
        %2879 = vmatprep.subr.bf16.mxu0 0
        %2880 = vmatpush2.bf16.xpose.msra.mxu0 0
        %2881 = vmatprep.subr.bf16.mxu0 0
        %2882 = vmatpush2.bf16.xpose.msra.mxu0 0
        %2883 = vmatprep.subr.bf16.mxu0 0
        %2884 = vmatpush2.bf16.xpose.msra.mxu0 0
        %2885 = vmatprep.subr.bf16.mxu0 0
        %2886 = vmatpush2.bf16.xpose.msra.mxu0 0
        %2887 = vmatprep.subr.bf16.mxu0 0
        %2888 = vmatpush2.bf16.xpose.msra.mxu0 0
        %2889 = vmatprep.mubr.bf16.mxu0 0
        %2890 = vmatmul.mubr.bf16.gmra.mxu0 %v2852
        %v2891 = vpop.f32.mrf.mxu0
        %v2892 = vadd.f32 %v450, %v2891
        %v2893 = vpop.f32.mrf.mxu0
        %v2894 = vpop.f32.mrf.mxu0
        %v2895 = vadd.f32 %v451, %v2894
        %v2896 = vpop.f32.mrf.mxu0
        %2897 = vdwg.mxu0
        %v2898 = vsel %vm738, %v2892, -inf
        %2899 = vmax.xlane.f32.xlu0 %v2898
        %v2900 = vpop.xlane.xlu0 %2899
        %v2901 = vsel %vm738, %v2895, -inf
        %2902 = vmax.xlane.f32.xlu0 %v2901
        %v2903 = vpop.xlane.xlu0 %2902
        %v2904 = vsub.f32 %v2892, %v2900
        %v2905 = vsub.f32 %v2895, %v2903
        %v2906 = vmul.f32 %v2904, 1.442695
        %v2907 = vpow.pop %v2906
        %v2908 = vmul.f32 %v2905, 1.442695
        %v2909 = vpow.pop %v2908
        %v2910 = vsel %vm738, %v2907, 0.0
        %2911 = vadd.xlane.f32.xlu0 %v2910
        %v2912 = vpop.xlane.xlu0 %2911
        %v2913 = vsel %vm738, %v2909, 0.0
        %2914 = vadd.xlane.f32.xlu0 %v2913
        %v2915 = vpop.xlane.xlu0 %2914
        %v2916 = vrcp.pop %v2912
        %v2917 = vrcp.pop %v2915
        %v2918 = vmul.f32 %v2907, %v2916
        %v2919 = vmul.f32 %v2909, %v2917
        %v2920 = vpack.c.bf16 %v2919, %v2918
        %v2921 = vpack.c.bf16 %v2846, %v2843
        %v2923 = vsel %vm738, %v2920, 0
        %2925 = vmatprep.subr.bf16.mxu0 0
        %2926 = vmatpush1.bf16.msra.mxu0 0
        %2927 = vmatprep.subr.bf16.mxu0 0
        %2928 = vmatpush1.bf16.msra.mxu0 0
        %2929 = vmatprep.subr.bf16.mxu0 0
        %2930 = vmatpush1.bf16.msra.mxu0 0
        %2931 = vmatprep.subr.bf16.mxu0 0
        %2932 = vmatpush1.bf16.msra.mxu0 0
        %2933 = vmatprep.subr.bf16.mxu0 0
        %2934 = vmatpush1.bf16.msra.mxu0 0
        %2935 = vmatprep.subr.bf16.mxu0 0
        %2936 = vmatpush1.bf16.msra.mxu0 0
        %2937 = vmatprep.subr.bf16.mxu0 0
        %2938 = vmatpush1.bf16.msra.mxu0 0
        %2939 = vmatprep.subr.bf16.mxu0 0
        %2940 = vmatpush1.bf16.msra.mxu0 %v2921
        %2941 = vmatprep.subr.bf16.mxu0 0
        %2942 = vmatpush2.bf16.msra.mxu0 0
        %2943 = vmatprep.subr.bf16.mxu0 0
        %2944 = vmatpush2.bf16.msra.mxu0 0
        %2945 = vmatprep.subr.bf16.mxu0 0
        %2946 = vmatpush2.bf16.msra.mxu0 0
        %2947 = vmatprep.subr.bf16.mxu0 0
        %2948 = vmatpush2.bf16.msra.mxu0 0
        %2949 = vmatprep.subr.bf16.mxu0 0
        %2950 = vmatpush2.bf16.msra.mxu0 0
        %2951 = vmatprep.subr.bf16.mxu0 0
        %2952 = vmatpush2.bf16.msra.mxu0 0
        %2953 = vmatprep.subr.bf16.mxu0 0
        %2954 = vmatpush2.bf16.msra.mxu0 0
        %2955 = vmatprep.subr.bf16.mxu0 0
        %2956 = vmatpush2.bf16.msra.mxu0 0
        %2957 = vmatprep.mubr.bf16.mxu0 0
        %2958 = vmatmul.mubr.bf16.gmra.mxu0 %v2923
        %v2959 = vpop.f32.mrf.mxu0
        %v2960 = vadd.f32 0.0, %v2959
        %v2961 = vpop.f32.mrf.mxu0
        %v2962 = vpop.f32.mrf.mxu0
        %v2963 = vadd.f32 0.0, %v2962
        %v2964 = vpop.f32.mrf.mxu0
        %2965 = vdwg.mxu0
        %s2966 = scalar_lea.vmem %s3, 224
        %v2967 = vld [vmem:[%s2966] sm:$0xf]
        %v2968 = vld [vmem:[%s2966 + $0x4] sm:$0xf]
        %v2969 = vld [vmem:[%s2966 + $0x8] sm:$0xf]
        %v2970 = vld [vmem:[%s2966 + $0xc] sm:$0xf]
        %s2971 = scalar_lea.vmem %s4, 14
        %v2972 = vld [vmem:[%s2971] sm:$0x1]
        %v2974 = vlaneseq
        %v2975 = vshrl.u32 %v2974, 7
        %v2976 = vsub.s32 0, %v2975
        %v2977 = vrot.slane %v2972, %v2976
        %v2983 = vunpack.c.l.b16 %v2967
        %v2984 = vunpack.c.l.b16 %v2968
        %v2985 = vunpack.c.l.b16 %v2969
        %v2986 = vunpack.c.l.b16 %v2970
        %v2987 = vpack.c.b16 %v2984, %v2983
        %v2988 = vpack.c.b16 %v2986, %v2985
        %2991 = vmatprep.subr.bf16.mxu0 0
        %2992 = vmatpush1.bf16.xpose.msra.mxu0 0
        %2993 = vmatprep.subr.bf16.mxu0 0
        %2994 = vmatpush1.bf16.xpose.msra.mxu0 0
        %2995 = vmatprep.subr.bf16.mxu0 0
        %2996 = vmatpush1.bf16.xpose.msra.mxu0 0
        %2997 = vmatprep.subr.bf16.mxu0 0
        %2998 = vmatpush1.bf16.xpose.msra.mxu0 0
        %2999 = vmatprep.subr.bf16.mxu0 0
        %3000 = vmatpush1.bf16.xpose.msra.mxu0 0
        %3001 = vmatprep.subr.bf16.mxu0 0
        %3002 = vmatpush1.bf16.xpose.msra.mxu0 0
        %3003 = vmatprep.subr.bf16.mxu0 0
        %3004 = vmatpush1.bf16.xpose.msra.mxu0 %v2988
        %3005 = vmatprep.subr.bf16.mxu0 0
        %3006 = vmatpush1.bf16.xpose.msra.mxu0 %v2987
        %3007 = vmatprep.subr.bf16.mxu0 0
        %3008 = vmatpush2.bf16.xpose.msra.mxu0 0
        %3009 = vmatprep.subr.bf16.mxu0 0
        %3010 = vmatpush2.bf16.xpose.msra.mxu0 0
        %3011 = vmatprep.subr.bf16.mxu0 0
        %3012 = vmatpush2.bf16.xpose.msra.mxu0 0
        %3013 = vmatprep.subr.bf16.mxu0 0
        %3014 = vmatpush2.bf16.xpose.msra.mxu0 0
        %3015 = vmatprep.subr.bf16.mxu0 0
        %3016 = vmatpush2.bf16.xpose.msra.mxu0 0
        %3017 = vmatprep.subr.bf16.mxu0 0
        %3018 = vmatpush2.bf16.xpose.msra.mxu0 0
        %3019 = vmatprep.subr.bf16.mxu0 0
        %3020 = vmatpush2.bf16.xpose.msra.mxu0 0
        %3021 = vmatprep.subr.bf16.mxu0 0
        %3022 = vmatpush2.bf16.xpose.msra.mxu0 0
        %3023 = vmatprep.mubr.bf16.mxu0 0
        %3024 = vmatmul.mubr.bf16.gmra.mxu0 %v2335
        %v3025 = vpop.f32.mrf.mxu0
        %v3026 = vadd.f32 %v2977, %v3025
        %v3027 = vpop.f32.mrf.mxu0
        %v3028 = vpop.f32.mrf.mxu0
        %v3029 = vadd.f32 %v2977, %v3028
        %v3030 = vpop.f32.mrf.mxu0
        %3031 = vdwg.mxu0
        %s3032 = scalar_lea.vmem %s3, 288
        %v3033 = vld [vmem:[%s3032] sm:$0xf]
        %v3034 = vld [vmem:[%s3032 + $0x4] sm:$0xf]
        %v3035 = vld [vmem:[%s3032 + $0x8] sm:$0xf]
        %v3036 = vld [vmem:[%s3032 + $0xc] sm:$0xf]
        %s3037 = scalar_lea.vmem %s4, 18
        %v3038 = vld [vmem:[%s3037] sm:$0x1]
        %v3040 = vlaneseq
        %v3041 = vshrl.u32 %v3040, 7
        %v3042 = vsub.s32 0, %v3041
        %v3043 = vrot.slane %v3038, %v3042
        %v3049 = vunpack.c.l.b16 %v3033
        %v3050 = vunpack.c.l.b16 %v3034
        %v3051 = vunpack.c.l.b16 %v3035
        %v3052 = vunpack.c.l.b16 %v3036
        %v3053 = vpack.c.b16 %v3050, %v3049
        %v3054 = vpack.c.b16 %v3052, %v3051
        %3057 = vmatprep.subr.bf16.mxu0 0
        %3058 = vmatpush1.bf16.xpose.msra.mxu0 0
        %3059 = vmatprep.subr.bf16.mxu0 0
        %3060 = vmatpush1.bf16.xpose.msra.mxu0 0
        %3061 = vmatprep.subr.bf16.mxu0 0
        %3062 = vmatpush1.bf16.xpose.msra.mxu0 0
        %3063 = vmatprep.subr.bf16.mxu0 0
        %3064 = vmatpush1.bf16.xpose.msra.mxu0 0
        %3065 = vmatprep.subr.bf16.mxu0 0
        %3066 = vmatpush1.bf16.xpose.msra.mxu0 0
        %3067 = vmatprep.subr.bf16.mxu0 0
        %3068 = vmatpush1.bf16.xpose.msra.mxu0 0
        %3069 = vmatprep.subr.bf16.mxu0 0
        %3070 = vmatpush1.bf16.xpose.msra.mxu0 %v3054
        %3071 = vmatprep.subr.bf16.mxu0 0
        %3072 = vmatpush1.bf16.xpose.msra.mxu0 %v3053
        %3073 = vmatprep.subr.bf16.mxu0 0
        %3074 = vmatpush2.bf16.xpose.msra.mxu0 0
        %3075 = vmatprep.subr.bf16.mxu0 0
        %3076 = vmatpush2.bf16.xpose.msra.mxu0 0
        %3077 = vmatprep.subr.bf16.mxu0 0
        %3078 = vmatpush2.bf16.xpose.msra.mxu0 0
        %3079 = vmatprep.subr.bf16.mxu0 0
        %3080 = vmatpush2.bf16.xpose.msra.mxu0 0
        %3081 = vmatprep.subr.bf16.mxu0 0
        %3082 = vmatpush2.bf16.xpose.msra.mxu0 0
        %3083 = vmatprep.subr.bf16.mxu0 0
        %3084 = vmatpush2.bf16.xpose.msra.mxu0 0
        %3085 = vmatprep.subr.bf16.mxu0 0
        %3086 = vmatpush2.bf16.xpose.msra.mxu0 0
        %3087 = vmatprep.subr.bf16.mxu0 0
        %3088 = vmatpush2.bf16.xpose.msra.mxu0 0
        %3089 = vmatprep.mubr.bf16.mxu0 0
        %3090 = vmatmul.mubr.bf16.gmra.mxu0 %v2335
        %v3091 = vpop.f32.mrf.mxu0
        %v3092 = vadd.f32 %v3043, %v3091
        %v3093 = vpop.f32.mrf.mxu0
        %v3094 = vpop.f32.mrf.mxu0
        %v3095 = vadd.f32 %v3043, %v3094
        %v3096 = vpop.f32.mrf.mxu0
        %3097 = vdwg.mxu0
        %s3098 = scalar_lea.vmem %s3, 352
        %v3099 = vld [vmem:[%s3098] sm:$0xf]
        %v3100 = vld [vmem:[%s3098 + $0x4] sm:$0xf]
        %v3101 = vld [vmem:[%s3098 + $0x8] sm:$0xf]
        %v3102 = vld [vmem:[%s3098 + $0xc] sm:$0xf]
        %s3103 = scalar_lea.vmem %s4, 22
        %v3104 = vld [vmem:[%s3103] sm:$0x1]
        %v3106 = vlaneseq
        %v3107 = vshrl.u32 %v3106, 7
        %v3108 = vsub.s32 0, %v3107
        %v3109 = vrot.slane %v3104, %v3108
        %v3115 = vunpack.c.l.b16 %v3099
        %v3116 = vunpack.c.l.b16 %v3100
        %v3117 = vunpack.c.l.b16 %v3101
        %v3118 = vunpack.c.l.b16 %v3102
        %v3119 = vpack.c.b16 %v3116, %v3115
        %v3120 = vpack.c.b16 %v3118, %v3117
        %3123 = vmatprep.subr.bf16.mxu0 0
        %3124 = vmatpush1.bf16.xpose.msra.mxu0 0
        %3125 = vmatprep.subr.bf16.mxu0 0
        %3126 = vmatpush1.bf16.xpose.msra.mxu0 0
        %3127 = vmatprep.subr.bf16.mxu0 0
        %3128 = vmatpush1.bf16.xpose.msra.mxu0 0
        %3129 = vmatprep.subr.bf16.mxu0 0
        %3130 = vmatpush1.bf16.xpose.msra.mxu0 0
        %3131 = vmatprep.subr.bf16.mxu0 0
        %3132 = vmatpush1.bf16.xpose.msra.mxu0 0
        %3133 = vmatprep.subr.bf16.mxu0 0
        %3134 = vmatpush1.bf16.xpose.msra.mxu0 0
        %3135 = vmatprep.subr.bf16.mxu0 0
        %3136 = vmatpush1.bf16.xpose.msra.mxu0 %v3120
        %3137 = vmatprep.subr.bf16.mxu0 0
        %3138 = vmatpush1.bf16.xpose.msra.mxu0 %v3119
        %3139 = vmatprep.subr.bf16.mxu0 0
        %3140 = vmatpush2.bf16.xpose.msra.mxu0 0
        %3141 = vmatprep.subr.bf16.mxu0 0
        %3142 = vmatpush2.bf16.xpose.msra.mxu0 0
        %3143 = vmatprep.subr.bf16.mxu0 0
        %3144 = vmatpush2.bf16.xpose.msra.mxu0 0
        %3145 = vmatprep.subr.bf16.mxu0 0
        %3146 = vmatpush2.bf16.xpose.msra.mxu0 0
        %3147 = vmatprep.subr.bf16.mxu0 0
        %3148 = vmatpush2.bf16.xpose.msra.mxu0 0
        %3149 = vmatprep.subr.bf16.mxu0 0
        %3150 = vmatpush2.bf16.xpose.msra.mxu0 0
        %3151 = vmatprep.subr.bf16.mxu0 0
        %3152 = vmatpush2.bf16.xpose.msra.mxu0 0
        %3153 = vmatprep.subr.bf16.mxu0 0
        %3154 = vmatpush2.bf16.xpose.msra.mxu0 0
        %3155 = vmatprep.mubr.bf16.mxu0 0
        %3156 = vmatmul.mubr.bf16.gmra.mxu0 %v2335
        %v3157 = vpop.f32.mrf.mxu0
        %v3158 = vadd.f32 %v3109, %v3157
        %v3159 = vpop.f32.mrf.mxu0
        %v3160 = vpop.f32.mrf.mxu0
        %v3161 = vadd.f32 %v3109, %v3160
        %v3162 = vpop.f32.mrf.mxu0
        %3163 = vdwg.mxu0
        %v3164 = vpack.c.bf16 %v3029, %v3026
        %v3165 = vpack.c.bf16 %v3095, %v3092
        %v3167 = vsel %vm690, %v3164, 0
        %v3170 = vsel %vm690, %v3165, 0
        %3172 = vmatprep.subr.bf16.mxu0 0
        %3173 = vmatpush1.bf16.xpose.msra.mxu0 0
        %3174 = vmatprep.subr.bf16.mxu0 0
        %3175 = vmatpush1.bf16.xpose.msra.mxu0 0
        %3176 = vmatprep.subr.bf16.mxu0 0
        %3177 = vmatpush1.bf16.xpose.msra.mxu0 0
        %3178 = vmatprep.subr.bf16.mxu0 0
        %3179 = vmatpush1.bf16.xpose.msra.mxu0 0
        %3180 = vmatprep.subr.bf16.mxu0 0
        %3181 = vmatpush1.bf16.xpose.msra.mxu0 0
        %3182 = vmatprep.subr.bf16.mxu0 0
        %3183 = vmatpush1.bf16.xpose.msra.mxu0 0
        %3184 = vmatprep.subr.bf16.mxu0 0
        %3185 = vmatpush1.bf16.xpose.msra.mxu0 0
        %3186 = vmatprep.subr.bf16.mxu0 0
        %3187 = vmatpush1.bf16.xpose.msra.mxu0 %v3170
        %3188 = vmatprep.subr.bf16.mxu0 0
        %3189 = vmatpush2.bf16.xpose.msra.mxu0 0
        %3190 = vmatprep.subr.bf16.mxu0 0
        %3191 = vmatpush2.bf16.xpose.msra.mxu0 0
        %3192 = vmatprep.subr.bf16.mxu0 0
        %3193 = vmatpush2.bf16.xpose.msra.mxu0 0
        %3194 = vmatprep.subr.bf16.mxu0 0
        %3195 = vmatpush2.bf16.xpose.msra.mxu0 0
        %3196 = vmatprep.subr.bf16.mxu0 0
        %3197 = vmatpush2.bf16.xpose.msra.mxu0 0
        %3198 = vmatprep.subr.bf16.mxu0 0
        %3199 = vmatpush2.bf16.xpose.msra.mxu0 0
        %3200 = vmatprep.subr.bf16.mxu0 0
        %3201 = vmatpush2.bf16.xpose.msra.mxu0 0
        %3202 = vmatprep.subr.bf16.mxu0 0
        %3203 = vmatpush2.bf16.xpose.msra.mxu0 0
        %3204 = vmatprep.mubr.bf16.mxu0 0
        %3205 = vmatmul.mubr.bf16.gmra.mxu0 %v3167
        %v3206 = vpop.f32.mrf.mxu0
        %v3207 = vadd.f32 %v450, %v3206
        %v3208 = vpop.f32.mrf.mxu0
        %v3209 = vpop.f32.mrf.mxu0
        %v3210 = vadd.f32 %v451, %v3209
        %v3211 = vpop.f32.mrf.mxu0
        %3212 = vdwg.mxu0
        %v3213 = vsel %vm738, %v3207, -inf
        %3214 = vmax.xlane.f32.xlu0 %v3213
        %v3215 = vpop.xlane.xlu0 %3214
        %v3216 = vsel %vm738, %v3210, -inf
        %3217 = vmax.xlane.f32.xlu0 %v3216
        %v3218 = vpop.xlane.xlu0 %3217
        %v3219 = vsub.f32 %v3207, %v3215
        %v3220 = vsub.f32 %v3210, %v3218
        %v3221 = vmul.f32 %v3219, 1.442695
        %v3222 = vpow.pop %v3221
        %v3223 = vmul.f32 %v3220, 1.442695
        %v3224 = vpow.pop %v3223
        %v3225 = vsel %vm738, %v3222, 0.0
        %3226 = vadd.xlane.f32.xlu0 %v3225
        %v3227 = vpop.xlane.xlu0 %3226
        %v3228 = vsel %vm738, %v3224, 0.0
        %3229 = vadd.xlane.f32.xlu0 %v3228
        %v3230 = vpop.xlane.xlu0 %3229
        %v3231 = vrcp.pop %v3227
        %v3232 = vrcp.pop %v3230
        %v3233 = vmul.f32 %v3222, %v3231
        %v3234 = vmul.f32 %v3224, %v3232
        %v3235 = vpack.c.bf16 %v3234, %v3233
        %v3236 = vpack.c.bf16 %v3161, %v3158
        %v3238 = vsel %vm738, %v3235, 0
        %3240 = vmatprep.subr.bf16.mxu0 0
        %3241 = vmatpush1.bf16.msra.mxu0 0
        %3242 = vmatprep.subr.bf16.mxu0 0
        %3243 = vmatpush1.bf16.msra.mxu0 0
        %3244 = vmatprep.subr.bf16.mxu0 0
        %3245 = vmatpush1.bf16.msra.mxu0 0
        %3246 = vmatprep.subr.bf16.mxu0 0
        %3247 = vmatpush1.bf16.msra.mxu0 0
        %3248 = vmatprep.subr.bf16.mxu0 0
        %3249 = vmatpush1.bf16.msra.mxu0 0
        %3250 = vmatprep.subr.bf16.mxu0 0
        %3251 = vmatpush1.bf16.msra.mxu0 0
        %3252 = vmatprep.subr.bf16.mxu0 0
        %3253 = vmatpush1.bf16.msra.mxu0 0
        %3254 = vmatprep.subr.bf16.mxu0 0
        %3255 = vmatpush1.bf16.msra.mxu0 %v3236
        %3256 = vmatprep.subr.bf16.mxu0 0
        %3257 = vmatpush2.bf16.msra.mxu0 0
        %3258 = vmatprep.subr.bf16.mxu0 0
        %3259 = vmatpush2.bf16.msra.mxu0 0
        %3260 = vmatprep.subr.bf16.mxu0 0
        %3261 = vmatpush2.bf16.msra.mxu0 0
        %3262 = vmatprep.subr.bf16.mxu0 0
        %3263 = vmatpush2.bf16.msra.mxu0 0
        %3264 = vmatprep.subr.bf16.mxu0 0
        %3265 = vmatpush2.bf16.msra.mxu0 0
        %3266 = vmatprep.subr.bf16.mxu0 0
        %3267 = vmatpush2.bf16.msra.mxu0 0
        %3268 = vmatprep.subr.bf16.mxu0 0
        %3269 = vmatpush2.bf16.msra.mxu0 0
        %3270 = vmatprep.subr.bf16.mxu0 0
        %3271 = vmatpush2.bf16.msra.mxu0 0
        %3272 = vmatprep.mubr.bf16.mxu0 0
        %3273 = vmatmul.mubr.bf16.gmra.mxu0 %v3238
        %v3274 = vpop.f32.mrf.mxu0
        %v3275 = vadd.f32 0.0, %v3274
        %v3276 = vpop.f32.mrf.mxu0
        %v3277 = vpop.f32.mrf.mxu0
        %v3278 = vadd.f32 0.0, %v3277
        %v3279 = vpop.f32.mrf.mxu0
        %3280 = vdwg.mxu0
        %s3281 = scalar_lea.vmem %s3, 240
        %v3282 = vld [vmem:[%s3281] sm:$0xf]
        %v3283 = vld [vmem:[%s3281 + $0x4] sm:$0xf]
        %v3284 = vld [vmem:[%s3281 + $0x8] sm:$0xf]
        %v3285 = vld [vmem:[%s3281 + $0xc] sm:$0xf]
        %s3286 = scalar_lea.vmem %s4, 15
        %v3287 = vld [vmem:[%s3286] sm:$0x1]
        %v3289 = vlaneseq
        %v3290 = vshrl.u32 %v3289, 7
        %v3291 = vsub.s32 0, %v3290
        %v3292 = vrot.slane %v3287, %v3291
        %v3298 = vunpack.c.l.b16 %v3282
        %v3299 = vunpack.c.l.b16 %v3283
        %v3300 = vunpack.c.l.b16 %v3284
        %v3301 = vunpack.c.l.b16 %v3285
        %v3302 = vpack.c.b16 %v3299, %v3298
        %v3303 = vpack.c.b16 %v3301, %v3300
        %3306 = vmatprep.subr.bf16.mxu0 0
        %3307 = vmatpush1.bf16.xpose.msra.mxu0 0
        %3308 = vmatprep.subr.bf16.mxu0 0
        %3309 = vmatpush1.bf16.xpose.msra.mxu0 0
        %3310 = vmatprep.subr.bf16.mxu0 0
        %3311 = vmatpush1.bf16.xpose.msra.mxu0 0
        %3312 = vmatprep.subr.bf16.mxu0 0
        %3313 = vmatpush1.bf16.xpose.msra.mxu0 0
        %3314 = vmatprep.subr.bf16.mxu0 0
        %3315 = vmatpush1.bf16.xpose.msra.mxu0 0
        %3316 = vmatprep.subr.bf16.mxu0 0
        %3317 = vmatpush1.bf16.xpose.msra.mxu0 0
        %3318 = vmatprep.subr.bf16.mxu0 0
        %3319 = vmatpush1.bf16.xpose.msra.mxu0 %v3303
        %3320 = vmatprep.subr.bf16.mxu0 0
        %3321 = vmatpush1.bf16.xpose.msra.mxu0 %v3302
        %3322 = vmatprep.subr.bf16.mxu0 0
        %3323 = vmatpush2.bf16.xpose.msra.mxu0 0
        %3324 = vmatprep.subr.bf16.mxu0 0
        %3325 = vmatpush2.bf16.xpose.msra.mxu0 0
        %3326 = vmatprep.subr.bf16.mxu0 0
        %3327 = vmatpush2.bf16.xpose.msra.mxu0 0
        %3328 = vmatprep.subr.bf16.mxu0 0
        %3329 = vmatpush2.bf16.xpose.msra.mxu0 0
        %3330 = vmatprep.subr.bf16.mxu0 0
        %3331 = vmatpush2.bf16.xpose.msra.mxu0 0
        %3332 = vmatprep.subr.bf16.mxu0 0
        %3333 = vmatpush2.bf16.xpose.msra.mxu0 0
        %3334 = vmatprep.subr.bf16.mxu0 0
        %3335 = vmatpush2.bf16.xpose.msra.mxu0 0
        %3336 = vmatprep.subr.bf16.mxu0 0
        %3337 = vmatpush2.bf16.xpose.msra.mxu0 0
        %3338 = vmatprep.mubr.bf16.mxu0 0
        %3339 = vmatmul.mubr.bf16.gmra.mxu0 %v2335
        %v3340 = vpop.f32.mrf.mxu0
        %v3341 = vadd.f32 %v3292, %v3340
        %v3342 = vpop.f32.mrf.mxu0
        %v3343 = vpop.f32.mrf.mxu0
        %v3344 = vadd.f32 %v3292, %v3343
        %v3345 = vpop.f32.mrf.mxu0
        %3346 = vdwg.mxu0
        %s3347 = scalar_lea.vmem %s3, 304
        %v3348 = vld [vmem:[%s3347] sm:$0xf]
        %v3349 = vld [vmem:[%s3347 + $0x4] sm:$0xf]
        %v3350 = vld [vmem:[%s3347 + $0x8] sm:$0xf]
        %v3351 = vld [vmem:[%s3347 + $0xc] sm:$0xf]
        %s3352 = scalar_lea.vmem %s4, 19
        %v3353 = vld [vmem:[%s3352] sm:$0x1]
        %v3355 = vlaneseq
        %v3356 = vshrl.u32 %v3355, 7
        %v3357 = vsub.s32 0, %v3356
        %v3358 = vrot.slane %v3353, %v3357
        %v3364 = vunpack.c.l.b16 %v3348
        %v3365 = vunpack.c.l.b16 %v3349
        %v3366 = vunpack.c.l.b16 %v3350
        %v3367 = vunpack.c.l.b16 %v3351
        %v3368 = vpack.c.b16 %v3365, %v3364
        %v3369 = vpack.c.b16 %v3367, %v3366
        %3372 = vmatprep.subr.bf16.mxu0 0
        %3373 = vmatpush1.bf16.xpose.msra.mxu0 0
        %3374 = vmatprep.subr.bf16.mxu0 0
        %3375 = vmatpush1.bf16.xpose.msra.mxu0 0
        %3376 = vmatprep.subr.bf16.mxu0 0
        %3377 = vmatpush1.bf16.xpose.msra.mxu0 0
        %3378 = vmatprep.subr.bf16.mxu0 0
        %3379 = vmatpush1.bf16.xpose.msra.mxu0 0
        %3380 = vmatprep.subr.bf16.mxu0 0
        %3381 = vmatpush1.bf16.xpose.msra.mxu0 0
        %3382 = vmatprep.subr.bf16.mxu0 0
        %3383 = vmatpush1.bf16.xpose.msra.mxu0 0
        %3384 = vmatprep.subr.bf16.mxu0 0
        %3385 = vmatpush1.bf16.xpose.msra.mxu0 %v3369
        %3386 = vmatprep.subr.bf16.mxu0 0
        %3387 = vmatpush1.bf16.xpose.msra.mxu0 %v3368
        %3388 = vmatprep.subr.bf16.mxu0 0
        %3389 = vmatpush2.bf16.xpose.msra.mxu0 0
        %3390 = vmatprep.subr.bf16.mxu0 0
        %3391 = vmatpush2.bf16.xpose.msra.mxu0 0
        %3392 = vmatprep.subr.bf16.mxu0 0
        %3393 = vmatpush2.bf16.xpose.msra.mxu0 0
        %3394 = vmatprep.subr.bf16.mxu0 0
        %3395 = vmatpush2.bf16.xpose.msra.mxu0 0
        %3396 = vmatprep.subr.bf16.mxu0 0
        %3397 = vmatpush2.bf16.xpose.msra.mxu0 0
        %3398 = vmatprep.subr.bf16.mxu0 0
        %3399 = vmatpush2.bf16.xpose.msra.mxu0 0
        %3400 = vmatprep.subr.bf16.mxu0 0
        %3401 = vmatpush2.bf16.xpose.msra.mxu0 0
        %3402 = vmatprep.subr.bf16.mxu0 0
        %3403 = vmatpush2.bf16.xpose.msra.mxu0 0
        %3404 = vmatprep.mubr.bf16.mxu0 0
        %3405 = vmatmul.mubr.bf16.gmra.mxu0 %v2335
        %v3406 = vpop.f32.mrf.mxu0
        %v3407 = vadd.f32 %v3358, %v3406
        %v3408 = vpop.f32.mrf.mxu0
        %v3409 = vpop.f32.mrf.mxu0
        %v3410 = vadd.f32 %v3358, %v3409
        %v3411 = vpop.f32.mrf.mxu0
        %3412 = vdwg.mxu0
        %s3413 = scalar_lea.vmem %s3, 368
        %v3414 = vld [vmem:[%s3413] sm:$0xf]
        %v3415 = vld [vmem:[%s3413 + $0x4] sm:$0xf]
        %v3416 = vld [vmem:[%s3413 + $0x8] sm:$0xf]
        %v3417 = vld [vmem:[%s3413 + $0xc] sm:$0xf]
        %s3418 = scalar_lea.vmem %s4, 23
        %v3419 = vld [vmem:[%s3418] sm:$0x1]
        %v3421 = vlaneseq
        %v3422 = vshrl.u32 %v3421, 7
        %v3423 = vsub.s32 0, %v3422
        %v3424 = vrot.slane %v3419, %v3423
        %v3430 = vunpack.c.l.b16 %v3414
        %v3431 = vunpack.c.l.b16 %v3415
        %v3432 = vunpack.c.l.b16 %v3416
        %v3433 = vunpack.c.l.b16 %v3417
        %v3434 = vpack.c.b16 %v3431, %v3430
        %v3435 = vpack.c.b16 %v3433, %v3432
        %3438 = vmatprep.subr.bf16.mxu0 0
        %3439 = vmatpush1.bf16.xpose.msra.mxu0 0
        %3440 = vmatprep.subr.bf16.mxu0 0
        %3441 = vmatpush1.bf16.xpose.msra.mxu0 0
        %3442 = vmatprep.subr.bf16.mxu0 0
        %3443 = vmatpush1.bf16.xpose.msra.mxu0 0
        %3444 = vmatprep.subr.bf16.mxu0 0
        %3445 = vmatpush1.bf16.xpose.msra.mxu0 0
        %3446 = vmatprep.subr.bf16.mxu0 0
        %3447 = vmatpush1.bf16.xpose.msra.mxu0 0
        %3448 = vmatprep.subr.bf16.mxu0 0
        %3449 = vmatpush1.bf16.xpose.msra.mxu0 0
        %3450 = vmatprep.subr.bf16.mxu0 0
        %3451 = vmatpush1.bf16.xpose.msra.mxu0 %v3435
        %3452 = vmatprep.subr.bf16.mxu0 0
        %3453 = vmatpush1.bf16.xpose.msra.mxu0 %v3434
        %3454 = vmatprep.subr.bf16.mxu0 0
        %3455 = vmatpush2.bf16.xpose.msra.mxu0 0
        %3456 = vmatprep.subr.bf16.mxu0 0
        %3457 = vmatpush2.bf16.xpose.msra.mxu0 0
        %3458 = vmatprep.subr.bf16.mxu0 0
        %3459 = vmatpush2.bf16.xpose.msra.mxu0 0
        %3460 = vmatprep.subr.bf16.mxu0 0
        %3461 = vmatpush2.bf16.xpose.msra.mxu0 0
        %3462 = vmatprep.subr.bf16.mxu0 0
        %3463 = vmatpush2.bf16.xpose.msra.mxu0 0
        %3464 = vmatprep.subr.bf16.mxu0 0
        %3465 = vmatpush2.bf16.xpose.msra.mxu0 0
        %3466 = vmatprep.subr.bf16.mxu0 0
        %3467 = vmatpush2.bf16.xpose.msra.mxu0 0
        %3468 = vmatprep.subr.bf16.mxu0 0
        %3469 = vmatpush2.bf16.xpose.msra.mxu0 0
        %3470 = vmatprep.mubr.bf16.mxu0 0
        %3471 = vmatmul.mubr.bf16.gmra.mxu0 %v2335
        %v3472 = vpop.f32.mrf.mxu0
        %v3473 = vadd.f32 %v3424, %v3472
        %v3474 = vpop.f32.mrf.mxu0
        %v3475 = vpop.f32.mrf.mxu0
        %v3476 = vadd.f32 %v3424, %v3475
        %v3477 = vpop.f32.mrf.mxu0
        %3478 = vdwg.mxu0
        %v3479 = vpack.c.bf16 %v3344, %v3341
        %v3480 = vpack.c.bf16 %v3410, %v3407
        %v3482 = vsel %vm690, %v3479, 0
        %v3485 = vsel %vm690, %v3480, 0
        %3487 = vmatprep.subr.bf16.mxu0 0
        %3488 = vmatpush1.bf16.xpose.msra.mxu0 0
        %3489 = vmatprep.subr.bf16.mxu0 0
        %3490 = vmatpush1.bf16.xpose.msra.mxu0 0
        %3491 = vmatprep.subr.bf16.mxu0 0
        %3492 = vmatpush1.bf16.xpose.msra.mxu0 0
        %3493 = vmatprep.subr.bf16.mxu0 0
        %3494 = vmatpush1.bf16.xpose.msra.mxu0 0
        %3495 = vmatprep.subr.bf16.mxu0 0
        %3496 = vmatpush1.bf16.xpose.msra.mxu0 0
        %3497 = vmatprep.subr.bf16.mxu0 0
        %3498 = vmatpush1.bf16.xpose.msra.mxu0 0
        %3499 = vmatprep.subr.bf16.mxu0 0
        %3500 = vmatpush1.bf16.xpose.msra.mxu0 0
        %3501 = vmatprep.subr.bf16.mxu0 0
        %3502 = vmatpush1.bf16.xpose.msra.mxu0 %v3485
        %3503 = vmatprep.subr.bf16.mxu0 0
        %3504 = vmatpush2.bf16.xpose.msra.mxu0 0
        %3505 = vmatprep.subr.bf16.mxu0 0
        %3506 = vmatpush2.bf16.xpose.msra.mxu0 0
        %3507 = vmatprep.subr.bf16.mxu0 0
        %3508 = vmatpush2.bf16.xpose.msra.mxu0 0
        %3509 = vmatprep.subr.bf16.mxu0 0
        %3510 = vmatpush2.bf16.xpose.msra.mxu0 0
        %3511 = vmatprep.subr.bf16.mxu0 0
        %3512 = vmatpush2.bf16.xpose.msra.mxu0 0
        %3513 = vmatprep.subr.bf16.mxu0 0
        %3514 = vmatpush2.bf16.xpose.msra.mxu0 0
        %3515 = vmatprep.subr.bf16.mxu0 0
        %3516 = vmatpush2.bf16.xpose.msra.mxu0 0
        %3517 = vmatprep.subr.bf16.mxu0 0
        %3518 = vmatpush2.bf16.xpose.msra.mxu0 0
        %3519 = vmatprep.mubr.bf16.mxu0 0
        %3520 = vmatmul.mubr.bf16.gmra.mxu0 %v3482
        %v3521 = vpop.f32.mrf.mxu0
        %v3522 = vadd.f32 %v450, %v3521
        %v3523 = vpop.f32.mrf.mxu0
        %v3524 = vpop.f32.mrf.mxu0
        %v3525 = vadd.f32 %v451, %v3524
        %v3526 = vpop.f32.mrf.mxu0
        %3527 = vdwg.mxu0
        %v3528 = vsel %vm738, %v3522, -inf
        %3529 = vmax.xlane.f32.xlu0 %v3528
        %v3530 = vpop.xlane.xlu0 %3529
        %v3531 = vsel %vm738, %v3525, -inf
        %3532 = vmax.xlane.f32.xlu0 %v3531
        %v3533 = vpop.xlane.xlu0 %3532
        %v3534 = vsub.f32 %v3522, %v3530
        %v3535 = vsub.f32 %v3525, %v3533
        %v3536 = vmul.f32 %v3534, 1.442695
        %v3537 = vpow.pop %v3536
        %v3538 = vmul.f32 %v3535, 1.442695
        %v3539 = vpow.pop %v3538
        %v3540 = vsel %vm738, %v3537, 0.0
        %3541 = vadd.xlane.f32.xlu0 %v3540
        %v3542 = vpop.xlane.xlu0 %3541
        %v3543 = vsel %vm738, %v3539, 0.0
        %3544 = vadd.xlane.f32.xlu0 %v3543
        %v3545 = vpop.xlane.xlu0 %3544
        %v3546 = vrcp.pop %v3542
        %v3547 = vrcp.pop %v3545
        %v3548 = vmul.f32 %v3537, %v3546
        %v3549 = vmul.f32 %v3539, %v3547
        %v3550 = vpack.c.bf16 %v3549, %v3548
        %v3551 = vpack.c.bf16 %v3476, %v3473
        %v3553 = vsel %vm738, %v3550, 0
        %3555 = vmatprep.subr.bf16.mxu0 0
        %3556 = vmatpush1.bf16.msra.mxu0 0
        %3557 = vmatprep.subr.bf16.mxu0 0
        %3558 = vmatpush1.bf16.msra.mxu0 0
        %3559 = vmatprep.subr.bf16.mxu0 0
        %3560 = vmatpush1.bf16.msra.mxu0 0
        %3561 = vmatprep.subr.bf16.mxu0 0
        %3562 = vmatpush1.bf16.msra.mxu0 0
        %3563 = vmatprep.subr.bf16.mxu0 0
        %3564 = vmatpush1.bf16.msra.mxu0 0
        %3565 = vmatprep.subr.bf16.mxu0 0
        %3566 = vmatpush1.bf16.msra.mxu0 0
        %3567 = vmatprep.subr.bf16.mxu0 0
        %3568 = vmatpush1.bf16.msra.mxu0 0
        %3569 = vmatprep.subr.bf16.mxu0 0
        %3570 = vmatpush1.bf16.msra.mxu0 %v3551
        %3571 = vmatprep.subr.bf16.mxu0 0
        %3572 = vmatpush2.bf16.msra.mxu0 0
        %3573 = vmatprep.subr.bf16.mxu0 0
        %3574 = vmatpush2.bf16.msra.mxu0 0
        %3575 = vmatprep.subr.bf16.mxu0 0
        %3576 = vmatpush2.bf16.msra.mxu0 0
        %3577 = vmatprep.subr.bf16.mxu0 0
        %3578 = vmatpush2.bf16.msra.mxu0 0
        %3579 = vmatprep.subr.bf16.mxu0 0
        %3580 = vmatpush2.bf16.msra.mxu0 0
        %3581 = vmatprep.subr.bf16.mxu0 0
        %3582 = vmatpush2.bf16.msra.mxu0 0
        %3583 = vmatprep.subr.bf16.mxu0 0
        %3584 = vmatpush2.bf16.msra.mxu0 0
        %3585 = vmatprep.subr.bf16.mxu0 0
        %3586 = vmatpush2.bf16.msra.mxu0 0
        %3587 = vmatprep.mubr.bf16.mxu0 0
        %3588 = vmatmul.mubr.bf16.gmra.mxu0 %v3553
        %v3589 = vpop.f32.mrf.mxu0
        %v3590 = vadd.f32 0.0, %v3589
        %v3591 = vpop.f32.mrf.mxu0
        %v3592 = vpop.f32.mrf.mxu0
        %v3593 = vadd.f32 0.0, %v3592
        %v3594 = vpop.f32.mrf.mxu0
        %3595 = vdwg.mxu0
        %3598 = vrot.lane.b32.xlu0 %v2960, 32
        %v3599 = vpop.permute.xlu0 %3598
        %3600 = vrot.lane.b32.xlu0 %v2963, 32
        %v3601 = vpop.permute.xlu0 %3600
        %3606 = vrot.lane.b32.xlu0 %v3275, 64
        %v3607 = vpop.permute.xlu0 %3606
        %3608 = vrot.lane.b32.xlu0 %v3278, 64
        %v3609 = vpop.permute.xlu0 %3608
        %3614 = vrot.lane.b32.xlu0 %v3590, 96
        %v3615 = vpop.permute.xlu0 %3614
        %3616 = vrot.lane.b32.xlu0 %v3593, 96
        %v3617 = vpop.permute.xlu0 %3616
        %v3620 = vsel %vm690, %v2645, %v3599
        %v3621 = vsel %vm690, %v2648, %v3601
        %v3622 = vsel %vm1778, %v3620, %v3607
        %v3623 = vsel %vm1778, %v3621, %v3609
        %v3624 = vsel %vm1781, %v3622, %v3615
        %v3625 = vsel %vm1781, %v3623, %v3617
        %s3626 = scalar_lea.vmem [#allocation2], 64
        %v3627 = vld [vmem:[%s3626] sm:$0xf]
        %v3628 = vld [vmem:[%s3626 + $0x4] sm:$0xf]
        %v3629 = vld [vmem:[%s3626 + $0x8] sm:$0xf]
        %v3630 = vld [vmem:[%s3626 + $0xc] sm:$0xf]
        %v3631 = vld [vmem:[%s3626 + $0x10] sm:$0xf]
        %v3632 = vld [vmem:[%s3626 + $0x14] sm:$0xf]
        %v3633 = vld [vmem:[%s3626 + $0x18] sm:$0xf]
        %v3634 = vld [vmem:[%s3626 + $0x1c] sm:$0xf]
        %v3635 = vld [vmem:[%s3626 + $0x20] sm:$0xf]
        %v3636 = vld [vmem:[%s3626 + $0x24] sm:$0xf]
        %v3637 = vld [vmem:[%s3626 + $0x28] sm:$0xf]
        %v3638 = vld [vmem:[%s3626 + $0x2c] sm:$0xf]
        %v3639 = vld [vmem:[%s3626 + $0x30] sm:$0xf]
        %v3640 = vld [vmem:[%s3626 + $0x34] sm:$0xf]
        %v3641 = vld [vmem:[%s3626 + $0x38] sm:$0xf]
        %v3642 = vld [vmem:[%s3626 + $0x3c] sm:$0xf]
        %s3643 = scalar_lea.vmem %s9, 8
        %v3644 = vld [vmem:[%s3643] sm:$0x1]
        %v3645 = vpack.c.bf16 %v3625, %v3624
        %v3646 = vlaneseq
        %v3647 = vshrl.u32 %v3646, 7
        %v3648 = vsub.s32 0, %v3647
        %v3649 = vrot.slane %v3644, %v3648
        %v3666 = vunpack.c.l.b16 %v3627
        %v3667 = vunpack.c.l.b16 %v3628
        %v3668 = vunpack.c.l.b16 %v3629
        %v3669 = vunpack.c.l.b16 %v3630
        %v3670 = vunpack.c.l.b16 %v3631
        %v3671 = vunpack.c.l.b16 %v3632
        %v3672 = vunpack.c.l.b16 %v3633
        %v3673 = vunpack.c.l.b16 %v3634
        %v3674 = vunpack.c.l.b16 %v3635
        %v3675 = vunpack.c.l.b16 %v3636
        %v3676 = vunpack.c.l.b16 %v3637
        %v3677 = vunpack.c.l.b16 %v3638
        %v3678 = vunpack.c.l.b16 %v3639
        %v3679 = vunpack.c.l.b16 %v3640
        %v3680 = vunpack.c.l.b16 %v3641
        %v3681 = vunpack.c.l.b16 %v3642
        %v3682 = vpack.c.b16 %v3667, %v3666
        %v3683 = vpack.c.b16 %v3669, %v3668
        %v3684 = vpack.c.b16 %v3671, %v3670
        %v3685 = vpack.c.b16 %v3673, %v3672
        %v3686 = vpack.c.b16 %v3675, %v3674
        %v3687 = vpack.c.b16 %v3677, %v3676
        %v3688 = vpack.c.b16 %v3679, %v3678
        %v3689 = vpack.c.b16 %v3681, %v3680
        %3698 = vmatprep.subr.bf16.mxu0 0
        %3699 = vmatpush1.bf16.msra.mxu0 %v3689
        %3700 = vmatprep.subr.bf16.mxu0 0
        %3701 = vmatpush1.bf16.msra.mxu0 %v3688
        %3702 = vmatprep.subr.bf16.mxu0 0
        %3703 = vmatpush1.bf16.msra.mxu0 %v3687
        %3704 = vmatprep.subr.bf16.mxu0 0
        %3705 = vmatpush1.bf16.msra.mxu0 %v3686
        %3706 = vmatprep.subr.bf16.mxu0 0
        %3707 = vmatpush1.bf16.msra.mxu0 %v3685
        %3708 = vmatprep.subr.bf16.mxu0 0
        %3709 = vmatpush1.bf16.msra.mxu0 %v3684
        %3710 = vmatprep.subr.bf16.mxu0 0
        %3711 = vmatpush1.bf16.msra.mxu0 %v3683
        %3712 = vmatprep.subr.bf16.mxu0 0
        %3713 = vmatpush1.bf16.msra.mxu0 %v3682
        %3714 = vmatprep.subr.bf16.mxu0 0
        %3715 = vmatpush2.bf16.msra.mxu0 0
        %3716 = vmatprep.subr.bf16.mxu0 0
        %3717 = vmatpush2.bf16.msra.mxu0 0
        %3718 = vmatprep.subr.bf16.mxu0 0
        %3719 = vmatpush2.bf16.msra.mxu0 0
        %3720 = vmatprep.subr.bf16.mxu0 0
        %3721 = vmatpush2.bf16.msra.mxu0 0
        %3722 = vmatprep.subr.bf16.mxu0 0
        %3723 = vmatpush2.bf16.msra.mxu0 0
        %3724 = vmatprep.subr.bf16.mxu0 0
        %3725 = vmatpush2.bf16.msra.mxu0 0
        %3726 = vmatprep.subr.bf16.mxu0 0
        %3727 = vmatpush2.bf16.msra.mxu0 0
        %3728 = vmatprep.subr.bf16.mxu0 0
        %3729 = vmatpush2.bf16.msra.mxu0 0
        %3730 = vmatprep.mubr.bf16.mxu0 0
        %3731 = vmatmul.mubr.bf16.gmra.mxu0 %v3645
        %v3732 = vpop.f32.mrf.mxu0
        %v3733 = vadd.f32 %v3649, %v3732
        %v3734 = vpop.f32.mrf.mxu0
        %v3735 = vpop.f32.mrf.mxu0
        %v3736 = vadd.f32 %v3649, %v3735
        %v3737 = vpop.f32.mrf.mxu0
        %3738 = vdwg.mxu0
        %v3739 = vadd.f32 %v3733, %v2333
        %v3740 = vadd.f32 %v3736, %v2334
        %v3741 = vld [vmem:[%s3643 + $0x1] sm:$0x1]
        %v3742 = vld [vmem:[%s3643 + $0x2] sm:$0x1]
        %3743 = vadd.xlane.f32.xlu0 %v3739
        %v3744 = vpop.xlane.xlu0 %3743
        %3745 = vadd.xlane.f32.xlu0 %v3740
        %v3746 = vpop.xlane.xlu0 %3745
        %v3747 = vmul.f32 %v3744, %v460
        %v3748 = vmul.f32 %v3746, %v460
        %v3749 = vsub.f32 %v3739, %v3747
        %v3750 = vsub.f32 %v3740, %v3748
        %v3751 = vmul.f32 %v3749, %v3749
        %v3752 = vmul.f32 %v3750, %v3750
        %3753 = vadd.xlane.f32.xlu0 %v3751
        %v3754 = vpop.xlane.xlu0 %3753
        %3755 = vadd.xlane.f32.xlu0 %v3752
        %v3756 = vpop.xlane.xlu0 %3755
        %v3757 = vmul.f32 %v3754, %v460
        %v3758 = vmul.f32 %v3756, %v460
        %v3759 = vadd.f32 %v3757, 1e-12
        %v3760 = vadd.f32 %v3758, 1e-12
        %v3761 = vrsqrt.pop %v3759
        %v3762 = vrsqrt.pop %v3760
        %v3763 = vmul.f32 %v3749, %v3761
        %v3764 = vmul.f32 %v3750, %v3762
        %v3765 = vlaneseq
        %v3766 = vshrl.u32 %v3765, 7
        %v3767 = vsub.s32 0, %v3766
        %v3768 = vrot.slane %v3741, %v3767
        %v3769 = vmul.f32 %v3763, %v3768
        %v3770 = vmul.f32 %v3764, %v3768
        %v3771 = vlaneseq
        %v3772 = vshrl.u32 %v3771, 7
        %v3773 = vsub.s32 0, %v3772
        %v3774 = vrot.slane %v3742, %v3773
        %v3775 = vadd.f32 %v3769, %v3774
        %v3776 = vadd.f32 %v3770, %v3774
        %s3777 = scalar_lea.vmem %s6, 128
        %v3778 = vld [vmem:[%s3777] sm:$0xff]
        %v3779 = vld [vmem:[%s3777 + $0x8] sm:$0xff]
        %v3780 = vld [vmem:[%s3777 + $0x10] sm:$0xff]
        %v3781 = vld [vmem:[%s3777 + $0x18] sm:$0xff]
        %v3782 = vld [vmem:[%s3777 + $0x20] sm:$0xff]
        %v3783 = vld [vmem:[%s3777 + $0x28] sm:$0xff]
        %v3784 = vld [vmem:[%s3777 + $0x30] sm:$0xff]
        %v3785 = vld [vmem:[%s3777 + $0x38] sm:$0xff]
        %v3786 = vld [vmem:[%s3777 + $0x40] sm:$0xff]
        %v3787 = vld [vmem:[%s3777 + $0x48] sm:$0xff]
        %v3788 = vld [vmem:[%s3777 + $0x50] sm:$0xff]
        %v3789 = vld [vmem:[%s3777 + $0x58] sm:$0xff]
        %v3790 = vld [vmem:[%s3777 + $0x60] sm:$0xff]
        %v3791 = vld [vmem:[%s3777 + $0x68] sm:$0xff]
        %v3792 = vld [vmem:[%s3777 + $0x70] sm:$0xff]
        %v3793 = vld [vmem:[%s3777 + $0x78] sm:$0xff]
        %s3794 = scalar_lea.vmem %s7, 2
        %v3795 = vld [vmem:[%s3794] sm:$0x3]
        %v3796 = vpack.c.bf16 %v3776, %v3775
        %v3798 = vlaneseq
        %v3799 = vshrl.u32 %v3798, 7
        %v3800 = vsub.s32 0, %v3799
        %v3801 = vrot.slane %v3795, %v3800
        %v3802 = vlaneseq
        %v3803 = vshrl.u32 %v3802, 7
        %v3804 = vsub.s32 1, %v3803
        %v3805 = vrot.slane %v3795, %v3804
        %v3824 = vunpack.c.l.b16 %v3778
        %v3825 = vunpack.c.h.b16 %v3778
        %v3826 = vunpack.c.l.b16 %v3779
        %v3827 = vunpack.c.h.b16 %v3779
        %v3828 = vunpack.c.l.b16 %v3780
        %v3829 = vunpack.c.h.b16 %v3780
        %v3830 = vunpack.c.l.b16 %v3781
        %v3831 = vunpack.c.h.b16 %v3781
        %v3832 = vunpack.c.l.b16 %v3782
        %v3833 = vunpack.c.h.b16 %v3782
        %v3834 = vunpack.c.l.b16 %v3783
        %v3835 = vunpack.c.h.b16 %v3783
        %v3836 = vunpack.c.l.b16 %v3784
        %v3837 = vunpack.c.h.b16 %v3784
        %v3838 = vunpack.c.l.b16 %v3785
        %v3839 = vunpack.c.h.b16 %v3785
        %v3840 = vunpack.c.l.b16 %v3786
        %v3841 = vunpack.c.h.b16 %v3786
        %v3842 = vunpack.c.l.b16 %v3787
        %v3843 = vunpack.c.h.b16 %v3787
        %v3844 = vunpack.c.l.b16 %v3788
        %v3845 = vunpack.c.h.b16 %v3788
        %v3846 = vunpack.c.l.b16 %v3789
        %v3847 = vunpack.c.h.b16 %v3789
        %v3848 = vunpack.c.l.b16 %v3790
        %v3849 = vunpack.c.h.b16 %v3790
        %v3850 = vunpack.c.l.b16 %v3791
        %v3851 = vunpack.c.h.b16 %v3791
        %v3852 = vunpack.c.l.b16 %v3792
        %v3853 = vunpack.c.h.b16 %v3792
        %v3854 = vunpack.c.l.b16 %v3793
        %v3855 = vunpack.c.h.b16 %v3793
        %v3856 = vpack.c.b16 %v3826, %v3824
        %v3857 = vpack.c.b16 %v3827, %v3825
        %v3858 = vpack.c.b16 %v3830, %v3828
        %v3859 = vpack.c.b16 %v3831, %v3829
        %v3860 = vpack.c.b16 %v3834, %v3832
        %v3861 = vpack.c.b16 %v3835, %v3833
        %v3862 = vpack.c.b16 %v3838, %v3836
        %v3863 = vpack.c.b16 %v3839, %v3837
        %v3864 = vpack.c.b16 %v3842, %v3840
        %v3865 = vpack.c.b16 %v3843, %v3841
        %v3866 = vpack.c.b16 %v3846, %v3844
        %v3867 = vpack.c.b16 %v3847, %v3845
        %v3868 = vpack.c.b16 %v3850, %v3848
        %v3869 = vpack.c.b16 %v3851, %v3849
        %v3870 = vpack.c.b16 %v3854, %v3852
        %v3871 = vpack.c.b16 %v3855, %v3853
        %3888 = vmatprep.subr.bf16.mxu0 %v3871
        %3889 = vmatpush1.bf16.msra.mxu0 %v3870
        %3890 = vmatprep.subr.bf16.mxu0 %v3869
        %3891 = vmatpush1.bf16.msra.mxu0 %v3868
        %3892 = vmatprep.subr.bf16.mxu0 %v3867
        %3893 = vmatpush1.bf16.msra.mxu0 %v3866
        %3894 = vmatprep.subr.bf16.mxu0 %v3865
        %3895 = vmatpush1.bf16.msra.mxu0 %v3864
        %3896 = vmatprep.subr.bf16.mxu0 %v3863
        %3897 = vmatpush1.bf16.msra.mxu0 %v3862
        %3898 = vmatprep.subr.bf16.mxu0 %v3861
        %3899 = vmatpush1.bf16.msra.mxu0 %v3860
        %3900 = vmatprep.subr.bf16.mxu0 %v3859
        %3901 = vmatpush1.bf16.msra.mxu0 %v3858
        %3902 = vmatprep.subr.bf16.mxu0 %v3857
        %3903 = vmatpush1.bf16.msra.mxu0 %v3856
        %3904 = vmatprep.subr.bf16.mxu0 0
        %3905 = vmatpush2.bf16.msra.mxu0 0
        %3906 = vmatprep.subr.bf16.mxu0 0
        %3907 = vmatpush2.bf16.msra.mxu0 0
        %3908 = vmatprep.subr.bf16.mxu0 0
        %3909 = vmatpush2.bf16.msra.mxu0 0
        %3910 = vmatprep.subr.bf16.mxu0 0
        %3911 = vmatpush2.bf16.msra.mxu0 0
        %3912 = vmatprep.subr.bf16.mxu0 0
        %3913 = vmatpush2.bf16.msra.mxu0 0
        %3914 = vmatprep.subr.bf16.mxu0 0
        %3915 = vmatpush2.bf16.msra.mxu0 0
        %3916 = vmatprep.subr.bf16.mxu0 0
        %3917 = vmatpush2.bf16.msra.mxu0 0
        %3918 = vmatprep.subr.bf16.mxu0 0
        %3919 = vmatpush2.bf16.msra.mxu0 0
        %3920 = vmatprep.mubr.bf16.mxu0 0
        %3921 = vmatmul.mubr.bf16.gmra.mxu0 %v3796
        %v3922 = vpop.f32.mrf.mxu0
        %v3923 = vadd.f32 %v3801, %v3922
        %v3924 = vpop.f32.mrf.mxu0
        %v3925 = vadd.f32 %v3805, %v3924
        %v3926 = vpop.f32.mrf.mxu0
        %v3927 = vadd.f32 %v3801, %v3926
        %v3928 = vpop.f32.mrf.mxu0
        %v3929 = vadd.f32 %v3805, %v3928
        %3930 = vdwg.mxu0
        %v3931 = vmul.f32 %v3923, 0.5
        %v3932 = vmul.f32 %v3925, 0.5
        %v3933 = vmul.f32 %v3927, 0.5
        %v3934 = vmul.f32 %v3929, 0.5
        %v3935 = vmul.f32 %v3923, 0.044715
        %v3936 = vmul.f32 %v3925, 0.044715
        %v3937 = vmul.f32 %v3927, 0.044715
        %v3938 = vmul.f32 %v3929, 0.044715
        %v3939 = vmul.f32 %v3935, %v3923
        %v3940 = vmul.f32 %v3936, %v3925
        %v3941 = vmul.f32 %v3937, %v3927
        %v3942 = vmul.f32 %v3938, %v3929
        %v3943 = vmul.f32 %v3939, %v3923
        %v3944 = vmul.f32 %v3940, %v3925
        %v3945 = vmul.f32 %v3941, %v3927
        %v3946 = vmul.f32 %v3942, %v3929
        %v3947 = vadd.f32 %v3923, %v3943
        %v3948 = vadd.f32 %v3925, %v3944
        %v3949 = vadd.f32 %v3927, %v3945
        %v3950 = vadd.f32 %v3929, %v3946
        %v3951 = vmul.f32 %v3947, 0.7978846
        %v3952 = vmul.f32 %v3948, 0.7978846
        %v3953 = vmul.f32 %v3949, 0.7978846
        %v3954 = vmul.f32 %v3950, 0.7978846
        %v3955 = vtanh.pop %v3951
        %v3956 = vtanh.pop %v3952
        %v3957 = vtanh.pop %v3953
        %v3958 = vtanh.pop %v3954
        %v3959 = vadd.f32 %v3955, 1.0
        %v3960 = vadd.f32 %v3956, 1.0
        %v3961 = vadd.f32 %v3957, 1.0
        %v3962 = vadd.f32 %v3958, 1.0
        %v3963 = vmul.f32 %v3931, %v3959
        %v3964 = vmul.f32 %v3932, %v3960
        %v3965 = vmul.f32 %v3933, %v3961
        %v3966 = vmul.f32 %v3934, %v3962
        %s3967 = scalar_lea.vmem %s8, 128
        %v3968 = vld [vmem:[%s3967] sm:$0xf]
        %v3969 = vld [vmem:[%s3967 + $0x4] sm:$0xf]
        %v3970 = vld [vmem:[%s3967 + $0x8] sm:$0xf]
        %v3971 = vld [vmem:[%s3967 + $0xc] sm:$0xf]
        %v3972 = vld [vmem:[%s3967 + $0x10] sm:$0xf]
        %v3973 = vld [vmem:[%s3967 + $0x14] sm:$0xf]
        %v3974 = vld [vmem:[%s3967 + $0x18] sm:$0xf]
        %v3975 = vld [vmem:[%s3967 + $0x1c] sm:$0xf]
        %v3976 = vld [vmem:[%s3967 + $0x20] sm:$0xf]
        %v3977 = vld [vmem:[%s3967 + $0x24] sm:$0xf]
        %v3978 = vld [vmem:[%s3967 + $0x28] sm:$0xf]
        %v3979 = vld [vmem:[%s3967 + $0x2c] sm:$0xf]
        %v3980 = vld [vmem:[%s3967 + $0x30] sm:$0xf]
        %v3981 = vld [vmem:[%s3967 + $0x34] sm:$0xf]
        %v3982 = vld [vmem:[%s3967 + $0x38] sm:$0xf]
        %v3983 = vld [vmem:[%s3967 + $0x3c] sm:$0xf]
        %v3984 = vld [vmem:[%s3967 + $0x40] sm:$0xf]
        %v3985 = vld [vmem:[%s3967 + $0x44] sm:$0xf]
        %v3986 = vld [vmem:[%s3967 + $0x48] sm:$0xf]
        %v3987 = vld [vmem:[%s3967 + $0x4c] sm:$0xf]
        %v3988 = vld [vmem:[%s3967 + $0x50] sm:$0xf]
        %v3989 = vld [vmem:[%s3967 + $0x54] sm:$0xf]
        %v3990 = vld [vmem:[%s3967 + $0x58] sm:$0xf]
        %v3991 = vld [vmem:[%s3967 + $0x5c] sm:$0xf]
        %v3992 = vld [vmem:[%s3967 + $0x60] sm:$0xf]
        %v3993 = vld [vmem:[%s3967 + $0x64] sm:$0xf]
        %v3994 = vld [vmem:[%s3967 + $0x68] sm:$0xf]
        %v3995 = vld [vmem:[%s3967 + $0x6c] sm:$0xf]
        %v3996 = vld [vmem:[%s3967 + $0x70] sm:$0xf]
        %v3997 = vld [vmem:[%s3967 + $0x74] sm:$0xf]
        %v3998 = vld [vmem:[%s3967 + $0x78] sm:$0xf]
        %v3999 = vld [vmem:[%s3967 + $0x7c] sm:$0xf]
        %v4000 = vld [vmem:[%s3643 + $0x3] sm:$0x1]
        %v4001 = vpack.c.bf16 %v3965, %v3963
        %v4002 = vpack.c.bf16 %v3966, %v3964
        %v4003 = vlaneseq
        %v4004 = vshrl.u32 %v4003, 7
        %v4005 = vsub.s32 0, %v4004
        %v4006 = vrot.slane %v4000, %v4005
        %v4039 = vunpack.c.l.b16 %v3968
        %v4040 = vunpack.c.l.b16 %v3969
        %v4041 = vunpack.c.l.b16 %v3970
        %v4042 = vunpack.c.l.b16 %v3971
        %v4043 = vunpack.c.l.b16 %v3972
        %v4044 = vunpack.c.l.b16 %v3973
        %v4045 = vunpack.c.l.b16 %v3974
        %v4046 = vunpack.c.l.b16 %v3975
        %v4047 = vunpack.c.l.b16 %v3976
        %v4048 = vunpack.c.l.b16 %v3977
        %v4049 = vunpack.c.l.b16 %v3978
        %v4050 = vunpack.c.l.b16 %v3979
        %v4051 = vunpack.c.l.b16 %v3980
        %v4052 = vunpack.c.l.b16 %v3981
        %v4053 = vunpack.c.l.b16 %v3982
        %v4054 = vunpack.c.l.b16 %v3983
        %v4055 = vunpack.c.l.b16 %v3984
        %v4056 = vunpack.c.l.b16 %v3985
        %v4057 = vunpack.c.l.b16 %v3986
        %v4058 = vunpack.c.l.b16 %v3987
        %v4059 = vunpack.c.l.b16 %v3988
        %v4060 = vunpack.c.l.b16 %v3989
        %v4061 = vunpack.c.l.b16 %v3990
        %v4062 = vunpack.c.l.b16 %v3991
        %v4063 = vunpack.c.l.b16 %v3992
        %v4064 = vunpack.c.l.b16 %v3993
        %v4065 = vunpack.c.l.b16 %v3994
        %v4066 = vunpack.c.l.b16 %v3995
        %v4067 = vunpack.c.l.b16 %v3996
        %v4068 = vunpack.c.l.b16 %v3997
        %v4069 = vunpack.c.l.b16 %v3998
        %v4070 = vunpack.c.l.b16 %v3999
        %v4071 = vpack.c.b16 %v4040, %v4039
        %v4072 = vpack.c.b16 %v4042, %v4041
        %v4073 = vpack.c.b16 %v4044, %v4043
        %v4074 = vpack.c.b16 %v4046, %v4045
        %v4075 = vpack.c.b16 %v4048, %v4047
        %v4076 = vpack.c.b16 %v4050, %v4049
        %v4077 = vpack.c.b16 %v4052, %v4051
        %v4078 = vpack.c.b16 %v4054, %v4053
        %v4079 = vpack.c.b16 %v4056, %v4055
        %v4080 = vpack.c.b16 %v4058, %v4057
        %v4081 = vpack.c.b16 %v4060, %v4059
        %v4082 = vpack.c.b16 %v4062, %v4061
        %v4083 = vpack.c.b16 %v4064, %v4063
        %v4084 = vpack.c.b16 %v4066, %v4065
        %v4085 = vpack.c.b16 %v4068, %v4067
        %v4086 = vpack.c.b16 %v4070, %v4069
        %4103 = vmatprep.subr.bf16.mxu0 0
        %4104 = vmatpush1.bf16.msra.mxu0 %v4078
        %4105 = vmatprep.subr.bf16.mxu0 0
        %4106 = vmatpush1.bf16.msra.mxu0 %v4077
        %4107 = vmatprep.subr.bf16.mxu0 0
        %4108 = vmatpush1.bf16.msra.mxu0 %v4076
        %4109 = vmatprep.subr.bf16.mxu0 0
        %4110 = vmatpush1.bf16.msra.mxu0 %v4075
        %4111 = vmatprep.subr.bf16.mxu0 0
        %4112 = vmatpush1.bf16.msra.mxu0 %v4074
        %4113 = vmatprep.subr.bf16.mxu0 0
        %4114 = vmatpush1.bf16.msra.mxu0 %v4073
        %4115 = vmatprep.subr.bf16.mxu0 0
        %4116 = vmatpush1.bf16.msra.mxu0 %v4072
        %4117 = vmatprep.subr.bf16.mxu0 0
        %4118 = vmatpush1.bf16.msra.mxu0 %v4071
        %4119 = vmatprep.subr.bf16.mxu0 0
        %4120 = vmatpush2.bf16.msra.mxu0 %v4086
        %4121 = vmatprep.subr.bf16.mxu0 0
        %4122 = vmatpush2.bf16.msra.mxu0 %v4085
        %4123 = vmatprep.subr.bf16.mxu0 0
        %4124 = vmatpush2.bf16.msra.mxu0 %v4084
        %4125 = vmatprep.subr.bf16.mxu0 0
        %4126 = vmatpush2.bf16.msra.mxu0 %v4083
        %4127 = vmatprep.subr.bf16.mxu0 0
        %4128 = vmatpush2.bf16.msra.mxu0 %v4082
        %4129 = vmatprep.subr.bf16.mxu0 0
        %4130 = vmatpush2.bf16.msra.mxu0 %v4081
        %4131 = vmatprep.subr.bf16.mxu0 0
        %4132 = vmatpush2.bf16.msra.mxu0 %v4080
        %4133 = vmatprep.subr.bf16.mxu0 0
        %4134 = vmatpush2.bf16.msra.mxu0 %v4079
        %4135 = vmatprep.mubr.bf16.mxu0 %v4002
        %4136 = vmatmul.mubr.bf16.gmra.mxu0 %v4001
        %v4137 = vpop.f32.mrf.mxu0
        %v4138 = vadd.f32 %v4006, %v4137
        %v4139 = vpop.f32.mrf.mxu0
        %v4140 = vpop.f32.mrf.mxu0
        %v4141 = vadd.f32 %v4006, %v4140
        %v4142 = vpop.f32.mrf.mxu0
        %4143 = vdwg.mxu0
        %v4144 = vadd.f32 %v4138, %v3775
        %v4145 = vadd.f32 %v4141, %v3776
        %v4146 = vld [vmem:[%s3643 + $0x4] sm:$0x1]
        %v4147 = vld [vmem:[%s3643 + $0x5] sm:$0x1]
        %4148 = vadd.xlane.f32.xlu0 %v4144
        %v4149 = vpop.xlane.xlu0 %4148
        %4150 = vadd.xlane.f32.xlu0 %v4145
        %v4151 = vpop.xlane.xlu0 %4150
        %v4152 = vmul.f32 %v4149, %v460
        %v4153 = vmul.f32 %v4151, %v460
        %v4154 = vsub.f32 %v4144, %v4152
        %v4155 = vsub.f32 %v4145, %v4153
        %v4156 = vmul.f32 %v4154, %v4154
        %v4157 = vmul.f32 %v4155, %v4155
        %4158 = vadd.xlane.f32.xlu0 %v4156
        %v4159 = vpop.xlane.xlu0 %4158
        %4160 = vadd.xlane.f32.xlu0 %v4157
        %v4161 = vpop.xlane.xlu0 %4160
        %v4162 = vmul.f32 %v4159, %v460
        %v4163 = vmul.f32 %v4161, %v460
        %v4164 = vadd.f32 %v4162, 1e-12
        %v4165 = vadd.f32 %v4163, 1e-12
        %v4166 = vrsqrt.pop %v4164
        %v4167 = vrsqrt.pop %v4165
        %v4168 = vmul.f32 %v4154, %v4166
        %v4169 = vmul.f32 %v4155, %v4167
        %v4170 = vlaneseq
        %v4171 = vshrl.u32 %v4170, 7
        %v4172 = vsub.s32 0, %v4171
        %v4173 = vrot.slane %v4146, %v4172
        %v4174 = vmul.f32 %v4168, %v4173
        %v4175 = vmul.f32 %v4169, %v4173
        %v4176 = vlaneseq
        %v4177 = vshrl.u32 %v4176, 7
        %v4178 = vsub.s32 0, %v4177
        %v4179 = vrot.slane %v4147, %v4178
        %v4180 = vadd.f32 %v4174, %v4179
        %v4181 = vadd.f32 %v4175, %v4179
        %v4182 = vld [vmem:[%s10] sm:$0xf]
        %v4183 = vld [vmem:[%s10 + $0x4] sm:$0xf]
        %v4184 = vld [vmem:[%s10 + $0x8] sm:$0xf]
        %v4185 = vld [vmem:[%s10 + $0xc] sm:$0xf]
        %v4186 = vld [vmem:[%s10 + $0x10] sm:$0xf]
        %v4187 = vld [vmem:[%s10 + $0x14] sm:$0xf]
        %v4188 = vld [vmem:[%s10 + $0x18] sm:$0xf]
        %v4189 = vld [vmem:[%s10 + $0x1c] sm:$0xf]
        %v4190 = vld [vmem:[%s10 + $0x20] sm:$0xf]
        %v4191 = vld [vmem:[%s10 + $0x24] sm:$0xf]
        %v4192 = vld [vmem:[%s10 + $0x28] sm:$0xf]
        %v4193 = vld [vmem:[%s10 + $0x2c] sm:$0xf]
        %v4194 = vld [vmem:[%s10 + $0x30] sm:$0xf]
        %v4195 = vld [vmem:[%s10 + $0x34] sm:$0xf]
        %v4196 = vld [vmem:[%s10 + $0x38] sm:$0xf]
        %v4197 = vld [vmem:[%s10 + $0x3c] sm:$0xf]
        %v4198 = vld [vmem:[%s11] sm:$0x1]
        %v4199 = vpack.c.bf16 %v4181, %v4180
        %v4201 = vlaneseq
        %v4202 = vshrl.u32 %v4201, 7
        %v4203 = vsub.s32 0, %v4202
        %v4204 = vrot.slane %v4198, %v4203
        %v4222 = vunpack.c.l.b16 %v4182
        %v4223 = vunpack.c.l.b16 %v4183
        %v4224 = vunpack.c.l.b16 %v4184
        %v4225 = vunpack.c.l.b16 %v4185
        %v4226 = vunpack.c.l.b16 %v4186
        %v4227 = vunpack.c.l.b16 %v4187
        %v4228 = vunpack.c.l.b16 %v4188
        %v4229 = vunpack.c.l.b16 %v4189
        %v4230 = vunpack.c.l.b16 %v4190
        %v4231 = vunpack.c.l.b16 %v4191
        %v4232 = vunpack.c.l.b16 %v4192
        %v4233 = vunpack.c.l.b16 %v4193
        %v4234 = vunpack.c.l.b16 %v4194
        %v4235 = vunpack.c.l.b16 %v4195
        %v4236 = vunpack.c.l.b16 %v4196
        %v4237 = vunpack.c.l.b16 %v4197
        %v4238 = vpack.c.b16 %v4223, %v4222
        %v4239 = vpack.c.b16 %v4225, %v4224
        %v4240 = vpack.c.b16 %v4227, %v4226
        %v4241 = vpack.c.b16 %v4229, %v4228
        %v4242 = vpack.c.b16 %v4231, %v4230
        %v4243 = vpack.c.b16 %v4233, %v4232
        %v4244 = vpack.c.b16 %v4235, %v4234
        %v4245 = vpack.c.b16 %v4237, %v4236
        %4254 = vmatprep.subr.bf16.mxu0 0
        %4255 = vmatpush1.bf16.msra.mxu0 %v4245
        %4256 = vmatprep.subr.bf16.mxu0 0
        %4257 = vmatpush1.bf16.msra.mxu0 %v4244
        %4258 = vmatprep.subr.bf16.mxu0 0
        %4259 = vmatpush1.bf16.msra.mxu0 %v4243
        %4260 = vmatprep.subr.bf16.mxu0 0
        %4261 = vmatpush1.bf16.msra.mxu0 %v4242
        %4262 = vmatprep.subr.bf16.mxu0 0
        %4263 = vmatpush1.bf16.msra.mxu0 %v4241
        %4264 = vmatprep.subr.bf16.mxu0 0
        %4265 = vmatpush1.bf16.msra.mxu0 %v4240
        %4266 = vmatprep.subr.bf16.mxu0 0
        %4267 = vmatpush1.bf16.msra.mxu0 %v4239
        %4268 = vmatprep.subr.bf16.mxu0 0
        %4269 = vmatpush1.bf16.msra.mxu0 %v4238
        %4270 = vmatprep.subr.bf16.mxu0 0
        %4271 = vmatpush2.bf16.msra.mxu0 0
        %4272 = vmatprep.subr.bf16.mxu0 0
        %4273 = vmatpush2.bf16.msra.mxu0 0
        %4274 = vmatprep.subr.bf16.mxu0 0
        %4275 = vmatpush2.bf16.msra.mxu0 0
        %4276 = vmatprep.subr.bf16.mxu0 0
        %4277 = vmatpush2.bf16.msra.mxu0 0
        %4278 = vmatprep.subr.bf16.mxu0 0
        %4279 = vmatpush2.bf16.msra.mxu0 0
        %4280 = vmatprep.subr.bf16.mxu0 0
        %4281 = vmatpush2.bf16.msra.mxu0 0
        %4282 = vmatprep.subr.bf16.mxu0 0
        %4283 = vmatpush2.bf16.msra.mxu0 0
        %4284 = vmatprep.subr.bf16.mxu0 0
        %4285 = vmatpush2.bf16.msra.mxu0 0
        %4286 = vmatprep.mubr.bf16.mxu0 0
        %4287 = vmatmul.mubr.bf16.gmra.mxu0 %v4199
        %v4288 = vpop.f32.mrf.mxu0
        %v4289 = vadd.f32 %v4204, %v4288
        %v4290 = vpop.f32.mrf.mxu0
        %v4291 = vpop.f32.mrf.mxu0
        %v4292 = vadd.f32 %v4204, %v4291
        %v4293 = vpop.f32.mrf.mxu0
        %4294 = vdwg.mxu0
        %4295 = vst [vmem:[%s448] sm:$0xff] %v4289
        %4296 = vst [vmem:[%s448 + $0x8] sm:$0xff] %v4292
        %p4297 = scmp.lt.s32.totalorder %s24, 1
        %s4298 = scalar_select %p4297, %s24, 1
        %s4299 = smul.addr %s4298, 2
        %s4300 = smul.addr %s4299, 8
        %s4301 = scalar_lea.vmem %s12, %s4300
        // Predicated region
        $region73: #{bert_for_token_classification.1} parent=67 // pred_check
          %p4302 = pneg %p304
        $region74: #{bert_for_token_classification.1} parent=67 // pred_check_branch
          %4304 = sbr.rel (%p4302) target = $region76
        $region75: #{bert_for_token_classification.1} parent=67 // pred_region
          _
        $region76: #{bert_for_token_classification.1} parent=67 // pred_fallthru
          _
      $region68: #{bert_for_token_classification.1} parent=5 // pred_fallthru
        _
      %p4305 = scmp.le.s32.totalorder 2, %s19
      // Predicated region
      $region77: #{bert_for_token_classification.1} parent=5 // pred_check
        %p4306 = pneg %p4305
      $region78: #{bert_for_token_classification.1} parent=5 // pred_check_branch
        %4308 = sbr.rel (%p4306) target = $region80
      $region79: #{bert_for_token_classification.1} parent=5 // pred_region
        %s4309 = ssub.s32 %s19, 2
        // Predicated region
        $region81: #{bert_for_token_classification.1} parent=79 // pred_check
          %p4310 = pneg %p310
        $region82: #{bert_for_token_classification.1} parent=79 // pred_check_branch
          %4312 = sbr.rel (%p4310) target = $region84
        $region83: #{bert_for_token_classification.1} parent=79 // pred_region
          %p4313 = scmp.lt.s32.totalorder %s25, 1
          %s4314 = scalar_select %p4313, %s25, 1
          %s4315 = smul.addr %s4314, 2
          %s4316 = smul.addr %s4315, 8
          %s4317 = scalar_lea.vmem %s12, %s4316
        $region84: #{bert_for_token_classification.1} parent=79 // pred_fallthru
          _
      $region80: #{bert_for_token_classification.1} parent=5 // pred_fallthru
        _
    $region6: #{bert_for_token_classification.1} parent=1 // loop_footer
      %s23 = sadd.s32 1, %s19
    $region7: #{bert_for_token_classification.1} parent=1 // loop_footer_branch
      %18 = sbr.rel target = $region3
    $region8: #{bert_for_token_classification.1} parent=1 // loop_exit
      _
    %4318 = vsyncpa [#allocation3], 1
    %s4319 = scalar_lea.sflag [#allocation3], 1
    %4320 = vsyncpa %s4319, 1

</llo_original>
